<compile_context>
chip_gen: v7x
topology: tpu7x:2x2x1
jax: 0.10.0
libtpu: 0.0.40
codegen_flags: <defaults>
</compile_context>

<pallas_src>
import functools

import jax
import jax.numpy as jnp
from jax.experimental import pallas as pl
from jax.experimental.pallas import tpu as pltpu

_MIB = 1024 * 1024


def _swiglu_kernel(x_ref, w1t_ref, w3t_ref, w2t_ref, o_ref, acc_ref, *, precision):
    # Grid: (rows // tm, d_ff_pad // tf); axis 1 is the reduction over d_ff.
    j = pl.program_id(1)

    @pl.when(j == 0)
    def _():
        acc_ref[...] = jnp.zeros_like(acc_ref)

    x = x_ref[...]                                            # (tm, d_model), native dtype
    # Native MXU contractions: (tm, d_model) @ (d_model, tf) -> (tm, tf)
    a = jnp.dot(x, w1t_ref[...], precision=precision,
                preferred_element_type=jnp.float32)
    b = jnp.dot(x, w3t_ref[...], precision=precision,
                preferred_element_type=jnp.float32)
    h = (a * jax.nn.sigmoid(a)) * b                           # silu(a) * b, f32 (sigmoid -> EUP)

    # acc += h @ W2t_tile, W2t tile is (tf, d_model) -> contiguous row-block DMA.
    acc_ref[...] += jnp.dot(h.astype(w2t_ref.dtype), w2t_ref[...],
                            precision=precision,
                            preferred_element_type=jnp.float32)

    @pl.when(j == pl.num_programs(1) - 1)
    def _():
        o_ref[...] = acc_ref[...].astype(o_ref.dtype)


def _round_up(v, m):
    return ((v + m - 1) // m) * m


def _generation_config():
    """Per-TPU-generation (tile_m, tile_f, vmem_limit_bytes) heuristics."""
    kind = ""
    try:
        kind = jax.devices()[0].device_kind.lower()
    except Exception:
        pass
    if "v5" in kind and ("lite" in kind or "v5e" in kind):
        # v5e: ridge ~240 FLOP/byte -> tm=256 suffices; 128 MiB physical VMEM,
        # raise the 16 MiB scoped default explicitly via vmem_limit_bytes.
        return 256, 512, 48 * _MIB
    if "7" in kind:
        # v7x: ridge ~310 FLOP/byte, but only 64 MiB physical VMEM per core.
        return 512, 512, 44 * _MIB
    # v6e / unknown: ridge ~700 FLOP/byte -> big row tile; 128 MiB physical VMEM.
    return 768, 512, 96 * _MIB


def swiglu(x, w1, w2, w3, *,
           tile_m=None, tile_f=None, vmem_limit_bytes=None,
           precision=jax.lax.Precision.DEFAULT):
    """SwiGLU forward.  x: (..., d_model); w1/w3: (d_ff, d_model); w2: (d_model, d_ff)."""
    *lead, d_model = x.shape
    d_ff = w1.shape[0]
    assert w1.shape == (d_ff, d_model)
    assert w3.shape == (d_ff, d_model)
    assert w2.shape == (d_model, d_ff)

    gen_tm, gen_tf, gen_vmem = _generation_config()
    tile_m = gen_tm if tile_m is None else tile_m
    tile_f = gen_tf if tile_f is None else tile_f
    vmem_limit_bytes = gen_vmem if vmem_limit_bytes is None else vmem_limit_bytes

    rows = 1
    for s in lead:
        rows *= s
    x2d = x.reshape(rows, d_model)

    # Pre-transpose weights once (layout plumbing in the wrapper, not per-tile XLU
    # work): w1t/w3t -> (d_model, d_ff), w2t -> (d_ff, d_model).
    w1t = jnp.transpose(w1)
    w3t = jnp.transpose(w3)
    w2t = jnp.transpose(w2)

    x_isz = x.dtype.itemsize
    w_isz = w1.dtype.itemsize

    # Row tile: big, multiple of 8 (sublane granule); remainder handled by cdiv grid.
    tm = rows if rows <= tile_m else max(8, (tile_m // 8) * 8)
    # d_ff tile: lane-dense multiple of 128; d_ff will be zero-padded up to it.
    tf = max(128, (min(tile_f, _round_up(d_ff, 128)) // 128) * 128)

    def footprint(tm_, tf_):
        dma = 2 * (tm_ * d_model * x_isz          # x tile (double-buffered)
                   + tm_ * d_model * x_isz        # out tile
                   + 2 * d_model * tf_ * w_isz    # w1t, w3t tiles
                   + tf_ * d_model * w_isz)       # w2t tile
        acc = tm_ * d_model * 4                   # f32 accumulator scratch
        tmp = 3 * tm_ * tf_ * 4                   # a, b, h f32 intermediates
        return dma + acc + tmp

    # Leave a margin for compiler-internal scratch inside the communicated limit.
    budget = max(_MIB, vmem_limit_bytes - 4 * _MIB)
    # Shrink tf first (total weight HBM traffic is independent of tf), keep tm large.
    while footprint(tm, tf) > budget and (tf > 128 or tm > 8):
        if tf > 128:
            tf = max(128, ((tf // 2) // 128) * 128)
        else:
            tm = max(8, ((tm // 2) // 8) * 8)

    # Zero-pad d_ff to a multiple of tf.  Exact for SwiGLU: padded columns give
    # a = b = 0 -> h = silu(0)*0 = 0, and the padded rows of W2t are zero anyway.
    d_ff_pad = _round_up(d_ff, tf)
    pad_f = d_ff_pad - d_ff
    if pad_f:
        w1t = jnp.pad(w1t, ((0, 0), (0, pad_f)))
        w3t = jnp.pad(w3t, ((0, 0), (0, pad_f)))
        w2t = jnp.pad(w2t, ((0, pad_f), (0, 0)))

    n_row_tiles = (rows + tm - 1) // tm
    grid = (n_row_tiles, d_ff_pad // tf)

    cost = pl.CostEstimate(
        flops=int(6 * rows * d_ff * d_model),
        transcendentals=int(rows * d_ff),
        bytes_accessed=int(2 * rows * d_model * x_isz
                           + n_row_tiles * 3 * d_ff_pad * d_model * w_isz),
    )

    # TODO(synk): optionally single-buffer x/out (constant over j) and deepen the
    # weight pipeline with pl.Buffered(3) in the HBM-bound decode regime.
    kernel = functools.partial(_swiglu_kernel, precision=precision)
    out = pl.pallas_call(
        kernel,
        out_shape=jax.ShapeDtypeStruct((rows, d_model), x.dtype),
        grid_spec=pltpu.PrefetchScalarGridSpec(
            num_scalar_prefetch=0,
            grid=grid,
            in_specs=[
                pl.BlockSpec((tm, d_model), lambda i, j: (i, 0)),   # x
                pl.BlockSpec((d_model, tf), lambda i, j: (0, j)),   # w1^T
                pl.BlockSpec((d_model, tf), lambda i, j: (0, j)),   # w3^T
                pl.BlockSpec((tf, d_model), lambda i, j: (j, 0)),   # w2^T
            ],
            out_specs=pl.BlockSpec((tm, d_model), lambda i, j: (i, 0)),
            scratch_shapes=[pltpu.VMEM((tm, d_model), jnp.float32)],
        ),
        compiler_params=pltpu.CompilerParams(
            dimension_semantics=("parallel", "arbitrary"),
            vmem_limit_bytes=int(vmem_limit_bytes),
        ),
        cost_estimate=cost,
    )(x2d, w1t, w3t, w2t)
    return out.reshape(*lead, d_model)


if __name__ == "__main__":
    # Small shapes consistent with the module: (batch, seq, d_model), default d_ff formula.
    batch, seq_len, d_model = 2, 8, 128
    d_ff = int((8 * d_model / 3 // 64 + 1) * 64)   # = 384 for d_model=128

    key = jax.random.PRNGKey(0)
    kx, k1, k2, k3, k4, k5, k6 = jax.random.split(key, 7)
    x = jax.random.normal(kx, (batch, seq_len, d_model), dtype=jnp.float32)

    def init_w(k, out_f, in_f):
        sigma = (2.0 / (in_f + out_f)) ** 0.5
        return sigma * jax.random.truncated_normal(k, -3.0, 3.0, (out_f, in_f), jnp.float32)

    def ref_swiglu(x, w1, w2, w3, p):
        a = jnp.einsum("bsd,fd->bsf", x, w1, precision=p)
        b = jnp.einsum("bsd,fd->bsf", x, w3, precision=p)
        h = (a * jax.nn.sigmoid(a)) * b
        return jnp.einsum("bsf,df->bsd", h, w2, precision=p)

    # Use HIGHEST precision for a tight test tolerance against the f32 reference;
    # the production default of the wrapper is Precision.DEFAULT.
    p = jax.lax.Precision.HIGHEST

    w1 = init_w(k1, d_ff, d_model)     # (d_ff, d_model)
    w2 = init_w(k2, d_model, d_ff)     # (d_model, d_ff)
    w3 = init_w(k3, d_ff, d_model)     # (d_ff, d_model)

    y = swiglu(x, w1, w2, w3, precision=p)
    jax.block_until_ready(y)
    ref = ref_swiglu(x, w1, w2, w3, p)
    assert y.shape == x.shape and y.dtype == x.dtype
    assert jnp.allclose(y, ref, atol=1e-3, rtol=1e-3), float(jnp.max(jnp.abs(y - ref)))

    # Also exercise the d_ff zero-padding path (d_ff not a multiple of 128).
    d_ff2 = 320
    w1b = init_w(k4, d_ff2, d_model)
    w2b = init_w(k5, d_model, d_ff2)
    w3b = init_w(k6, d_ff2, d_model)
    y2 = swiglu(x, w1b, w2b, w3b, precision=p)
    jax.block_until_ready(y2)
    ref2 = ref_swiglu(x, w1b, w2b, w3b, p)
    assert jnp.allclose(y2, ref2, atol=1e-3, rtol=1e-3), float(jnp.max(jnp.abs(y2 - ref2)))

    print("KERNEL_OK")
</pallas_src>

<mosaic_0001>
module attributes {stable_mosaic.version = 11 : i64} {
  func.func @_swiglu_kernel(%arg0: i32, %arg1: i32, %arg2: memref<16x128xf32, #tpu.memory_space<vmem>>, %arg3: memref<128x384xf32, #tpu.memory_space<vmem>>, %arg4: memref<128x384xf32, #tpu.memory_space<vmem>>, %arg5: memref<384x128xf32, #tpu.memory_space<vmem>>, %arg6: memref<16x128xf32, #tpu.memory_space<vmem>>, %arg7: memref<16x128xf32, #tpu.memory_space<vmem>>) attributes {dimension_semantics = [#tpu.dimension_semantics<parallel>, #tpu.dimension_semantics<arbitrary>], iteration_bounds = array<i64: 1, 1>, scalar_prefetch = 0 : i64, scratch_operands = 1 : i64, tpu.core_type = #tpu.core_type<tc>, window_params = [{transform_indices = @transform_0, window_bounds = array<i64: 16, 128>}, {transform_indices = @transform_1, window_bounds = array<i64: 128, 384>}, {transform_indices = @transform_2, window_bounds = array<i64: 128, 384>}, {transform_indices = @transform_3, window_bounds = array<i64: 384, 128>}, {transform_indices = @transform_4, window_bounds = array<i64: 16, 128>}]} {
    %c0_i32 = arith.constant 0 : i32
    %0 = arith.cmpi eq, %arg1, %c0_i32 : i32
    %1 = arith.extui %0 : i1 to i32
    %c0_i32_0 = arith.constant 0 : i32
    %2 = arith.cmpi ne, %1, %c0_i32_0 : i32
    scf.if %2 {
      %cst_17 = arith.constant 0.000000e+00 : f32
      %23 = vector.broadcast %cst_17 : f32 to vector<16x128xf32>
      %c0_18 = arith.constant 0 : index
      %c0_19 = arith.constant 0 : index
      %24 = vector.load %arg7[%c0_18, %c0_19] : memref<16x128xf32, #tpu.memory_space<vmem>>, vector<16x128xf32>
      tpu.vector_store %arg7[%c0_18, %c0_19], %23 {strides = array<i32>} : memref<16x128xf32, #tpu.memory_space<vmem>>, vector<16x128xf32>,
    } else {
    }
    %c0 = arith.constant 0 : index
    %c0_1 = arith.constant 0 : index
    %3 = vector.load %arg2[%c0, %c0_1] : memref<16x128xf32, #tpu.memory_space<vmem>>, vector<16x128xf32>
    %c0_2 = arith.constant 0 : index
    %c0_3 = arith.constant 0 : index
    %4 = vector.load %arg3[%c0_2, %c0_3] : memref<128x384xf32, #tpu.memory_space<vmem>>, vector<128x384xf32>
    %cst = arith.constant dense<0.000000e+00> : vector<16x384xf32>
    %5 = tpu.matmul %3, %4, %cst {dimension_numbers = #tpu.dot_dimension_numbers<[1], [0], [0], [1], [0, 0, 1, 1], [], []>, precision = #tpu.contract_precision<fp32>} : vector<16x128xf32>, vector<128x384xf32>, vector<16x384xf32> -> vector<16x384xf32>
    %c0_4 = arith.constant 0 : index
    %c0_5 = arith.constant 0 : index
    %6 = vector.load %arg4[%c0_4, %c0_5] : memref<128x384xf32, #tpu.memory_space<vmem>>, vector<128x384xf32>
    %cst_6 = arith.constant dense<0.000000e+00> : vector<16x384xf32>
    %7 = tpu.matmul %3, %6, %cst_6 {dimension_numbers = #tpu.dot_dimension_numbers<[1], [0], [0], [1], [0, 0, 1, 1], [], []>, precision = #tpu.contract_precision<fp32>} : vector<16x128xf32>, vector<128x384xf32>, vector<16x384xf32> -> vector<16x384xf32>
    %8 = arith.negf %5 : vector<16x384xf32>
    %9 = math.exp %8 : vector<16x384xf32>
    %cst_7 = arith.constant 1.000000e+00 : f32
    %10 = vector.broadcast %cst_7 : f32 to vector<16x384xf32>
    %11 = arith.addf %10, %9 : vector<16x384xf32>
    %12 = arith.divf %10, %11 : vector<16x384xf32>
    %13 = arith.mulf %5, %12 : vector<16x384xf32>
    %14 = arith.mulf %13, %7 : vector<16x384xf32>
    %c0_8 = arith.constant 0 : index
    %c0_9 = arith.constant 0 : index
    %15 = vector.load %arg7[%c0_8, %c0_9] : memref<16x128xf32, #tpu.memory_space<vmem>>, vector<16x128xf32>
    %c0_10 = arith.constant 0 : index
    %c0_11 = arith.constant 0 : index
    %16 = vector.load %arg5[%c0_10, %c0_11] : memref<384x128xf32, #tpu.memory_space<vmem>>, vector<384x128xf32>
    %cst_12 = arith.constant dense<0.000000e+00> : vector<16x128xf32>
    %17 = tpu.matmul %14, %16, %cst_12 {dimension_numbers = #tpu.dot_dimension_numbers<[1], [0], [0], [1], [0, 0, 1, 1], [], []>, precision = #tpu.contract_precision<fp32>} : vector<16x384xf32>, vector<384x128xf32>, vector<16x128xf32> -> vector<16x128xf32>
    %18 = arith.addf %15, %17 : vector<16x128xf32>
    %c0_13 = arith.constant 0 : index
    %c0_14 = arith.constant 0 : index
    %19 = vector.load %arg7[%c0_13, %c0_14] : memref<16x128xf32, #tpu.memory_space<vmem>>, vector<16x128xf32>
    tpu.vector_store %arg7[%c0_13, %c0_14], %18 {strides = array<i32>} : memref<16x128xf32, #tpu.memory_space<vmem>>, vector<16x128xf32>,
    %c0_i32_15 = arith.constant 0 : i32
    %20 = arith.cmpi eq, %arg1, %c0_i32_15 : i32
    %21 = arith.extui %20 : i1 to i32
    %c0_i32_16 = arith.constant 0 : i32
    %22 = arith.cmpi ne, %21, %c0_i32_16 : i32
    scf.if %22 {
      %c0_17 = arith.constant 0 : index
      %c0_18 = arith.constant 0 : index
      %23 = vector.load %arg7[%c0_17, %c0_18] : memref<16x128xf32, #tpu.memory_space<vmem>>, vector<16x128xf32>
      %c0_19 = arith.constant 0 : index
      %c0_20 = arith.constant 0 : index
      %24 = vector.load %arg6[%c0_19, %c0_20] : memref<16x128xf32, #tpu.memory_space<vmem>>, vector<16x128xf32>
      tpu.vector_store %arg6[%c0_19, %c0_20], %23 {strides = array<i32>} : memref<16x128xf32, #tpu.memory_space<vmem>>, vector<16x128xf32>,
    } else {
    }
    return
  }
  func.func @transform_0(%arg0: i32, %arg1: i32) -> (i32, i32) {
    %c0_i32 = arith.constant 0 : i32
    %c0_i32_0 = arith.constant 0 : i32
    return %arg0, %c0_i32 : i32, i32
  }
  func.func @transform_1(%arg0: i32, %arg1: i32) -> (i32, i32) {
    %c0_i32 = arith.constant 0 : i32
    %c0_i32_0 = arith.constant 0 : i32
    return %c0_i32, %arg1 : i32, i32
  }
  func.func @transform_2(%arg0: i32, %arg1: i32) -> (i32, i32) {
    %c0_i32 = arith.constant 0 : i32
    %c0_i32_0 = arith.constant 0 : i32
    return %c0_i32, %arg1 : i32, i32
  }
  func.func @transform_3(%arg0: i32, %arg1: i32) -> (i32, i32) {
    %c0_i32 = arith.constant 0 : i32
    %c0_i32_0 = arith.constant 0 : i32
    return %arg1, %c0_i32 : i32, i32
  }
  func.func @transform_4(%arg0: i32, %arg1: i32) -> (i32, i32) {
    %c0_i32 = arith.constant 0 : i32
    %c0_i32_0 = arith.constant 0 : i32
    return %arg0, %c0_i32 : i32, i32
  }
}

</mosaic_0001>

<llo_original>
// kernel: tpu_custom_call.1
$region0: #{tpu_custom_call.1}
  #allocation0 [shape = 'u32[]', space=smem, size = 0x4, offset = 0x4, fixed_abs, tag = 'smem constant byte address 0x4 - core index']
  #allocation1 [shape = 'u32[144,128]{1,0:T(1,128)}', space=vmem, size = 0x12000, scoped, tag = 'internal scratch']
  #allocation2 [shape = 'f32[16,128]{1,0:T(8,128)}', space=vmem, size = 0x2000, scoped, tag = 'scratch operand']
  %s0 = inlined_call_operand.hbm [shape: f32[16,128], index: 0, kind: input, shape index: {}]
  %s1 = inlined_call_operand.hbm [shape: f32[128,384], index: 1, kind: input, shape index: {}]
  %s2 = inlined_call_operand.hbm [shape: f32[128,384], index: 2, kind: input, shape index: {}]
  %s3 = inlined_call_operand.hbm [shape: f32[384,128], index: 3, kind: input, shape index: {}]
  %s4 = inlined_call_operand.hbm [shape: f32[16,128], index: 4, kind: output, shape index: {}]
  %s5 = sld [smem:[#allocation0]]
  $region50: #{tpu_custom_call.1} parent=0
    _
  %s7 = ssub.s32 1, %s5
  %s8 = scalar_select 0, %s7, %s5
  $region1: #{tpu_custom_call.1} parent=0
    #allocation3 [shape = 'u8[8192]{0}', space=vmem, size = 0x2000, scoped, tag = 'input window, operand 0, single buffered']
    #allocation4 [shape = 's32[1]{0}', space=sflag, size = 0x4, scoped, tag = 'scoped memory for tpu_custom_call.1']
    #allocation5 [shape = 's32[1]{0}', space=sflag, size = 0x4, scoped, tag = 'scoped memory for tpu_custom_call.1']
    #allocation6 [shape = 'u8[196608]{0}', space=vmem, size = 0x30000, scoped, tag = 'input window, operand 1, single buffered']
    #allocation7 [shape = 's32[1]{0}', space=sflag, size = 0x4, scoped, tag = 'scoped memory for tpu_custom_call.1']
    #allocation8 [shape = 'u8[196608]{0}', space=vmem, size = 0x30000, scoped, tag = 'input window, operand 2, single buffered']
    #allocation9 [shape = 'u8[196608]{0}', space=vmem, size = 0x30000, scoped, tag = 'input window, operand 3, single buffered']
    #allocation10 [shape = 's32[1]{0}', space=sflag, size = 0x4, scoped, tag = 'scoped memory for tpu_custom_call.1']
    #allocation11 [shape = 'u8[8192]{0}', space=vmem, size = 0x2000, scoped, tag = 'output window, operand 0, single buffered']
    %9 = vsyncpa [#allocation4], 0
    %10 = vsyncpa [#allocation7], 0
    %11 = vsyncpa [#allocation10], 0
    %12 = vsyncpa [#allocation5], 0
    // Predicated region
    $region2: #{tpu_custom_call.1} parent=1 // pred_check
      _
    $region3: #{tpu_custom_call.1} parent=1 // pred_check_branch
      %14 = sbr.rel (0) target = $region5
    $region4: #{tpu_custom_call.1} parent=1 // pred_region
      %s16 = ssub.s32 256, 256
      %17 = vsyncadd [#allocation4], %s16
      %s18 = sshll.u32 [#allocation3], 4
      %s19 = int_to_ptr.vmem [resolvable:$true] %s18
      %24 = dma.hbm_to_vmem [thread:$0]  %s0, 256, %s19, [#allocation4], 128, 128, 8
    $region5: #{tpu_custom_call.1} parent=1 // pred_fallthru
      _
    // Predicated region
    $region6: #{tpu_custom_call.1} parent=1 // pred_check
      _
    $region7: #{tpu_custom_call.1} parent=1 // pred_check_branch
      %26 = sbr.rel (0) target = $region9
    $region8: #{tpu_custom_call.1} parent=1 // pred_region
      %s28 = ssub.s32 6144, 6144
      %29 = vsyncadd [#allocation7], %s28
      %s30 = sshll.u32 [#allocation6], 4
      %s31 = int_to_ptr.vmem [resolvable:$true] %s30
      %36 = dma.hbm_to_vmem [thread:$0]  %s1, 6144, %s31, [#allocation7], 384, 384, 24
    $region9: #{tpu_custom_call.1} parent=1 // pred_fallthru
      _
    // Predicated region
    $region10: #{tpu_custom_call.1} parent=1 // pred_check
      _
    $region11: #{tpu_custom_call.1} parent=1 // pred_check_branch
      %38 = sbr.rel (0) target = $region13
    $region12: #{tpu_custom_call.1} parent=1 // pred_region
      %s40 = ssub.s32 6144, 6144
      %41 = vsyncadd [#allocation7], %s40
      %s42 = sshll.u32 [#allocation8], 4
      %s43 = int_to_ptr.vmem [resolvable:$true] %s42
      %48 = dma.hbm_to_vmem [thread:$0]  %s2, 6144, %s43, [#allocation7], 384, 384, 24
    $region13: #{tpu_custom_call.1} parent=1 // pred_fallthru
      _
    // Predicated region
    $region14: #{tpu_custom_call.1} parent=1 // pred_check
      _
    $region15: #{tpu_custom_call.1} parent=1 // pred_check_branch
      %50 = sbr.rel (0) target = $region17
    $region16: #{tpu_custom_call.1} parent=1 // pred_region
      %s52 = ssub.s32 6144, 6144
      %53 = vsyncadd [#allocation10], %s52
      %s54 = sshll.u32 [#allocation9], 4
      %s55 = int_to_ptr.vmem [resolvable:$true] %s54
      %60 = dma.hbm_to_vmem [thread:$0]  %s3, 6144, %s55, [#allocation10], 128, 128, 8
    $region17: #{tpu_custom_call.1} parent=1 // pred_fallthru
      _
    // Predicated region
    $region18: #{tpu_custom_call.1} parent=1 // pred_check
      _
    $region19: #{tpu_custom_call.1} parent=1 // pred_check_branch
      %62 = sbr.rel (0) target = $region21
    $region20: #{tpu_custom_call.1} parent=1 // pred_region
      %63 = dma.done [#allocation4], 256
    $region21: #{tpu_custom_call.1} parent=1 // pred_fallthru
      _
    // Predicated region
    $region22: #{tpu_custom_call.1} parent=1 // pred_check
      _
    $region23: #{tpu_custom_call.1} parent=1 // pred_check_branch
      %65 = sbr.rel (0) target = $region25
    $region24: #{tpu_custom_call.1} parent=1 // pred_region
      %66 = dma.done [#allocation7], 6144
    $region25: #{tpu_custom_call.1} parent=1 // pred_fallthru
      _
    // Predicated region
    $region26: #{tpu_custom_call.1} parent=1 // pred_check
      _
    $region27: #{tpu_custom_call.1} parent=1 // pred_check_branch
      %68 = sbr.rel (0) target = $region29
    $region28: #{tpu_custom_call.1} parent=1 // pred_region
      %69 = dma.done [#allocation7], 6144
    $region29: #{tpu_custom_call.1} parent=1 // pred_fallthru
      _
    // Predicated region
    $region30: #{tpu_custom_call.1} parent=1 // pred_check
      _
    $region31: #{tpu_custom_call.1} parent=1 // pred_check_branch
      %71 = sbr.rel (0) target = $region33
    $region32: #{tpu_custom_call.1} parent=1 // pred_region
      %72 = dma.done [#allocation10], 6144
    $region33: #{tpu_custom_call.1} parent=1 // pred_fallthru
      _
    %p73 = scmp.eq.s32.totalorder 0, 0
    // Predicated region
    $region34: #{tpu_custom_call.1} parent=1 // pred_check
      %p74 = pneg %p73
    $region35: #{tpu_custom_call.1} parent=1 // pred_check_branch
      %76 = sbr.rel (%p74) target = $region37
    $region36: #{tpu_custom_call.1} parent=1 // pred_region
      %77 = vst [vmem:[#allocation2] sm:$0xff] 0.0
      %78 = vst [vmem:[#allocation2 + $0x8] sm:$0xff] 0.0
    $region37: #{tpu_custom_call.1} parent=1 // pred_fallthru
      _
    %v79 = vld [vmem:[#allocation3] sm:$0xff]
    %v80 = vld [vmem:[#allocation3 + $0x8] sm:$0xff]
    %v81 = vld [vmem:[#allocation6] sm:$0xff]
    %v82 = vld [vmem:[#allocation6 + $0x8] sm:$0xff]
    %v83 = vld [vmem:[#allocation6 + $0x10] sm:$0xff]
    %v84 = vld [vmem:[#allocation6 + $0x18] sm:$0xff]
    %v85 = vld [vmem:[#allocation6 + $0x20] sm:$0xff]
    %v86 = vld [vmem:[#allocation6 + $0x28] sm:$0xff]
    %v87 = vld [vmem:[#allocation6 + $0x30] sm:$0xff]
    %v88 = vld [vmem:[#allocation6 + $0x38] sm:$0xff]
    %v89 = vld [vmem:[#allocation6 + $0x40] sm:$0xff]
    %v90 = vld [vmem:[#allocation6 + $0x48] sm:$0xff]
    %v91 = vld [vmem:[#allocation6 + $0x50] sm:$0xff]
    %v92 = vld [vmem:[#allocation6 + $0x58] sm:$0xff]
    %v93 = vld [vmem:[#allocation6 + $0x60] sm:$0xff]
    %v94 = vld [vmem:[#allocation6 + $0x68] sm:$0xff]
    %v95 = vld [vmem:[#allocation6 + $0x70] sm:$0xff]
    %v96 = vld [vmem:[#allocation6 + $0x78] sm:$0xff]
    %v97 = vld [vmem:[#allocation6 + $0x80] sm:$0xff]
    %v98 = vld [vmem:[#allocation6 + $0x88] sm:$0xff]
    %v99 = vld [vmem:[#allocation6 + $0x90] sm:$0xff]
    %v100 = vld [vmem:[#allocation6 + $0x98] sm:$0xff]
    %v101 = vld [vmem:[#allocation6 + $0xa0] sm:$0xff]
    %v102 = vld [vmem:[#allocation6 + $0xa8] sm:$0xff]
    %v103 = vld [vmem:[#allocation6 + $0xb0] sm:$0xff]
    %v104 = vld [vmem:[#allocation6 + $0xb8] sm:$0xff]
    %v105 = vld [vmem:[#allocation6 + $0xc0] sm:$0xff]
    %v106 = vld [vmem:[#allocation6 + $0xc8] sm:$0xff]
    %v107 = vld [vmem:[#allocation6 + $0xd0] sm:$0xff]
    %v108 = vld [vmem:[#allocation6 + $0xd8] sm:$0xff]
    %v109 = vld [vmem:[#allocation6 + $0xe0] sm:$0xff]
    %v110 = vld [vmem:[#allocation6 + $0xe8] sm:$0xff]
    %v111 = vld [vmem:[#allocation6 + $0xf0] sm:$0xff]
    %v112 = vld [vmem:[#allocation6 + $0xf8] sm:$0xff]
    %v113 = vld [vmem:[#allocation6 + $0x100] sm:$0xff]
    %v114 = vld [vmem:[#allocation6 + $0x108] sm:$0xff]
    %v115 = vld [vmem:[#allocation6 + $0x110] sm:$0xff]
    %v116 = vld [vmem:[#allocation6 + $0x118] sm:$0xff]
    %v117 = vld [vmem:[#allocation6 + $0x120] sm:$0xff]
    %v118 = vld [vmem:[#allocation6 + $0x128] sm:$0xff]
    %v119 = vld [vmem:[#allocation6 + $0x130] sm:$0xff]
    %v120 = vld [vmem:[#allocation6 + $0x138] sm:$0xff]
    %v121 = vld [vmem:[#allocation6 + $0x140] sm:$0xff]
    %v122 = vld [vmem:[#allocation6 + $0x148] sm:$0xff]
    %v123 = vld [vmem:[#allocation6 + $0x150] sm:$0xff]
    %v124 = vld [vmem:[#allocation6 + $0x158] sm:$0xff]
    %v125 = vld [vmem:[#allocation6 + $0x160] sm:$0xff]
    %v126 = vld [vmem:[#allocation6 + $0x168] sm:$0xff]
    %v127 = vld [vmem:[#allocation6 + $0x170] sm:$0xff]
    %v128 = vld [vmem:[#allocation6 + $0x178] sm:$0xff]
    %v129 = vand.u32 %v82, 4294901760
    %130 = vmatprep.subr.mxu0 %v129
    %v131 = vand.u32 %v81, 4294901760
    %132 = vmatpush1.msra.mxu0 %v131
    %v133 = vand.u32 %v85, 4294901760
    %134 = vmatprep.subr.mxu0 %v133
    %v135 = vand.u32 %v84, 4294901760
    %136 = vmatpush1.msra.mxu0 %v135
    %v137 = vand.u32 %v88, 4294901760
    %138 = vmatprep.subr.mxu0 %v137
    %v139 = vand.u32 %v87, 4294901760
    %140 = vmatpush1.msra.mxu0 %v139
    %v141 = vand.u32 %v91, 4294901760
    %142 = vmatprep.subr.mxu0 %v141
    %v143 = vand.u32 %v90, 4294901760
    %144 = vmatpush1.msra.mxu0 %v143
    %v145 = vand.u32 %v94, 4294901760
    %146 = vmatprep.subr.mxu0 %v145
    %v147 = vand.u32 %v93, 4294901760
    %148 = vmatpush1.msra.mxu0 %v147
    %v149 = vand.u32 %v97, 4294901760
    %150 = vmatprep.subr.mxu0 %v149
    %v151 = vand.u32 %v96, 4294901760
    %152 = vmatpush1.msra.mxu0 %v151
    %v153 = vand.u32 %v100, 4294901760
    %154 = vmatprep.subr.mxu0 %v153
    %v155 = vand.u32 %v99, 4294901760
    %156 = vmatpush1.msra.mxu0 %v155
    %v157 = vand.u32 %v103, 4294901760
    %158 = vmatprep.subr.mxu0 %v157
    %v159 = vand.u32 %v102, 4294901760
    %160 = vmatpush1.msra.mxu0 %v159
    %v161 = vand.u32 %v106, 4294901760
    %162 = vmatprep.subr.mxu0 %v161
    %v163 = vand.u32 %v105, 4294901760
    %164 = vmatpush1.msra.mxu0 %v163
    %v165 = vand.u32 %v109, 4294901760
    %166 = vmatprep.subr.mxu0 %v165
    %v167 = vand.u32 %v108, 4294901760
    %168 = vmatpush1.msra.mxu0 %v167
    %v169 = vand.u32 %v112, 4294901760
    %170 = vmatprep.subr.mxu0 %v169
    %v171 = vand.u32 %v111, 4294901760
    %172 = vmatpush1.msra.mxu0 %v171
    %v173 = vand.u32 %v115, 4294901760
    %174 = vmatprep.subr.mxu0 %v173
    %v175 = vand.u32 %v114, 4294901760
    %176 = vmatpush1.msra.mxu0 %v175
    %v177 = vand.u32 %v118, 4294901760
    %178 = vmatprep.subr.mxu0 %v177
    %v179 = vand.u32 %v117, 4294901760
    %180 = vmatpush1.msra.mxu0 %v179
    %v181 = vand.u32 %v121, 4294901760
    %182 = vmatprep.subr.mxu0 %v181
    %v183 = vand.u32 %v120, 4294901760
    %184 = vmatpush1.msra.mxu0 %v183
    %v185 = vand.u32 %v124, 4294901760
    %186 = vmatprep.subr.mxu0 %v185
    %v187 = vand.u32 %v123, 4294901760
    %188 = vmatpush1.msra.mxu0 %v187
    %v189 = vand.u32 %v127, 4294901760
    %190 = vmatprep.subr.mxu0 %v189
    %v191 = vand.u32 %v126, 4294901760
    %192 = vmatpush1.msra.mxu0 %v191
    %193 = vmatprep.subr.mxu0 0.0
    %194 = vmatpush1.msra.mxu0 0.0
    %195 = vmatprep.subr.mxu0 0.0
    %196 = vmatpush1.msra.mxu0 0.0
    %197 = vmatprep.subr.mxu0 0.0
    %198 = vmatpush1.msra.mxu0 0.0
    %199 = vmatprep.subr.mxu0 0.0
    %200 = vmatpush1.msra.mxu0 0.0
    %201 = vmatprep.subr.mxu0 0.0
    %202 = vmatpush1.msra.mxu0 0.0
    %203 = vmatprep.subr.mxu0 0.0
    %204 = vmatpush1.msra.mxu0 0.0
    %205 = vmatprep.subr.mxu0 0.0
    %206 = vmatpush1.msra.mxu0 0.0
    %207 = vmatprep.subr.mxu0 0.0
    %208 = vmatpush1.msra.mxu0 0.0
    %209 = vmatprep.subr.mxu0 0.0
    %210 = vmatpush1.msra.mxu0 0.0
    %211 = vmatprep.subr.mxu0 0.0
    %212 = vmatpush1.msra.mxu0 0.0
    %213 = vmatprep.subr.mxu0 0.0
    %214 = vmatpush1.msra.mxu0 0.0
    %215 = vmatprep.subr.mxu0 0.0
    %216 = vmatpush1.msra.mxu0 0.0
    %217 = vmatprep.subr.mxu0 0.0
    %218 = vmatpush1.msra.mxu0 0.0
    %219 = vmatprep.subr.mxu0 0.0
    %220 = vmatpush1.msra.mxu0 0.0
    %221 = vmatprep.subr.mxu0 0.0
    %222 = vmatpush1.msra.mxu0 0.0
    %223 = vmatprep.subr.mxu0 0.0
    %224 = vmatpush1.msra.mxu0 0.0
    %225 = vmatprep.mubr.f32.mxu0 0.0
    %v226 = vand.u32 %v79, 4294901760
    %v227 = vsub.f32 %v79, %v226
    %v228 = vand.u32 %v227, 4294901760
    %v229 = vsub.f32 %v227, %v228
    %v230 = vand.u32 %v229, 4294901760
    %231 = vmatmul.mubr.f32.gmra.mrb[0].mxu0 %v230
    %v232 = vpop.f32.mrb[0].mxu0
    %v233 = vadd.f32 0.0, %v232
    %v234 = vpop.f32.mrb[0].mxu0
    %v235 = vadd.f32 0.0, %v234
    %236 = vmatprep.mubr.f32.mxu0 0.0
    %v237 = vand.u32 %v80, 4294901760
    %v238 = vsub.f32 %v80, %v237
    %v239 = vand.u32 %v238, 4294901760
    %v240 = vsub.f32 %v238, %v239
    %v241 = vand.u32 %v240, 4294901760
    %242 = vmatmul.mubr.f32.gmra.mrb[0].mxu0 %v241
    %v243 = vpop.f32.mrb[0].mxu0
    %v244 = vadd.f32 0.0, %v243
    %v245 = vpop.f32.mrb[0].mxu0
    %v246 = vadd.f32 0.0, %v245
    %247 = vdwg.mxu0
    %v248 = vand.u32 %v82, 4294901760
    %v249 = vsub.f32 %v82, %v248
    %v250 = vand.u32 %v249, 4294901760
    %v251 = vsub.f32 %v249, %v250
    %v252 = vand.u32 %v251, 4294901760
    %253 = vmatprep.subr.mxu0 %v252
    %v254 = vand.u32 %v81, 4294901760
    %v255 = vsub.f32 %v81, %v254
    %v256 = vand.u32 %v255, 4294901760
    %v257 = vsub.f32 %v255, %v256
    %v258 = vand.u32 %v257, 4294901760
    %259 = vmatpush1.msra.mxu0 %v258
    %v260 = vand.u32 %v85, 4294901760
    %v261 = vsub.f32 %v85, %v260
    %v262 = vand.u32 %v261, 4294901760
    %v263 = vsub.f32 %v261, %v262
    %v264 = vand.u32 %v263, 4294901760
    %265 = vmatprep.subr.mxu0 %v264
    %v266 = vand.u32 %v84, 4294901760
    %v267 = vsub.f32 %v84, %v266
    %v268 = vand.u32 %v267, 4294901760
    %v269 = vsub.f32 %v267, %v268
    %v270 = vand.u32 %v269, 4294901760
    %271 = vmatpush1.msra.mxu0 %v270
    %v272 = vand.u32 %v88, 4294901760
    %v273 = vsub.f32 %v88, %v272
    %v274 = vand.u32 %v273, 4294901760
    %v275 = vsub.f32 %v273, %v274
    %v276 = vand.u32 %v275, 4294901760
    %277 = vmatprep.subr.mxu0 %v276
    %v278 = vand.u32 %v87, 4294901760
    %v279 = vsub.f32 %v87, %v278
    %v280 = vand.u32 %v279, 4294901760
    %v281 = vsub.f32 %v279, %v280
    %v282 = vand.u32 %v281, 4294901760
    %283 = vmatpush1.msra.mxu0 %v282
    %v284 = vand.u32 %v91, 4294901760
    %v285 = vsub.f32 %v91, %v284
    %v286 = vand.u32 %v285, 4294901760
    %v287 = vsub.f32 %v285, %v286
    %v288 = vand.u32 %v287, 4294901760
    %289 = vmatprep.subr.mxu0 %v288
    %v290 = vand.u32 %v90, 4294901760
    %v291 = vsub.f32 %v90, %v290
    %v292 = vand.u32 %v291, 4294901760
    %v293 = vsub.f32 %v291, %v292
    %v294 = vand.u32 %v293, 4294901760
    %295 = vmatpush1.msra.mxu0 %v294
    %v296 = vand.u32 %v94, 4294901760
    %v297 = vsub.f32 %v94, %v296
    %v298 = vand.u32 %v297, 4294901760
    %v299 = vsub.f32 %v297, %v298
    %v300 = vand.u32 %v299, 4294901760
    %301 = vmatprep.subr.mxu0 %v300
    %v302 = vand.u32 %v93, 4294901760
    %v303 = vsub.f32 %v93, %v302
    %v304 = vand.u32 %v303, 4294901760
    %v305 = vsub.f32 %v303, %v304
    %v306 = vand.u32 %v305, 4294901760
    %307 = vmatpush1.msra.mxu0 %v306
    %v308 = vand.u32 %v97, 4294901760
    %v309 = vsub.f32 %v97, %v308
    %v310 = vand.u32 %v309, 4294901760
    %v311 = vsub.f32 %v309, %v310
    %v312 = vand.u32 %v311, 4294901760
    %313 = vmatprep.subr.mxu0 %v312
    %v314 = vand.u32 %v96, 4294901760
    %v315 = vsub.f32 %v96, %v314
    %v316 = vand.u32 %v315, 4294901760
    %v317 = vsub.f32 %v315, %v316
    %v318 = vand.u32 %v317, 4294901760
    %319 = vmatpush1.msra.mxu0 %v318
    %v320 = vand.u32 %v100, 4294901760
    %v321 = vsub.f32 %v100, %v320
    %v322 = vand.u32 %v321, 4294901760
    %v323 = vsub.f32 %v321, %v322
    %v324 = vand.u32 %v323, 4294901760
    %325 = vmatprep.subr.mxu0 %v324
    %v326 = vand.u32 %v99, 4294901760
    %v327 = vsub.f32 %v99, %v326
    %v328 = vand.u32 %v327, 4294901760
    %v329 = vsub.f32 %v327, %v328
    %v330 = vand.u32 %v329, 4294901760
    %331 = vmatpush1.msra.mxu0 %v330
    %v332 = vand.u32 %v103, 4294901760
    %v333 = vsub.f32 %v103, %v332
    %v334 = vand.u32 %v333, 4294901760
    %v335 = vsub.f32 %v333, %v334
    %v336 = vand.u32 %v335, 4294901760
    %337 = vmatprep.subr.mxu0 %v336
    %v338 = vand.u32 %v102, 4294901760
    %v339 = vsub.f32 %v102, %v338
    %v340 = vand.u32 %v339, 4294901760
    %v341 = vsub.f32 %v339, %v340
    %v342 = vand.u32 %v341, 4294901760
    %343 = vmatpush1.msra.mxu0 %v342
    %v344 = vand.u32 %v106, 4294901760
    %v345 = vsub.f32 %v106, %v344
    %v346 = vand.u32 %v345, 4294901760
    %v347 = vsub.f32 %v345, %v346
    %v348 = vand.u32 %v347, 4294901760
    %349 = vmatprep.subr.mxu0 %v348
    %v350 = vand.u32 %v105, 4294901760
    %v351 = vsub.f32 %v105, %v350
    %v352 = vand.u32 %v351, 4294901760
    %v353 = vsub.f32 %v351, %v352
    %v354 = vand.u32 %v353, 4294901760
    %355 = vmatpush1.msra.mxu0 %v354
    %v356 = vand.u32 %v109, 4294901760
    %v357 = vsub.f32 %v109, %v356
    %v358 = vand.u32 %v357, 4294901760
    %v359 = vsub.f32 %v357, %v358
    %v360 = vand.u32 %v359, 4294901760
    %361 = vmatprep.subr.mxu0 %v360
    %v362 = vand.u32 %v108, 4294901760
    %v363 = vsub.f32 %v108, %v362
    %v364 = vand.u32 %v363, 4294901760
    %v365 = vsub.f32 %v363, %v364
    %v366 = vand.u32 %v365, 4294901760
    %367 = vmatpush1.msra.mxu0 %v366
    %v368 = vand.u32 %v112, 4294901760
    %v369 = vsub.f32 %v112, %v368
    %v370 = vand.u32 %v369, 4294901760
    %v371 = vsub.f32 %v369, %v370
    %v372 = vand.u32 %v371, 4294901760
    %373 = vmatprep.subr.mxu0 %v372
    %v374 = vand.u32 %v111, 4294901760
    %v375 = vsub.f32 %v111, %v374
    %v376 = vand.u32 %v375, 4294901760
    %v377 = vsub.f32 %v375, %v376
    %v378 = vand.u32 %v377, 4294901760
    %379 = vmatpush1.msra.mxu0 %v378
    %v380 = vand.u32 %v115, 4294901760
    %v381 = vsub.f32 %v115, %v380
    %v382 = vand.u32 %v381, 4294901760
    %v383 = vsub.f32 %v381, %v382
    %v384 = vand.u32 %v383, 4294901760
    %385 = vmatprep.subr.mxu0 %v384
    %v386 = vand.u32 %v114, 4294901760
    %v387 = vsub.f32 %v114, %v386
    %v388 = vand.u32 %v387, 4294901760
    %v389 = vsub.f32 %v387, %v388
    %v390 = vand.u32 %v389, 4294901760
    %391 = vmatpush1.msra.mxu0 %v390
    %v392 = vand.u32 %v118, 4294901760
    %v393 = vsub.f32 %v118, %v392
    %v394 = vand.u32 %v393, 4294901760
    %v395 = vsub.f32 %v393, %v394
    %v396 = vand.u32 %v395, 4294901760
    %397 = vmatprep.subr.mxu0 %v396
    %v398 = vand.u32 %v117, 4294901760
    %v399 = vsub.f32 %v117, %v398
    %v400 = vand.u32 %v399, 4294901760
    %v401 = vsub.f32 %v399, %v400
    %v402 = vand.u32 %v401, 4294901760
    %403 = vmatpush1.msra.mxu0 %v402
    %v404 = vand.u32 %v121, 4294901760
    %v405 = vsub.f32 %v121, %v404
    %v406 = vand.u32 %v405, 4294901760
    %v407 = vsub.f32 %v405, %v406
    %v408 = vand.u32 %v407, 4294901760
    %409 = vmatprep.subr.mxu0 %v408
    %v410 = vand.u32 %v120, 4294901760
    %v411 = vsub.f32 %v120, %v410
    %v412 = vand.u32 %v411, 4294901760
    %v413 = vsub.f32 %v411, %v412
    %v414 = vand.u32 %v413, 4294901760
    %415 = vmatpush1.msra.mxu0 %v414
    %v416 = vand.u32 %v124, 4294901760
    %v417 = vsub.f32 %v124, %v416
    %v418 = vand.u32 %v417, 4294901760
    %v419 = vsub.f32 %v417, %v418
    %v420 = vand.u32 %v419, 4294901760
    %421 = vmatprep.subr.mxu0 %v420
    %v422 = vand.u32 %v123, 4294901760
    %v423 = vsub.f32 %v123, %v422
    %v424 = vand.u32 %v423, 4294901760
    %v425 = vsub.f32 %v423, %v424
    %v426 = vand.u32 %v425, 4294901760
    %427 = vmatpush1.msra.mxu0 %v426
    %v428 = vand.u32 %v127, 4294901760
    %v429 = vsub.f32 %v127, %v428
    %v430 = vand.u32 %v429, 4294901760
    %v431 = vsub.f32 %v429, %v430
    %v432 = vand.u32 %v431, 4294901760
    %433 = vmatprep.subr.mxu0 %v432
    %v434 = vand.u32 %v126, 4294901760
    %v435 = vsub.f32 %v126, %v434
    %v436 = vand.u32 %v435, 4294901760
    %v437 = vsub.f32 %v435, %v436
    %v438 = vand.u32 %v437, 4294901760
    %439 = vmatpush1.msra.mxu0 %v438
    %440 = vmatprep.subr.mxu0 0.0
    %441 = vmatpush1.msra.mxu0 0.0
    %442 = vmatprep.subr.mxu0 0.0
    %443 = vmatpush1.msra.mxu0 0.0
    %444 = vmatprep.subr.mxu0 0.0
    %445 = vmatpush1.msra.mxu0 0.0
    %446 = vmatprep.subr.mxu0 0.0
    %447 = vmatpush1.msra.mxu0 0.0
    %448 = vmatprep.subr.mxu0 0.0
    %449 = vmatpush1.msra.mxu0 0.0
    %450 = vmatprep.subr.mxu0 0.0
    %451 = vmatpush1.msra.mxu0 0.0
    %452 = vmatprep.subr.mxu0 0.0
    %453 = vmatpush1.msra.mxu0 0.0
    %454 = vmatprep.subr.mxu0 0.0
    %455 = vmatpush1.msra.mxu0 0.0
    %456 = vmatprep.subr.mxu0 0.0
    %457 = vmatpush1.msra.mxu0 0.0
    %458 = vmatprep.subr.mxu0 0.0
    %459 = vmatpush1.msra.mxu0 0.0
    %460 = vmatprep.subr.mxu0 0.0
    %461 = vmatpush1.msra.mxu0 0.0
    %462 = vmatprep.subr.mxu0 0.0
    %463 = vmatpush1.msra.mxu0 0.0
    %464 = vmatprep.subr.mxu0 0.0
    %465 = vmatpush1.msra.mxu0 0.0
    %466 = vmatprep.subr.mxu0 0.0
    %467 = vmatpush1.msra.mxu0 0.0
    %468 = vmatprep.subr.mxu0 0.0
    %469 = vmatpush1.msra.mxu0 0.0
    %470 = vmatprep.subr.mxu0 0.0
    %471 = vmatpush1.msra.mxu0 0.0
    %472 = vmatprep.mubr.f32.mxu0 0.0
    %v473 = vand.u32 %v79, 4294901760
    %474 = vmatmul.mubr.f32.gmra.mrb[0].mxu0 %v473
    %v475 = vpop.f32.mrb[0].mxu0
    %v476 = vadd.f32 %v233, %v475
    %v477 = vpop.f32.mrb[0].mxu0
    %v478 = vadd.f32 %v235, %v477
    %479 = vmatprep.mubr.f32.mxu0 0.0
    %v480 = vand.u32 %v80, 4294901760
    %481 = vmatmul.mubr.f32.gmra.mrb[0].mxu0 %v480
    %v482 = vpop.f32.mrb[0].mxu0
    %v483 = vadd.f32 %v244, %v482
    %v484 = vpop.f32.mrb[0].mxu0
    %v485 = vadd.f32 %v246, %v484
    %486 = vdwg.mxu0
    %v487 = vand.u32 %v82, 4294901760
    %v488 = vsub.f32 %v82, %v487
    %489 = vmatprep.subr.mxu0 %v488
    %v490 = vand.u32 %v81, 4294901760
    %v491 = vsub.f32 %v81, %v490
    %492 = vmatpush1.msra.mxu0 %v491
    %v493 = vand.u32 %v85, 4294901760
    %v494 = vsub.f32 %v85, %v493
    %495 = vmatprep.subr.mxu0 %v494
    %v496 = vand.u32 %v84, 4294901760
    %v497 = vsub.f32 %v84, %v496
    %498 = vmatpush1.msra.mxu0 %v497
    %v499 = vand.u32 %v88, 4294901760
    %v500 = vsub.f32 %v88, %v499
    %501 = vmatprep.subr.mxu0 %v500
    %v502 = vand.u32 %v87, 4294901760
    %v503 = vsub.f32 %v87, %v502
    %504 = vmatpush1.msra.mxu0 %v503
    %v505 = vand.u32 %v91, 4294901760
    %v506 = vsub.f32 %v91, %v505
    %507 = vmatprep.subr.mxu0 %v506
    %v508 = vand.u32 %v90, 4294901760
    %v509 = vsub.f32 %v90, %v508
    %510 = vmatpush1.msra.mxu0 %v509
    %v511 = vand.u32 %v94, 4294901760
    %v512 = vsub.f32 %v94, %v511
    %513 = vmatprep.subr.mxu0 %v512
    %v514 = vand.u32 %v93, 4294901760
    %v515 = vsub.f32 %v93, %v514
    %516 = vmatpush1.msra.mxu0 %v515
    %v517 = vand.u32 %v97, 4294901760
    %v518 = vsub.f32 %v97, %v517
    %519 = vmatprep.subr.mxu0 %v518
    %v520 = vand.u32 %v96, 4294901760
    %v521 = vsub.f32 %v96, %v520
    %522 = vmatpush1.msra.mxu0 %v521
    %v523 = vand.u32 %v100, 4294901760
    %v524 = vsub.f32 %v100, %v523
    %525 = vmatprep.subr.mxu0 %v524
    %v526 = vand.u32 %v99, 4294901760
    %v527 = vsub.f32 %v99, %v526
    %528 = vmatpush1.msra.mxu0 %v527
    %v529 = vand.u32 %v103, 4294901760
    %v530 = vsub.f32 %v103, %v529
    %531 = vmatprep.subr.mxu0 %v530
    %v532 = vand.u32 %v102, 4294901760
    %v533 = vsub.f32 %v102, %v532
    %534 = vmatpush1.msra.mxu0 %v533
    %v535 = vand.u32 %v106, 4294901760
    %v536 = vsub.f32 %v106, %v535
    %537 = vmatprep.subr.mxu0 %v536
    %v538 = vand.u32 %v105, 4294901760
    %v539 = vsub.f32 %v105, %v538
    %540 = vmatpush1.msra.mxu0 %v539
    %v541 = vand.u32 %v109, 4294901760
    %v542 = vsub.f32 %v109, %v541
    %543 = vmatprep.subr.mxu0 %v542
    %v544 = vand.u32 %v108, 4294901760
    %v545 = vsub.f32 %v108, %v544
    %546 = vmatpush1.msra.mxu0 %v545
    %v547 = vand.u32 %v112, 4294901760
    %v548 = vsub.f32 %v112, %v547
    %549 = vmatprep.subr.mxu0 %v548
    %v550 = vand.u32 %v111, 4294901760
    %v551 = vsub.f32 %v111, %v550
    %552 = vmatpush1.msra.mxu0 %v551
    %v553 = vand.u32 %v115, 4294901760
    %v554 = vsub.f32 %v115, %v553
    %555 = vmatprep.subr.mxu0 %v554
    %v556 = vand.u32 %v114, 4294901760
    %v557 = vsub.f32 %v114, %v556
    %558 = vmatpush1.msra.mxu0 %v557
    %v559 = vand.u32 %v118, 4294901760
    %v560 = vsub.f32 %v118, %v559
    %561 = vmatprep.subr.mxu0 %v560
    %v562 = vand.u32 %v117, 4294901760
    %v563 = vsub.f32 %v117, %v562
    %564 = vmatpush1.msra.mxu0 %v563
    %v565 = vand.u32 %v121, 4294901760
    %v566 = vsub.f32 %v121, %v565
    %567 = vmatprep.subr.mxu0 %v566
    %v568 = vand.u32 %v120, 4294901760
    %v569 = vsub.f32 %v120, %v568
    %570 = vmatpush1.msra.mxu0 %v569
    %v571 = vand.u32 %v124, 4294901760
    %v572 = vsub.f32 %v124, %v571
    %573 = vmatprep.subr.mxu0 %v572
    %v574 = vand.u32 %v123, 4294901760
    %v575 = vsub.f32 %v123, %v574
    %576 = vmatpush1.msra.mxu0 %v575
    %v577 = vand.u32 %v127, 4294901760
    %v578 = vsub.f32 %v127, %v577
    %579 = vmatprep.subr.mxu0 %v578
    %v580 = vand.u32 %v126, 4294901760
    %v581 = vsub.f32 %v126, %v580
    %582 = vmatpush1.msra.mxu0 %v581
    %583 = vmatprep.subr.mxu0 0.0
    %584 = vmatpush1.msra.mxu0 0.0
    %585 = vmatprep.subr.mxu0 0.0
    %586 = vmatpush1.msra.mxu0 0.0
    %587 = vmatprep.subr.mxu0 0.0
    %588 = vmatpush1.msra.mxu0 0.0
    %589 = vmatprep.subr.mxu0 0.0
    %590 = vmatpush1.msra.mxu0 0.0
    %591 = vmatprep.subr.mxu0 0.0
    %592 = vmatpush1.msra.mxu0 0.0
    %593 = vmatprep.subr.mxu0 0.0
    %594 = vmatpush1.msra.mxu0 0.0
    %595 = vmatprep.subr.mxu0 0.0
    %596 = vmatpush1.msra.mxu0 0.0
    %597 = vmatprep.subr.mxu0 0.0
    %598 = vmatpush1.msra.mxu0 0.0
    %599 = vmatprep.subr.mxu0 0.0
    %600 = vmatpush1.msra.mxu0 0.0
    %601 = vmatprep.subr.mxu0 0.0
    %602 = vmatpush1.msra.mxu0 0.0
    %603 = vmatprep.subr.mxu0 0.0
    %604 = vmatpush1.msra.mxu0 0.0
    %605 = vmatprep.subr.mxu0 0.0
    %606 = vmatpush1.msra.mxu0 0.0
    %607 = vmatprep.subr.mxu0 0.0
    %608 = vmatpush1.msra.mxu0 0.0
    %609 = vmatprep.subr.mxu0 0.0
    %610 = vmatpush1.msra.mxu0 0.0
    %611 = vmatprep.subr.mxu0 0.0
    %612 = vmatpush1.msra.mxu0 0.0
    %613 = vmatprep.subr.mxu0 0.0
    %614 = vmatpush1.msra.mxu0 0.0
    %615 = vmatprep.mubr.f32.mxu0 0.0
    %v616 = vand.u32 %v79, 4294901760
    %v617 = vsub.f32 %v79, %v616
    %618 = vmatmul.mubr.f32.gmra.mrb[0].mxu0 %v617
    %v619 = vpop.f32.mrb[0].mxu0
    %v620 = vadd.f32 %v476, %v619
    %v621 = vpop.f32.mrb[0].mxu0
    %v622 = vadd.f32 %v478, %v621
    %623 = vmatprep.mubr.f32.mxu0 0.0
    %v624 = vand.u32 %v80, 4294901760
    %v625 = vsub.f32 %v80, %v624
    %626 = vmatmul.mubr.f32.gmra.mrb[0].mxu0 %v625
    %v627 = vpop.f32.mrb[0].mxu0
    %v628 = vadd.f32 %v483, %v627
    %v629 = vpop.f32.mrb[0].mxu0
    %v630 = vadd.f32 %v485, %v629
    %631 = vdwg.mxu0
    %v632 = vand.u32 %v82, 4294901760
    %633 = vmatprep.subr.mxu0 %v632
    %v634 = vand.u32 %v81, 4294901760
    %635 = vmatpush1.msra.mxu0 %v634
    %v636 = vand.u32 %v85, 4294901760
    %637 = vmatprep.subr.mxu0 %v636
    %v638 = vand.u32 %v84, 4294901760
    %639 = vmatpush1.msra.mxu0 %v638
    %v640 = vand.u32 %v88, 4294901760
    %641 = vmatprep.subr.mxu0 %v640
    %v642 = vand.u32 %v87, 4294901760
    %643 = vmatpush1.msra.mxu0 %v642
    %v644 = vand.u32 %v91, 4294901760
    %645 = vmatprep.subr.mxu0 %v644
    %v646 = vand.u32 %v90, 4294901760
    %647 = vmatpush1.msra.mxu0 %v646
    %v648 = vand.u32 %v94, 4294901760
    %649 = vmatprep.subr.mxu0 %v648
    %v650 = vand.u32 %v93, 4294901760
    %651 = vmatpush1.msra.mxu0 %v650
    %v652 = vand.u32 %v97, 4294901760
    %653 = vmatprep.subr.mxu0 %v652
    %v654 = vand.u32 %v96, 4294901760
    %655 = vmatpush1.msra.mxu0 %v654
    %v656 = vand.u32 %v100, 4294901760
    %657 = vmatprep.subr.mxu0 %v656
    %v658 = vand.u32 %v99, 4294901760
    %659 = vmatpush1.msra.mxu0 %v658
    %v660 = vand.u32 %v103, 4294901760
    %661 = vmatprep.subr.mxu0 %v660
    %v662 = vand.u32 %v102, 4294901760
    %663 = vmatpush1.msra.mxu0 %v662
    %v664 = vand.u32 %v106, 4294901760
    %665 = vmatprep.subr.mxu0 %v664
    %v666 = vand.u32 %v105, 4294901760
    %667 = vmatpush1.msra.mxu0 %v666
    %v668 = vand.u32 %v109, 4294901760
    %669 = vmatprep.subr.mxu0 %v668
    %v670 = vand.u32 %v108, 4294901760
    %671 = vmatpush1.msra.mxu0 %v670
    %v672 = vand.u32 %v112, 4294901760
    %673 = vmatprep.subr.mxu0 %v672
    %v674 = vand.u32 %v111, 4294901760
    %675 = vmatpush1.msra.mxu0 %v674
    %v676 = vand.u32 %v115, 4294901760
    %677 = vmatprep.subr.mxu0 %v676
    %v678 = vand.u32 %v114, 4294901760
    %679 = vmatpush1.msra.mxu0 %v678
    %v680 = vand.u32 %v118, 4294901760
    %681 = vmatprep.subr.mxu0 %v680
    %v682 = vand.u32 %v117, 4294901760
    %683 = vmatpush1.msra.mxu0 %v682
    %v684 = vand.u32 %v121, 4294901760
    %685 = vmatprep.subr.mxu0 %v684
    %v686 = vand.u32 %v120, 4294901760
    %687 = vmatpush1.msra.mxu0 %v686
    %v688 = vand.u32 %v124, 4294901760
    %689 = vmatprep.subr.mxu0 %v688
    %v690 = vand.u32 %v123, 4294901760
    %691 = vmatpush1.msra.mxu0 %v690
    %v692 = vand.u32 %v127, 4294901760
    %693 = vmatprep.subr.mxu0 %v692
    %v694 = vand.u32 %v126, 4294901760
    %695 = vmatpush1.msra.mxu0 %v694
    %696 = vmatprep.subr.mxu0 0.0
    %697 = vmatpush1.msra.mxu0 0.0
    %698 = vmatprep.subr.mxu0 0.0
    %699 = vmatpush1.msra.mxu0 0.0
    %700 = vmatprep.subr.mxu0 0.0
    %701 = vmatpush1.msra.mxu0 0.0
    %702 = vmatprep.subr.mxu0 0.0
    %703 = vmatpush1.msra.mxu0 0.0
    %704 = vmatprep.subr.mxu0 0.0
    %705 = vmatpush1.msra.mxu0 0.0
    %706 = vmatprep.subr.mxu0 0.0
    %707 = vmatpush1.msra.mxu0 0.0
    %708 = vmatprep.subr.mxu0 0.0
    %709 = vmatpush1.msra.mxu0 0.0
    %710 = vmatprep.subr.mxu0 0.0
    %711 = vmatpush1.msra.mxu0 0.0
    %712 = vmatprep.subr.mxu0 0.0
    %713 = vmatpush1.msra.mxu0 0.0
    %714 = vmatprep.subr.mxu0 0.0
    %715 = vmatpush1.msra.mxu0 0.0
    %716 = vmatprep.subr.mxu0 0.0
    %717 = vmatpush1.msra.mxu0 0.0
    %718 = vmatprep.subr.mxu0 0.0
    %719 = vmatpush1.msra.mxu0 0.0
    %720 = vmatprep.subr.mxu0 0.0
    %721 = vmatpush1.msra.mxu0 0.0
    %722 = vmatprep.subr.mxu0 0.0
    %723 = vmatpush1.msra.mxu0 0.0
    %724 = vmatprep.subr.mxu0 0.0
    %725 = vmatpush1.msra.mxu0 0.0
    %726 = vmatprep.subr.mxu0 0.0
    %727 = vmatpush1.msra.mxu0 0.0
    %728 = vmatprep.mubr.f32.mxu0 0.0
    %v729 = vand.u32 %v79, 4294901760
    %v730 = vsub.f32 %v79, %v729
    %v731 = vand.u32 %v730, 4294901760
    %732 = vmatmul.mubr.f32.gmra.mrb[0].mxu0 %v731
    %v733 = vpop.f32.mrb[0].mxu0
    %v734 = vadd.f32 %v620, %v733
    %v735 = vpop.f32.mrb[0].mxu0
    %v736 = vadd.f32 %v622, %v735
    %737 = vmatprep.mubr.f32.mxu0 0.0
    %v738 = vand.u32 %v80, 4294901760
    %v739 = vsub.f32 %v80, %v738
    %v740 = vand.u32 %v739, 4294901760
    %741 = vmatmul.mubr.f32.gmra.mrb[0].mxu0 %v740
    %v742 = vpop.f32.mrb[0].mxu0
    %v743 = vadd.f32 %v628, %v742
    %v744 = vpop.f32.mrb[0].mxu0
    %v745 = vadd.f32 %v630, %v744
    %746 = vdwg.mxu0
    %v747 = vand.u32 %v82, 4294901760
    %v748 = vsub.f32 %v82, %v747
    %v749 = vand.u32 %v748, 4294901760
    %750 = vmatprep.subr.mxu0 %v749
    %v751 = vand.u32 %v81, 4294901760
    %v752 = vsub.f32 %v81, %v751
    %v753 = vand.u32 %v752, 4294901760
    %754 = vmatpush1.msra.mxu0 %v753
    %v755 = vand.u32 %v85, 4294901760
    %v756 = vsub.f32 %v85, %v755
    %v757 = vand.u32 %v756, 4294901760
    %758 = vmatprep.subr.mxu0 %v757
    %v759 = vand.u32 %v84, 4294901760
    %v760 = vsub.f32 %v84, %v759
    %v761 = vand.u32 %v760, 4294901760
    %762 = vmatpush1.msra.mxu0 %v761
    %v763 = vand.u32 %v88, 4294901760
    %v764 = vsub.f32 %v88, %v763
    %v765 = vand.u32 %v764, 4294901760
    %766 = vmatprep.subr.mxu0 %v765
    %v767 = vand.u32 %v87, 4294901760
    %v768 = vsub.f32 %v87, %v767
    %v769 = vand.u32 %v768, 4294901760
    %770 = vmatpush1.msra.mxu0 %v769
    %v771 = vand.u32 %v91, 4294901760
    %v772 = vsub.f32 %v91, %v771
    %v773 = vand.u32 %v772, 4294901760
    %774 = vmatprep.subr.mxu0 %v773
    %v775 = vand.u32 %v90, 4294901760
    %v776 = vsub.f32 %v90, %v775
    %v777 = vand.u32 %v776, 4294901760
    %778 = vmatpush1.msra.mxu0 %v777
    %v779 = vand.u32 %v94, 4294901760
    %v780 = vsub.f32 %v94, %v779
    %v781 = vand.u32 %v780, 4294901760
    %782 = vmatprep.subr.mxu0 %v781
    %v783 = vand.u32 %v93, 4294901760
    %v784 = vsub.f32 %v93, %v783
    %v785 = vand.u32 %v784, 4294901760
    %786 = vmatpush1.msra.mxu0 %v785
    %v787 = vand.u32 %v97, 4294901760
    %v788 = vsub.f32 %v97, %v787
    %v789 = vand.u32 %v788, 4294901760
    %790 = vmatprep.subr.mxu0 %v789
    %v791 = vand.u32 %v96, 4294901760
    %v792 = vsub.f32 %v96, %v791
    %v793 = vand.u32 %v792, 4294901760
    %794 = vmatpush1.msra.mxu0 %v793
    %v795 = vand.u32 %v100, 4294901760
    %v796 = vsub.f32 %v100, %v795
    %v797 = vand.u32 %v796, 4294901760
    %798 = vmatprep.subr.mxu0 %v797
    %v799 = vand.u32 %v99, 4294901760
    %v800 = vsub.f32 %v99, %v799
    %v801 = vand.u32 %v800, 4294901760
    %802 = vmatpush1.msra.mxu0 %v801
    %v803 = vand.u32 %v103, 4294901760
    %v804 = vsub.f32 %v103, %v803
    %v805 = vand.u32 %v804, 4294901760
    %806 = vmatprep.subr.mxu0 %v805
    %v807 = vand.u32 %v102, 4294901760
    %v808 = vsub.f32 %v102, %v807
    %v809 = vand.u32 %v808, 4294901760
    %810 = vmatpush1.msra.mxu0 %v809
    %v811 = vand.u32 %v106, 4294901760
    %v812 = vsub.f32 %v106, %v811
    %v813 = vand.u32 %v812, 4294901760
    %814 = vmatprep.subr.mxu0 %v813
    %v815 = vand.u32 %v105, 4294901760
    %v816 = vsub.f32 %v105, %v815
    %v817 = vand.u32 %v816, 4294901760
    %818 = vmatpush1.msra.mxu0 %v817
    %v819 = vand.u32 %v109, 4294901760
    %v820 = vsub.f32 %v109, %v819
    %v821 = vand.u32 %v820, 4294901760
    %822 = vmatprep.subr.mxu0 %v821
    %v823 = vand.u32 %v108, 4294901760
    %v824 = vsub.f32 %v108, %v823
    %v825 = vand.u32 %v824, 4294901760
    %826 = vmatpush1.msra.mxu0 %v825
    %v827 = vand.u32 %v112, 4294901760
    %v828 = vsub.f32 %v112, %v827
    %v829 = vand.u32 %v828, 4294901760
    %830 = vmatprep.subr.mxu0 %v829
    %v831 = vand.u32 %v111, 4294901760
    %v832 = vsub.f32 %v111, %v831
    %v833 = vand.u32 %v832, 4294901760
    %834 = vmatpush1.msra.mxu0 %v833
    %v835 = vand.u32 %v115, 4294901760
    %v836 = vsub.f32 %v115, %v835
    %v837 = vand.u32 %v836, 4294901760
    %838 = vmatprep.subr.mxu0 %v837
    %v839 = vand.u32 %v114, 4294901760
    %v840 = vsub.f32 %v114, %v839
    %v841 = vand.u32 %v840, 4294901760
    %842 = vmatpush1.msra.mxu0 %v841
    %v843 = vand.u32 %v118, 4294901760
    %v844 = vsub.f32 %v118, %v843
    %v845 = vand.u32 %v844, 4294901760
    %846 = vmatprep.subr.mxu0 %v845
    %v847 = vand.u32 %v117, 4294901760
    %v848 = vsub.f32 %v117, %v847
    %v849 = vand.u32 %v848, 4294901760
    %850 = vmatpush1.msra.mxu0 %v849
    %v851 = vand.u32 %v121, 4294901760
    %v852 = vsub.f32 %v121, %v851
    %v853 = vand.u32 %v852, 4294901760
    %854 = vmatprep.subr.mxu0 %v853
    %v855 = vand.u32 %v120, 4294901760
    %v856 = vsub.f32 %v120, %v855
    %v857 = vand.u32 %v856, 4294901760
    %858 = vmatpush1.msra.mxu0 %v857
    %v859 = vand.u32 %v124, 4294901760
    %v860 = vsub.f32 %v124, %v859
    %v861 = vand.u32 %v860, 4294901760
    %862 = vmatprep.subr.mxu0 %v861
    %v863 = vand.u32 %v123, 4294901760
    %v864 = vsub.f32 %v123, %v863
    %v865 = vand.u32 %v864, 4294901760
    %866 = vmatpush1.msra.mxu0 %v865
    %v867 = vand.u32 %v127, 4294901760
    %v868 = vsub.f32 %v127, %v867
    %v869 = vand.u32 %v868, 4294901760
    %870 = vmatprep.subr.mxu0 %v869
    %v871 = vand.u32 %v126, 4294901760
    %v872 = vsub.f32 %v126, %v871
    %v873 = vand.u32 %v872, 4294901760
    %874 = vmatpush1.msra.mxu0 %v873
    %875 = vmatprep.subr.mxu0 0.0
    %876 = vmatpush1.msra.mxu0 0.0
    %877 = vmatprep.subr.mxu0 0.0
    %878 = vmatpush1.msra.mxu0 0.0
    %879 = vmatprep.subr.mxu0 0.0
    %880 = vmatpush1.msra.mxu0 0.0
    %881 = vmatprep.subr.mxu0 0.0
    %882 = vmatpush1.msra.mxu0 0.0
    %883 = vmatprep.subr.mxu0 0.0
    %884 = vmatpush1.msra.mxu0 0.0
    %885 = vmatprep.subr.mxu0 0.0
    %886 = vmatpush1.msra.mxu0 0.0
    %887 = vmatprep.subr.mxu0 0.0
    %888 = vmatpush1.msra.mxu0 0.0
    %889 = vmatprep.subr.mxu0 0.0
    %890 = vmatpush1.msra.mxu0 0.0
    %891 = vmatprep.subr.mxu0 0.0
    %892 = vmatpush1.msra.mxu0 0.0
    %893 = vmatprep.subr.mxu0 0.0
    %894 = vmatpush1.msra.mxu0 0.0
    %895 = vmatprep.subr.mxu0 0.0
    %896 = vmatpush1.msra.mxu0 0.0
    %897 = vmatprep.subr.mxu0 0.0
    %898 = vmatpush1.msra.mxu0 0.0
    %899 = vmatprep.subr.mxu0 0.0
    %900 = vmatpush1.msra.mxu0 0.0
    %901 = vmatprep.subr.mxu0 0.0
    %902 = vmatpush1.msra.mxu0 0.0
    %903 = vmatprep.subr.mxu0 0.0
    %904 = vmatpush1.msra.mxu0 0.0
    %905 = vmatprep.subr.mxu0 0.0
    %906 = vmatpush1.msra.mxu0 0.0
    %907 = vmatprep.mubr.f32.mxu0 0.0
    %v908 = vand.u32 %v79, 4294901760
    %909 = vmatmul.mubr.f32.gmra.mrb[0].mxu0 %v908
    %v910 = vpop.f32.mrb[0].mxu0
    %v911 = vadd.f32 %v734, %v910
    %v912 = vpop.f32.mrb[0].mxu0
    %v913 = vadd.f32 %v736, %v912
    %914 = vmatprep.mubr.f32.mxu0 0.0
    %v915 = vand.u32 %v80, 4294901760
    %916 = vmatmul.mubr.f32.gmra.mrb[0].mxu0 %v915
    %v917 = vpop.f32.mrb[0].mxu0
    %v918 = vadd.f32 %v743, %v917
    %v919 = vpop.f32.mrb[0].mxu0
    %v920 = vadd.f32 %v745, %v919
    %921 = vdwg.mxu0
    %v922 = vand.u32 %v82, 4294901760
    %923 = vmatprep.subr.mxu0 %v922
    %v924 = vand.u32 %v81, 4294901760
    %925 = vmatpush1.msra.mxu0 %v924
    %v926 = vand.u32 %v85, 4294901760
    %927 = vmatprep.subr.mxu0 %v926
    %v928 = vand.u32 %v84, 4294901760
    %929 = vmatpush1.msra.mxu0 %v928
    %v930 = vand.u32 %v88, 4294901760
    %931 = vmatprep.subr.mxu0 %v930
    %v932 = vand.u32 %v87, 4294901760
    %933 = vmatpush1.msra.mxu0 %v932
    %v934 = vand.u32 %v91, 4294901760
    %935 = vmatprep.subr.mxu0 %v934
    %v936 = vand.u32 %v90, 4294901760
    %937 = vmatpush1.msra.mxu0 %v936
    %v938 = vand.u32 %v94, 4294901760
    %939 = vmatprep.subr.mxu0 %v938
    %v940 = vand.u32 %v93, 4294901760
    %941 = vmatpush1.msra.mxu0 %v940
    %v942 = vand.u32 %v97, 4294901760
    %943 = vmatprep.subr.mxu0 %v942
    %v944 = vand.u32 %v96, 4294901760
    %945 = vmatpush1.msra.mxu0 %v944
    %v946 = vand.u32 %v100, 4294901760
    %947 = vmatprep.subr.mxu0 %v946
    %v948 = vand.u32 %v99, 4294901760
    %949 = vmatpush1.msra.mxu0 %v948
    %v950 = vand.u32 %v103, 4294901760
    %951 = vmatprep.subr.mxu0 %v950
    %v952 = vand.u32 %v102, 4294901760
    %953 = vmatpush1.msra.mxu0 %v952
    %v954 = vand.u32 %v106, 4294901760
    %955 = vmatprep.subr.mxu0 %v954
    %v956 = vand.u32 %v105, 4294901760
    %957 = vmatpush1.msra.mxu0 %v956
    %v958 = vand.u32 %v109, 4294901760
    %959 = vmatprep.subr.mxu0 %v958
    %v960 = vand.u32 %v108, 4294901760
    %961 = vmatpush1.msra.mxu0 %v960
    %v962 = vand.u32 %v112, 4294901760
    %963 = vmatprep.subr.mxu0 %v962
    %v964 = vand.u32 %v111, 4294901760
    %965 = vmatpush1.msra.mxu0 %v964
    %v966 = vand.u32 %v115, 4294901760
    %967 = vmatprep.subr.mxu0 %v966
    %v968 = vand.u32 %v114, 4294901760
    %969 = vmatpush1.msra.mxu0 %v968
    %v970 = vand.u32 %v118, 4294901760
    %971 = vmatprep.subr.mxu0 %v970
    %v972 = vand.u32 %v117, 4294901760
    %973 = vmatpush1.msra.mxu0 %v972
    %v974 = vand.u32 %v121, 4294901760
    %975 = vmatprep.subr.mxu0 %v974
    %v976 = vand.u32 %v120, 4294901760
    %977 = vmatpush1.msra.mxu0 %v976
    %v978 = vand.u32 %v124, 4294901760
    %979 = vmatprep.subr.mxu0 %v978
    %v980 = vand.u32 %v123, 4294901760
    %981 = vmatpush1.msra.mxu0 %v980
    %v982 = vand.u32 %v127, 4294901760
    %983 = vmatprep.subr.mxu0 %v982
    %v984 = vand.u32 %v126, 4294901760
    %985 = vmatpush1.msra.mxu0 %v984
    %986 = vmatprep.subr.mxu0 0.0
    %987 = vmatpush1.msra.mxu0 0.0
    %988 = vmatprep.subr.mxu0 0.0
    %989 = vmatpush1.msra.mxu0 0.0
    %990 = vmatprep.subr.mxu0 0.0
    %991 = vmatpush1.msra.mxu0 0.0
    %992 = vmatprep.subr.mxu0 0.0
    %993 = vmatpush1.msra.mxu0 0.0
    %994 = vmatprep.subr.mxu0 0.0
    %995 = vmatpush1.msra.mxu0 0.0
    %996 = vmatprep.subr.mxu0 0.0
    %997 = vmatpush1.msra.mxu0 0.0
    %998 = vmatprep.subr.mxu0 0.0
    %999 = vmatpush1.msra.mxu0 0.0
    %1000 = vmatprep.subr.mxu0 0.0
    %1001 = vmatpush1.msra.mxu0 0.0
    %1002 = vmatprep.subr.mxu0 0.0
    %1003 = vmatpush1.msra.mxu0 0.0
    %1004 = vmatprep.subr.mxu0 0.0
    %1005 = vmatpush1.msra.mxu0 0.0
    %1006 = vmatprep.subr.mxu0 0.0
    %1007 = vmatpush1.msra.mxu0 0.0
    %1008 = vmatprep.subr.mxu0 0.0
    %1009 = vmatpush1.msra.mxu0 0.0
    %1010 = vmatprep.subr.mxu0 0.0
    %1011 = vmatpush1.msra.mxu0 0.0
    %1012 = vmatprep.subr.mxu0 0.0
    %1013 = vmatpush1.msra.mxu0 0.0
    %1014 = vmatprep.subr.mxu0 0.0
    %1015 = vmatpush1.msra.mxu0 0.0
    %1016 = vmatprep.subr.mxu0 0.0
    %1017 = vmatpush1.msra.mxu0 0.0
    %1018 = vmatprep.mubr.f32.mxu0 0.0
    %v1019 = vand.u32 %v79, 4294901760
    %1020 = vmatmul.mubr.f32.gmra.mrb[0].mxu0 %v1019
    %v1021 = vpop.f32.mrb[0].mxu0
    %v1022 = vadd.f32 %v911, %v1021
    %v1023 = vpop.f32.mrb[0].mxu0
    %v1024 = vadd.f32 %v913, %v1023
    %1025 = vmatprep.mubr.f32.mxu0 0.0
    %v1026 = vand.u32 %v80, 4294901760
    %1027 = vmatmul.mubr.f32.gmra.mrb[0].mxu0 %v1026
    %v1028 = vpop.f32.mrb[0].mxu0
    %v1029 = vadd.f32 %v918, %v1028
    %v1030 = vpop.f32.mrb[0].mxu0
    %v1031 = vadd.f32 %v920, %v1030
    %1032 = vdwg.mxu0
    %1033 = vmatprep.subr.mxu0 0.0
    %v1034 = vand.u32 %v83, 4294901760
    %1035 = vmatpush1.msra.mxu0 %v1034
    %1036 = vmatprep.subr.mxu0 0.0
    %v1037 = vand.u32 %v86, 4294901760
    %1038 = vmatpush1.msra.mxu0 %v1037
    %1039 = vmatprep.subr.mxu0 0.0
    %v1040 = vand.u32 %v89, 4294901760
    %1041 = vmatpush1.msra.mxu0 %v1040
    %1042 = vmatprep.subr.mxu0 0.0
    %v1043 = vand.u32 %v92, 4294901760
    %1044 = vmatpush1.msra.mxu0 %v1043
    %1045 = vmatprep.subr.mxu0 0.0
    %v1046 = vand.u32 %v95, 4294901760
    %1047 = vmatpush1.msra.mxu0 %v1046
    %1048 = vmatprep.subr.mxu0 0.0
    %v1049 = vand.u32 %v98, 4294901760
    %1050 = vmatpush1.msra.mxu0 %v1049
    %1051 = vmatprep.subr.mxu0 0.0
    %v1052 = vand.u32 %v101, 4294901760
    %1053 = vmatpush1.msra.mxu0 %v1052
    %1054 = vmatprep.subr.mxu0 0.0
    %v1055 = vand.u32 %v104, 4294901760
    %1056 = vmatpush1.msra.mxu0 %v1055
    %1057 = vmatprep.subr.mxu0 0.0
    %v1058 = vand.u32 %v107, 4294901760
    %1059 = vmatpush1.msra.mxu0 %v1058
    %1060 = vmatprep.subr.mxu0 0.0
    %v1061 = vand.u32 %v110, 4294901760
    %1062 = vmatpush1.msra.mxu0 %v1061
    %1063 = vmatprep.subr.mxu0 0.0
    %v1064 = vand.u32 %v113, 4294901760
    %1065 = vmatpush1.msra.mxu0 %v1064
    %1066 = vmatprep.subr.mxu0 0.0
    %v1067 = vand.u32 %v116, 4294901760
    %1068 = vmatpush1.msra.mxu0 %v1067
    %1069 = vmatprep.subr.mxu0 0.0
    %v1070 = vand.u32 %v119, 4294901760
    %1071 = vmatpush1.msra.mxu0 %v1070
    %1072 = vmatprep.subr.mxu0 0.0
    %v1073 = vand.u32 %v122, 4294901760
    %1074 = vmatpush1.msra.mxu0 %v1073
    %1075 = vmatprep.subr.mxu0 0.0
    %v1076 = vand.u32 %v125, 4294901760
    %1077 = vmatpush1.msra.mxu0 %v1076
    %1078 = vmatprep.subr.mxu0 0.0
    %v1079 = vand.u32 %v128, 4294901760
    %1080 = vmatpush1.msra.mxu0 %v1079
    %1081 = vmatprep.subr.mxu0 0.0
    %1082 = vmatpush1.msra.mxu0 0.0
    %1083 = vmatprep.subr.mxu0 0.0
    %1084 = vmatpush1.msra.mxu0 0.0
    %1085 = vmatprep.subr.mxu0 0.0
    %1086 = vmatpush1.msra.mxu0 0.0
    %1087 = vmatprep.subr.mxu0 0.0
    %1088 = vmatpush1.msra.mxu0 0.0
    %1089 = vmatprep.subr.mxu0 0.0
    %1090 = vmatpush1.msra.mxu0 0.0
    %1091 = vmatprep.subr.mxu0 0.0
    %1092 = vmatpush1.msra.mxu0 0.0
    %1093 = vmatprep.subr.mxu0 0.0
    %1094 = vmatpush1.msra.mxu0 0.0
    %1095 = vmatprep.subr.mxu0 0.0
    %1096 = vmatpush1.msra.mxu0 0.0
    %1097 = vmatprep.subr.mxu0 0.0
    %1098 = vmatpush1.msra.mxu0 0.0
    %1099 = vmatprep.subr.mxu0 0.0
    %1100 = vmatpush1.msra.mxu0 0.0
    %1101 = vmatprep.subr.mxu0 0.0
    %1102 = vmatpush1.msra.mxu0 0.0
    %1103 = vmatprep.subr.mxu0 0.0
    %1104 = vmatpush1.msra.mxu0 0.0
    %1105 = vmatprep.subr.mxu0 0.0
    %1106 = vmatpush1.msra.mxu0 0.0
    %1107 = vmatprep.subr.mxu0 0.0
    %1108 = vmatpush1.msra.mxu0 0.0
    %1109 = vmatprep.subr.mxu0 0.0
    %1110 = vmatpush1.msra.mxu0 0.0
    %1111 = vmatprep.subr.mxu0 0.0
    %1112 = vmatpush1.msra.mxu0 0.0
    %1113 = vmatprep.mubr.f32.mxu0 0.0
    %v1114 = vand.u32 %v79, 4294901760
    %v1115 = vsub.f32 %v79, %v1114
    %v1116 = vand.u32 %v1115, 4294901760
    %v1117 = vsub.f32 %v1115, %v1116
    %v1118 = vand.u32 %v1117, 4294901760
    %1119 = vmatmul.mubr.f32.gmra.mrb[0].mxu0 %v1118
    %v1120 = vpop.f32.mrb[0].mxu0
    %v1121 = vadd.f32 0.0, %v1120
    %v1122 = vpop.f32.mrb[0].mxu0
    %1123 = vmatprep.mubr.f32.mxu0 0.0
    %v1124 = vand.u32 %v80, 4294901760
    %v1125 = vsub.f32 %v80, %v1124
    %v1126 = vand.u32 %v1125, 4294901760
    %v1127 = vsub.f32 %v1125, %v1126
    %v1128 = vand.u32 %v1127, 4294901760
    %1129 = vmatmul.mubr.f32.gmra.mrb[0].mxu0 %v1128
    %v1130 = vpop.f32.mrb[0].mxu0
    %v1131 = vadd.f32 0.0, %v1130
    %v1132 = vpop.f32.mrb[0].mxu0
    %1133 = vdwg.mxu0
    %1134 = vmatprep.subr.mxu0 0.0
    %v1135 = vand.u32 %v83, 4294901760
    %v1136 = vsub.f32 %v83, %v1135
    %v1137 = vand.u32 %v1136, 4294901760
    %v1138 = vsub.f32 %v1136, %v1137
    %v1139 = vand.u32 %v1138, 4294901760
    %1140 = vmatpush1.msra.mxu0 %v1139
    %1141 = vmatprep.subr.mxu0 0.0
    %v1142 = vand.u32 %v86, 4294901760
    %v1143 = vsub.f32 %v86, %v1142
    %v1144 = vand.u32 %v1143, 4294901760
    %v1145 = vsub.f32 %v1143, %v1144
    %v1146 = vand.u32 %v1145, 4294901760
    %1147 = vmatpush1.msra.mxu0 %v1146
    %1148 = vmatprep.subr.mxu0 0.0
    %v1149 = vand.u32 %v89, 4294901760
    %v1150 = vsub.f32 %v89, %v1149
    %v1151 = vand.u32 %v1150, 4294901760
    %v1152 = vsub.f32 %v1150, %v1151
    %v1153 = vand.u32 %v1152, 4294901760
    %1154 = vmatpush1.msra.mxu0 %v1153
    %1155 = vmatprep.subr.mxu0 0.0
    %v1156 = vand.u32 %v92, 4294901760
    %v1157 = vsub.f32 %v92, %v1156
    %v1158 = vand.u32 %v1157, 4294901760
    %v1159 = vsub.f32 %v1157, %v1158
    %v1160 = vand.u32 %v1159, 4294901760
    %1161 = vmatpush1.msra.mxu0 %v1160
    %1162 = vmatprep.subr.mxu0 0.0
    %v1163 = vand.u32 %v95, 4294901760
    %v1164 = vsub.f32 %v95, %v1163
    %v1165 = vand.u32 %v1164, 4294901760
    %v1166 = vsub.f32 %v1164, %v1165
    %v1167 = vand.u32 %v1166, 4294901760
    %1168 = vmatpush1.msra.mxu0 %v1167
    %1169 = vmatprep.subr.mxu0 0.0
    %v1170 = vand.u32 %v98, 4294901760
    %v1171 = vsub.f32 %v98, %v1170
    %v1172 = vand.u32 %v1171, 4294901760
    %v1173 = vsub.f32 %v1171, %v1172
    %v1174 = vand.u32 %v1173, 4294901760
    %1175 = vmatpush1.msra.mxu0 %v1174
    %1176 = vmatprep.subr.mxu0 0.0
    %v1177 = vand.u32 %v101, 4294901760
    %v1178 = vsub.f32 %v101, %v1177
    %v1179 = vand.u32 %v1178, 4294901760
    %v1180 = vsub.f32 %v1178, %v1179
    %v1181 = vand.u32 %v1180, 4294901760
    %1182 = vmatpush1.msra.mxu0 %v1181
    %1183 = vmatprep.subr.mxu0 0.0
    %v1184 = vand.u32 %v104, 4294901760
    %v1185 = vsub.f32 %v104, %v1184
    %v1186 = vand.u32 %v1185, 4294901760
    %v1187 = vsub.f32 %v1185, %v1186
    %v1188 = vand.u32 %v1187, 4294901760
    %1189 = vmatpush1.msra.mxu0 %v1188
    %1190 = vmatprep.subr.mxu0 0.0
    %v1191 = vand.u32 %v107, 4294901760
    %v1192 = vsub.f32 %v107, %v1191
    %v1193 = vand.u32 %v1192, 4294901760
    %v1194 = vsub.f32 %v1192, %v1193
    %v1195 = vand.u32 %v1194, 4294901760
    %1196 = vmatpush1.msra.mxu0 %v1195
    %1197 = vmatprep.subr.mxu0 0.0
    %v1198 = vand.u32 %v110, 4294901760
    %v1199 = vsub.f32 %v110, %v1198
    %v1200 = vand.u32 %v1199, 4294901760
    %v1201 = vsub.f32 %v1199, %v1200
    %v1202 = vand.u32 %v1201, 4294901760
    %1203 = vmatpush1.msra.mxu0 %v1202
    %1204 = vmatprep.subr.mxu0 0.0
    %v1205 = vand.u32 %v113, 4294901760
    %v1206 = vsub.f32 %v113, %v1205
    %v1207 = vand.u32 %v1206, 4294901760
    %v1208 = vsub.f32 %v1206, %v1207
    %v1209 = vand.u32 %v1208, 4294901760
    %1210 = vmatpush1.msra.mxu0 %v1209
    %1211 = vmatprep.subr.mxu0 0.0
    %v1212 = vand.u32 %v116, 4294901760
    %v1213 = vsub.f32 %v116, %v1212
    %v1214 = vand.u32 %v1213, 4294901760
    %v1215 = vsub.f32 %v1213, %v1214
    %v1216 = vand.u32 %v1215, 4294901760
    %1217 = vmatpush1.msra.mxu0 %v1216
    %1218 = vmatprep.subr.mxu0 0.0
    %v1219 = vand.u32 %v119, 4294901760
    %v1220 = vsub.f32 %v119, %v1219
    %v1221 = vand.u32 %v1220, 4294901760
    %v1222 = vsub.f32 %v1220, %v1221
    %v1223 = vand.u32 %v1222, 4294901760
    %1224 = vmatpush1.msra.mxu0 %v1223
    %1225 = vmatprep.subr.mxu0 0.0
    %v1226 = vand.u32 %v122, 4294901760
    %v1227 = vsub.f32 %v122, %v1226
    %v1228 = vand.u32 %v1227, 4294901760
    %v1229 = vsub.f32 %v1227, %v1228
    %v1230 = vand.u32 %v1229, 4294901760
    %1231 = vmatpush1.msra.mxu0 %v1230
    %1232 = vmatprep.subr.mxu0 0.0
    %v1233 = vand.u32 %v125, 4294901760
    %v1234 = vsub.f32 %v125, %v1233
    %v1235 = vand.u32 %v1234, 4294901760
    %v1236 = vsub.f32 %v1234, %v1235
    %v1237 = vand.u32 %v1236, 4294901760
    %1238 = vmatpush1.msra.mxu0 %v1237
    %1239 = vmatprep.subr.mxu0 0.0
    %v1240 = vand.u32 %v128, 4294901760
    %v1241 = vsub.f32 %v128, %v1240
    %v1242 = vand.u32 %v1241, 4294901760
    %v1243 = vsub.f32 %v1241, %v1242
    %v1244 = vand.u32 %v1243, 4294901760
    %1245 = vmatpush1.msra.mxu0 %v1244
    %1246 = vmatprep.subr.mxu0 0.0
    %1247 = vmatpush1.msra.mxu0 0.0
    %1248 = vmatprep.subr.mxu0 0.0
    %1249 = vmatpush1.msra.mxu0 0.0
    %1250 = vmatprep.subr.mxu0 0.0
    %1251 = vmatpush1.msra.mxu0 0.0
    %1252 = vmatprep.subr.mxu0 0.0
    %1253 = vmatpush1.msra.mxu0 0.0
    %1254 = vmatprep.subr.mxu0 0.0
    %1255 = vmatpush1.msra.mxu0 0.0
    %1256 = vmatprep.subr.mxu0 0.0
    %1257 = vmatpush1.msra.mxu0 0.0
    %1258 = vmatprep.subr.mxu0 0.0
    %1259 = vmatpush1.msra.mxu0 0.0
    %1260 = vmatprep.subr.mxu0 0.0
    %1261 = vmatpush1.msra.mxu0 0.0
    %1262 = vmatprep.subr.mxu0 0.0
    %1263 = vmatpush1.msra.mxu0 0.0
    %1264 = vmatprep.subr.mxu0 0.0
    %1265 = vmatpush1.msra.mxu0 0.0
    %1266 = vmatprep.subr.mxu0 0.0
    %1267 = vmatpush1.msra.mxu0 0.0
    %1268 = vmatprep.subr.mxu0 0.0
    %1269 = vmatpush1.msra.mxu0 0.0
    %1270 = vmatprep.subr.mxu0 0.0
    %1271 = vmatpush1.msra.mxu0 0.0
    %1272 = vmatprep.subr.mxu0 0.0
    %1273 = vmatpush1.msra.mxu0 0.0
    %1274 = vmatprep.subr.mxu0 0.0
    %1275 = vmatpush1.msra.mxu0 0.0
    %1276 = vmatprep.subr.mxu0 0.0
    %1277 = vmatpush1.msra.mxu0 0.0
    %1278 = vmatprep.mubr.f32.mxu0 0.0
    %v1279 = vand.u32 %v79, 4294901760
    %1280 = vmatmul.mubr.f32.gmra.mrb[0].mxu0 %v1279
    %v1281 = vpop.f32.mrb[0].mxu0
    %v1282 = vadd.f32 %v1121, %v1281
    %v1283 = vpop.f32.mrb[0].mxu0
    %1284 = vmatprep.mubr.f32.mxu0 0.0
    %v1285 = vand.u32 %v80, 4294901760
    %1286 = vmatmul.mubr.f32.gmra.mrb[0].mxu0 %v1285
    %v1287 = vpop.f32.mrb[0].mxu0
    %v1288 = vadd.f32 %v1131, %v1287
    %v1289 = vpop.f32.mrb[0].mxu0
    %1290 = vdwg.mxu0
    %1291 = vmatprep.subr.mxu0 0.0
    %v1292 = vand.u32 %v83, 4294901760
    %v1293 = vsub.f32 %v83, %v1292
    %1294 = vmatpush1.msra.mxu0 %v1293
    %1295 = vmatprep.subr.mxu0 0.0
    %v1296 = vand.u32 %v86, 4294901760
    %v1297 = vsub.f32 %v86, %v1296
    %1298 = vmatpush1.msra.mxu0 %v1297
    %1299 = vmatprep.subr.mxu0 0.0
    %v1300 = vand.u32 %v89, 4294901760
    %v1301 = vsub.f32 %v89, %v1300
    %1302 = vmatpush1.msra.mxu0 %v1301
    %1303 = vmatprep.subr.mxu0 0.0
    %v1304 = vand.u32 %v92, 4294901760
    %v1305 = vsub.f32 %v92, %v1304
    %1306 = vmatpush1.msra.mxu0 %v1305
    %1307 = vmatprep.subr.mxu0 0.0
    %v1308 = vand.u32 %v95, 4294901760
    %v1309 = vsub.f32 %v95, %v1308
    %1310 = vmatpush1.msra.mxu0 %v1309
    %1311 = vmatprep.subr.mxu0 0.0
    %v1312 = vand.u32 %v98, 4294901760
    %v1313 = vsub.f32 %v98, %v1312
    %1314 = vmatpush1.msra.mxu0 %v1313
    %1315 = vmatprep.subr.mxu0 0.0
    %v1316 = vand.u32 %v101, 4294901760
    %v1317 = vsub.f32 %v101, %v1316
    %1318 = vmatpush1.msra.mxu0 %v1317
    %1319 = vmatprep.subr.mxu0 0.0
    %v1320 = vand.u32 %v104, 4294901760
    %v1321 = vsub.f32 %v104, %v1320
    %1322 = vmatpush1.msra.mxu0 %v1321
    %1323 = vmatprep.subr.mxu0 0.0
    %v1324 = vand.u32 %v107, 4294901760
    %v1325 = vsub.f32 %v107, %v1324
    %1326 = vmatpush1.msra.mxu0 %v1325
    %1327 = vmatprep.subr.mxu0 0.0
    %v1328 = vand.u32 %v110, 4294901760
    %v1329 = vsub.f32 %v110, %v1328
    %1330 = vmatpush1.msra.mxu0 %v1329
    %1331 = vmatprep.subr.mxu0 0.0
    %v1332 = vand.u32 %v113, 4294901760
    %v1333 = vsub.f32 %v113, %v1332
    %1334 = vmatpush1.msra.mxu0 %v1333
    %1335 = vmatprep.subr.mxu0 0.0
    %v1336 = vand.u32 %v116, 4294901760
    %v1337 = vsub.f32 %v116, %v1336
    %1338 = vmatpush1.msra.mxu0 %v1337
    %1339 = vmatprep.subr.mxu0 0.0
    %v1340 = vand.u32 %v119, 4294901760
    %v1341 = vsub.f32 %v119, %v1340
    %1342 = vmatpush1.msra.mxu0 %v1341
    %1343 = vmatprep.subr.mxu0 0.0
    %v1344 = vand.u32 %v122, 4294901760
    %v1345 = vsub.f32 %v122, %v1344
    %1346 = vmatpush1.msra.mxu0 %v1345
    %1347 = vmatprep.subr.mxu0 0.0
    %v1348 = vand.u32 %v125, 4294901760
    %v1349 = vsub.f32 %v125, %v1348
    %1350 = vmatpush1.msra.mxu0 %v1349
    %1351 = vmatprep.subr.mxu0 0.0
    %v1352 = vand.u32 %v128, 4294901760
    %v1353 = vsub.f32 %v128, %v1352
    %1354 = vmatpush1.msra.mxu0 %v1353
    %1355 = vmatprep.subr.mxu0 0.0
    %1356 = vmatpush1.msra.mxu0 0.0
    %1357 = vmatprep.subr.mxu0 0.0
    %1358 = vmatpush1.msra.mxu0 0.0
    %1359 = vmatprep.subr.mxu0 0.0
    %1360 = vmatpush1.msra.mxu0 0.0
    %1361 = vmatprep.subr.mxu0 0.0
    %1362 = vmatpush1.msra.mxu0 0.0
    %1363 = vmatprep.subr.mxu0 0.0
    %1364 = vmatpush1.msra.mxu0 0.0
    %1365 = vmatprep.subr.mxu0 0.0
    %1366 = vmatpush1.msra.mxu0 0.0
    %1367 = vmatprep.subr.mxu0 0.0
    %1368 = vmatpush1.msra.mxu0 0.0
    %1369 = vmatprep.subr.mxu0 0.0
    %1370 = vmatpush1.msra.mxu0 0.0
    %1371 = vmatprep.subr.mxu0 0.0
    %1372 = vmatpush1.msra.mxu0 0.0
    %1373 = vmatprep.subr.mxu0 0.0
    %1374 = vmatpush1.msra.mxu0 0.0
    %1375 = vmatprep.subr.mxu0 0.0
    %1376 = vmatpush1.msra.mxu0 0.0
    %1377 = vmatprep.subr.mxu0 0.0
    %1378 = vmatpush1.msra.mxu0 0.0
    %1379 = vmatprep.subr.mxu0 0.0
    %1380 = vmatpush1.msra.mxu0 0.0
    %1381 = vmatprep.subr.mxu0 0.0
    %1382 = vmatpush1.msra.mxu0 0.0
    %1383 = vmatprep.subr.mxu0 0.0
    %1384 = vmatpush1.msra.mxu0 0.0
    %1385 = vmatprep.subr.mxu0 0.0
    %1386 = vmatpush1.msra.mxu0 0.0
    %1387 = vmatprep.mubr.f32.mxu0 0.0
    %v1388 = vand.u32 %v79, 4294901760
    %v1389 = vsub.f32 %v79, %v1388
    %1390 = vmatmul.mubr.f32.gmra.mrb[0].mxu0 %v1389
    %v1391 = vpop.f32.mrb[0].mxu0
    %v1392 = vadd.f32 %v1282, %v1391
    %v1393 = vpop.f32.mrb[0].mxu0
    %1394 = vmatprep.mubr.f32.mxu0 0.0
    %v1395 = vand.u32 %v80, 4294901760
    %v1396 = vsub.f32 %v80, %v1395
    %1397 = vmatmul.mubr.f32.gmra.mrb[0].mxu0 %v1396
    %v1398 = vpop.f32.mrb[0].mxu0
    %v1399 = vadd.f32 %v1288, %v1398
    %v1400 = vpop.f32.mrb[0].mxu0
    %1401 = vdwg.mxu0
    %1402 = vmatprep.subr.mxu0 0.0
    %v1403 = vand.u32 %v83, 4294901760
    %1404 = vmatpush1.msra.mxu0 %v1403
    %1405 = vmatprep.subr.mxu0 0.0
    %v1406 = vand.u32 %v86, 4294901760
    %1407 = vmatpush1.msra.mxu0 %v1406
    %1408 = vmatprep.subr.mxu0 0.0
    %v1409 = vand.u32 %v89, 4294901760
    %1410 = vmatpush1.msra.mxu0 %v1409
    %1411 = vmatprep.subr.mxu0 0.0
    %v1412 = vand.u32 %v92, 4294901760
    %1413 = vmatpush1.msra.mxu0 %v1412
    %1414 = vmatprep.subr.mxu0 0.0
    %v1415 = vand.u32 %v95, 4294901760
    %1416 = vmatpush1.msra.mxu0 %v1415
    %1417 = vmatprep.subr.mxu0 0.0
    %v1418 = vand.u32 %v98, 4294901760
    %1419 = vmatpush1.msra.mxu0 %v1418
    %1420 = vmatprep.subr.mxu0 0.0
    %v1421 = vand.u32 %v101, 4294901760
    %1422 = vmatpush1.msra.mxu0 %v1421
    %1423 = vmatprep.subr.mxu0 0.0
    %v1424 = vand.u32 %v104, 4294901760
    %1425 = vmatpush1.msra.mxu0 %v1424
    %1426 = vmatprep.subr.mxu0 0.0
    %v1427 = vand.u32 %v107, 4294901760
    %1428 = vmatpush1.msra.mxu0 %v1427
    %1429 = vmatprep.subr.mxu0 0.0
    %v1430 = vand.u32 %v110, 4294901760
    %1431 = vmatpush1.msra.mxu0 %v1430
    %1432 = vmatprep.subr.mxu0 0.0
    %v1433 = vand.u32 %v113, 4294901760
    %1434 = vmatpush1.msra.mxu0 %v1433
    %1435 = vmatprep.subr.mxu0 0.0
    %v1436 = vand.u32 %v116, 4294901760
    %1437 = vmatpush1.msra.mxu0 %v1436
    %1438 = vmatprep.subr.mxu0 0.0
    %v1439 = vand.u32 %v119, 4294901760
    %1440 = vmatpush1.msra.mxu0 %v1439
    %1441 = vmatprep.subr.mxu0 0.0
    %v1442 = vand.u32 %v122, 4294901760
    %1443 = vmatpush1.msra.mxu0 %v1442
    %1444 = vmatprep.subr.mxu0 0.0
    %v1445 = vand.u32 %v125, 4294901760
    %1446 = vmatpush1.msra.mxu0 %v1445
    %1447 = vmatprep.subr.mxu0 0.0
    %v1448 = vand.u32 %v128, 4294901760
    %1449 = vmatpush1.msra.mxu0 %v1448
    %1450 = vmatprep.subr.mxu0 0.0
    %1451 = vmatpush1.msra.mxu0 0.0
    %1452 = vmatprep.subr.mxu0 0.0
    %1453 = vmatpush1.msra.mxu0 0.0
    %1454 = vmatprep.subr.mxu0 0.0
    %1455 = vmatpush1.msra.mxu0 0.0
    %1456 = vmatprep.subr.mxu0 0.0
    %1457 = vmatpush1.msra.mxu0 0.0
    %1458 = vmatprep.subr.mxu0 0.0
    %1459 = vmatpush1.msra.mxu0 0.0
    %1460 = vmatprep.subr.mxu0 0.0
    %1461 = vmatpush1.msra.mxu0 0.0
    %1462 = vmatprep.subr.mxu0 0.0
    %1463 = vmatpush1.msra.mxu0 0.0
    %1464 = vmatprep.subr.mxu0 0.0
    %1465 = vmatpush1.msra.mxu0 0.0
    %1466 = vmatprep.subr.mxu0 0.0
    %1467 = vmatpush1.msra.mxu0 0.0
    %1468 = vmatprep.subr.mxu0 0.0
    %1469 = vmatpush1.msra.mxu0 0.0
    %1470 = vmatprep.subr.mxu0 0.0
    %1471 = vmatpush1.msra.mxu0 0.0
    %1472 = vmatprep.subr.mxu0 0.0
    %1473 = vmatpush1.msra.mxu0 0.0
    %1474 = vmatprep.subr.mxu0 0.0
    %1475 = vmatpush1.msra.mxu0 0.0
    %1476 = vmatprep.subr.mxu0 0.0
    %1477 = vmatpush1.msra.mxu0 0.0
    %1478 = vmatprep.subr.mxu0 0.0
    %1479 = vmatpush1.msra.mxu0 0.0
    %1480 = vmatprep.subr.mxu0 0.0
    %1481 = vmatpush1.msra.mxu0 0.0
    %1482 = vmatprep.mubr.f32.mxu0 0.0
    %v1483 = vand.u32 %v79, 4294901760
    %v1484 = vsub.f32 %v79, %v1483
    %v1485 = vand.u32 %v1484, 4294901760
    %1486 = vmatmul.mubr.f32.gmra.mrb[0].mxu0 %v1485
    %v1487 = vpop.f32.mrb[0].mxu0
    %v1488 = vadd.f32 %v1392, %v1487
    %v1489 = vpop.f32.mrb[0].mxu0
    %1490 = vmatprep.mubr.f32.mxu0 0.0
    %v1491 = vand.u32 %v80, 4294901760
    %v1492 = vsub.f32 %v80, %v1491
    %v1493 = vand.u32 %v1492, 4294901760
    %1494 = vmatmul.mubr.f32.gmra.mrb[0].mxu0 %v1493
    %v1495 = vpop.f32.mrb[0].mxu0
    %v1496 = vadd.f32 %v1399, %v1495
    %v1497 = vpop.f32.mrb[0].mxu0
    %1498 = vdwg.mxu0
    %1499 = vmatprep.subr.mxu0 0.0
    %v1500 = vand.u32 %v83, 4294901760
    %v1501 = vsub.f32 %v83, %v1500
    %v1502 = vand.u32 %v1501, 4294901760
    %1503 = vmatpush1.msra.mxu0 %v1502
    %1504 = vmatprep.subr.mxu0 0.0
    %v1505 = vand.u32 %v86, 4294901760
    %v1506 = vsub.f32 %v86, %v1505
    %v1507 = vand.u32 %v1506, 4294901760
    %1508 = vmatpush1.msra.mxu0 %v1507
    %1509 = vmatprep.subr.mxu0 0.0
    %v1510 = vand.u32 %v89, 4294901760
    %v1511 = vsub.f32 %v89, %v1510
    %v1512 = vand.u32 %v1511, 4294901760
    %1513 = vmatpush1.msra.mxu0 %v1512
    %1514 = vmatprep.subr.mxu0 0.0
    %v1515 = vand.u32 %v92, 4294901760
    %v1516 = vsub.f32 %v92, %v1515
    %v1517 = vand.u32 %v1516, 4294901760
    %1518 = vmatpush1.msra.mxu0 %v1517
    %1519 = vmatprep.subr.mxu0 0.0
    %v1520 = vand.u32 %v95, 4294901760
    %v1521 = vsub.f32 %v95, %v1520
    %v1522 = vand.u32 %v1521, 4294901760
    %1523 = vmatpush1.msra.mxu0 %v1522
    %1524 = vmatprep.subr.mxu0 0.0
    %v1525 = vand.u32 %v98, 4294901760
    %v1526 = vsub.f32 %v98, %v1525
    %v1527 = vand.u32 %v1526, 4294901760
    %1528 = vmatpush1.msra.mxu0 %v1527
    %1529 = vmatprep.subr.mxu0 0.0
    %v1530 = vand.u32 %v101, 4294901760
    %v1531 = vsub.f32 %v101, %v1530
    %v1532 = vand.u32 %v1531, 4294901760
    %1533 = vmatpush1.msra.mxu0 %v1532
    %1534 = vmatprep.subr.mxu0 0.0
    %v1535 = vand.u32 %v104, 4294901760
    %v1536 = vsub.f32 %v104, %v1535
    %v1537 = vand.u32 %v1536, 4294901760
    %1538 = vmatpush1.msra.mxu0 %v1537
    %1539 = vmatprep.subr.mxu0 0.0
    %v1540 = vand.u32 %v107, 4294901760
    %v1541 = vsub.f32 %v107, %v1540
    %v1542 = vand.u32 %v1541, 4294901760
    %1543 = vmatpush1.msra.mxu0 %v1542
    %1544 = vmatprep.subr.mxu0 0.0
    %v1545 = vand.u32 %v110, 4294901760
    %v1546 = vsub.f32 %v110, %v1545
    %v1547 = vand.u32 %v1546, 4294901760
    %1548 = vmatpush1.msra.mxu0 %v1547
    %1549 = vmatprep.subr.mxu0 0.0
    %v1550 = vand.u32 %v113, 4294901760
    %v1551 = vsub.f32 %v113, %v1550
    %v1552 = vand.u32 %v1551, 4294901760
    %1553 = vmatpush1.msra.mxu0 %v1552
    %1554 = vmatprep.subr.mxu0 0.0
    %v1555 = vand.u32 %v116, 4294901760
    %v1556 = vsub.f32 %v116, %v1555
    %v1557 = vand.u32 %v1556, 4294901760
    %1558 = vmatpush1.msra.mxu0 %v1557
    %1559 = vmatprep.subr.mxu0 0.0
    %v1560 = vand.u32 %v119, 4294901760
    %v1561 = vsub.f32 %v119, %v1560
    %v1562 = vand.u32 %v1561, 4294901760
    %1563 = vmatpush1.msra.mxu0 %v1562
    %1564 = vmatprep.subr.mxu0 0.0
    %v1565 = vand.u32 %v122, 4294901760
    %v1566 = vsub.f32 %v122, %v1565
    %v1567 = vand.u32 %v1566, 4294901760
    %1568 = vmatpush1.msra.mxu0 %v1567
    %1569 = vmatprep.subr.mxu0 0.0
    %v1570 = vand.u32 %v125, 4294901760
    %v1571 = vsub.f32 %v125, %v1570
    %v1572 = vand.u32 %v1571, 4294901760
    %1573 = vmatpush1.msra.mxu0 %v1572
    %1574 = vmatprep.subr.mxu0 0.0
    %v1575 = vand.u32 %v128, 4294901760
    %v1576 = vsub.f32 %v128, %v1575
    %v1577 = vand.u32 %v1576, 4294901760
    %1578 = vmatpush1.msra.mxu0 %v1577
    %1579 = vmatprep.subr.mxu0 0.0
    %1580 = vmatpush1.msra.mxu0 0.0
    %1581 = vmatprep.subr.mxu0 0.0
    %1582 = vmatpush1.msra.mxu0 0.0
    %1583 = vmatprep.subr.mxu0 0.0
    %1584 = vmatpush1.msra.mxu0 0.0
    %1585 = vmatprep.subr.mxu0 0.0
    %1586 = vmatpush1.msra.mxu0 0.0
    %1587 = vmatprep.subr.mxu0 0.0
    %1588 = vmatpush1.msra.mxu0 0.0
    %1589 = vmatprep.subr.mxu0 0.0
    %1590 = vmatpush1.msra.mxu0 0.0
    %1591 = vmatprep.subr.mxu0 0.0
    %1592 = vmatpush1.msra.mxu0 0.0
    %1593 = vmatprep.subr.mxu0 0.0
    %1594 = vmatpush1.msra.mxu0 0.0
    %1595 = vmatprep.subr.mxu0 0.0
    %1596 = vmatpush1.msra.mxu0 0.0
    %1597 = vmatprep.subr.mxu0 0.0
    %1598 = vmatpush1.msra.mxu0 0.0
    %1599 = vmatprep.subr.mxu0 0.0
    %1600 = vmatpush1.msra.mxu0 0.0
    %1601 = vmatprep.subr.mxu0 0.0
    %1602 = vmatpush1.msra.mxu0 0.0
    %1603 = vmatprep.subr.mxu0 0.0
    %1604 = vmatpush1.msra.mxu0 0.0
    %1605 = vmatprep.subr.mxu0 0.0
    %1606 = vmatpush1.msra.mxu0 0.0
    %1607 = vmatprep.subr.mxu0 0.0
    %1608 = vmatpush1.msra.mxu0 0.0
    %1609 = vmatprep.subr.mxu0 0.0
    %1610 = vmatpush1.msra.mxu0 0.0
    %1611 = vmatprep.mubr.f32.mxu0 0.0
    %v1612 = vand.u32 %v79, 4294901760
    %1613 = vmatmul.mubr.f32.gmra.mrb[0].mxu0 %v1612
    %v1614 = vpop.f32.mrb[0].mxu0
    %v1615 = vadd.f32 %v1488, %v1614
    %v1616 = vpop.f32.mrb[0].mxu0
    %1617 = vmatprep.mubr.f32.mxu0 0.0
    %v1618 = vand.u32 %v80, 4294901760
    %1619 = vmatmul.mubr.f32.gmra.mrb[0].mxu0 %v1618
    %v1620 = vpop.f32.mrb[0].mxu0
    %v1621 = vadd.f32 %v1496, %v1620
    %v1622 = vpop.f32.mrb[0].mxu0
    %1623 = vdwg.mxu0
    %1624 = vmatprep.subr.mxu0 0.0
    %v1625 = vand.u32 %v83, 4294901760
    %1626 = vmatpush1.msra.mxu0 %v1625
    %1627 = vmatprep.subr.mxu0 0.0
    %v1628 = vand.u32 %v86, 4294901760
    %1629 = vmatpush1.msra.mxu0 %v1628
    %1630 = vmatprep.subr.mxu0 0.0
    %v1631 = vand.u32 %v89, 4294901760
    %1632 = vmatpush1.msra.mxu0 %v1631
    %1633 = vmatprep.subr.mxu0 0.0
    %v1634 = vand.u32 %v92, 4294901760
    %1635 = vmatpush1.msra.mxu0 %v1634
    %1636 = vmatprep.subr.mxu0 0.0
    %v1637 = vand.u32 %v95, 4294901760
    %1638 = vmatpush1.msra.mxu0 %v1637
    %1639 = vmatprep.subr.mxu0 0.0
    %v1640 = vand.u32 %v98, 4294901760
    %1641 = vmatpush1.msra.mxu0 %v1640
    %1642 = vmatprep.subr.mxu0 0.0
    %v1643 = vand.u32 %v101, 4294901760
    %1644 = vmatpush1.msra.mxu0 %v1643
    %1645 = vmatprep.subr.mxu0 0.0
    %v1646 = vand.u32 %v104, 4294901760
    %1647 = vmatpush1.msra.mxu0 %v1646
    %1648 = vmatprep.subr.mxu0 0.0
    %v1649 = vand.u32 %v107, 4294901760
    %1650 = vmatpush1.msra.mxu0 %v1649
    %1651 = vmatprep.subr.mxu0 0.0
    %v1652 = vand.u32 %v110, 4294901760
    %1653 = vmatpush1.msra.mxu0 %v1652
    %1654 = vmatprep.subr.mxu0 0.0
    %v1655 = vand.u32 %v113, 4294901760
    %1656 = vmatpush1.msra.mxu0 %v1655
    %1657 = vmatprep.subr.mxu0 0.0
    %v1658 = vand.u32 %v116, 4294901760
    %1659 = vmatpush1.msra.mxu0 %v1658
    %1660 = vmatprep.subr.mxu0 0.0
    %v1661 = vand.u32 %v119, 4294901760
    %1662 = vmatpush1.msra.mxu0 %v1661
    %1663 = vmatprep.subr.mxu0 0.0
    %v1664 = vand.u32 %v122, 4294901760
    %1665 = vmatpush1.msra.mxu0 %v1664
    %1666 = vmatprep.subr.mxu0 0.0
    %v1667 = vand.u32 %v125, 4294901760
    %1668 = vmatpush1.msra.mxu0 %v1667
    %1669 = vmatprep.subr.mxu0 0.0
    %v1670 = vand.u32 %v128, 4294901760
    %1671 = vmatpush1.msra.mxu0 %v1670
    %1672 = vmatprep.subr.mxu0 0.0
    %1673 = vmatpush1.msra.mxu0 0.0
    %1674 = vmatprep.subr.mxu0 0.0
    %1675 = vmatpush1.msra.mxu0 0.0
    %1676 = vmatprep.subr.mxu0 0.0
    %1677 = vmatpush1.msra.mxu0 0.0
    %1678 = vmatprep.subr.mxu0 0.0
    %1679 = vmatpush1.msra.mxu0 0.0
    %1680 = vmatprep.subr.mxu0 0.0
    %1681 = vmatpush1.msra.mxu0 0.0
    %1682 = vmatprep.subr.mxu0 0.0
    %1683 = vmatpush1.msra.mxu0 0.0
    %1684 = vmatprep.subr.mxu0 0.0
    %1685 = vmatpush1.msra.mxu0 0.0
    %1686 = vmatprep.subr.mxu0 0.0
    %1687 = vmatpush1.msra.mxu0 0.0
    %1688 = vmatprep.subr.mxu0 0.0
    %1689 = vmatpush1.msra.mxu0 0.0
    %1690 = vmatprep.subr.mxu0 0.0
    %1691 = vmatpush1.msra.mxu0 0.0
    %1692 = vmatprep.subr.mxu0 0.0
    %1693 = vmatpush1.msra.mxu0 0.0
    %1694 = vmatprep.subr.mxu0 0.0
    %1695 = vmatpush1.msra.mxu0 0.0
    %1696 = vmatprep.subr.mxu0 0.0
    %1697 = vmatpush1.msra.mxu0 0.0
    %1698 = vmatprep.subr.mxu0 0.0
    %1699 = vmatpush1.msra.mxu0 0.0
    %1700 = vmatprep.subr.mxu0 0.0
    %1701 = vmatpush1.msra.mxu0 0.0
    %1702 = vmatprep.subr.mxu0 0.0
    %1703 = vmatpush1.msra.mxu0 0.0
    %1704 = vmatprep.mubr.f32.mxu0 0.0
    %v1705 = vand.u32 %v79, 4294901760
    %1706 = vmatmul.mubr.f32.gmra.mrb[0].mxu0 %v1705
    %v1707 = vpop.f32.mrb[0].mxu0
    %v1708 = vadd.f32 %v1615, %v1707
    %v1709 = vpop.f32.mrb[0].mxu0
    %1710 = vmatprep.mubr.f32.mxu0 0.0
    %v1711 = vand.u32 %v80, 4294901760
    %1712 = vmatmul.mubr.f32.gmra.mrb[0].mxu0 %v1711
    %v1713 = vpop.f32.mrb[0].mxu0
    %v1714 = vadd.f32 %v1621, %v1713
    %v1715 = vpop.f32.mrb[0].mxu0
    %1716 = vdwg.mxu0
    %v1717 = vld [vmem:[#allocation8] sm:$0xff]
    %v1718 = vld [vmem:[#allocation8 + $0x8] sm:$0xff]
    %v1719 = vld [vmem:[#allocation8 + $0x10] sm:$0xff]
    %v1720 = vld [vmem:[#allocation8 + $0x18] sm:$0xff]
    %v1721 = vld [vmem:[#allocation8 + $0x20] sm:$0xff]
    %v1722 = vld [vmem:[#allocation8 + $0x28] sm:$0xff]
    %v1723 = vld [vmem:[#allocation8 + $0x30] sm:$0xff]
    %v1724 = vld [vmem:[#allocation8 + $0x38] sm:$0xff]
    %v1725 = vld [vmem:[#allocation8 + $0x40] sm:$0xff]
    %v1726 = vld [vmem:[#allocation8 + $0x48] sm:$0xff]
    %v1727 = vld [vmem:[#allocation8 + $0x50] sm:$0xff]
    %v1728 = vld [vmem:[#allocation8 + $0x58] sm:$0xff]
    %v1729 = vld [vmem:[#allocation8 + $0x60] sm:$0xff]
    %v1730 = vld [vmem:[#allocation8 + $0x68] sm:$0xff]
    %v1731 = vld [vmem:[#allocation8 + $0x70] sm:$0xff]
    %v1732 = vld [vmem:[#allocation8 + $0x78] sm:$0xff]
    %v1733 = vld [vmem:[#allocation8 + $0x80] sm:$0xff]
    %v1734 = vld [vmem:[#allocation8 + $0x88] sm:$0xff]
    %v1735 = vld [vmem:[#allocation8 + $0x90] sm:$0xff]
    %v1736 = vld [vmem:[#allocation8 + $0x98] sm:$0xff]
    %v1737 = vld [vmem:[#allocation8 + $0xa0] sm:$0xff]
    %v1738 = vld [vmem:[#allocation8 + $0xa8] sm:$0xff]
    %v1739 = vld [vmem:[#allocation8 + $0xb0] sm:$0xff]
    %v1740 = vld [vmem:[#allocation8 + $0xb8] sm:$0xff]
    %v1741 = vld [vmem:[#allocation8 + $0xc0] sm:$0xff]
    %v1742 = vld [vmem:[#allocation8 + $0xc8] sm:$0xff]
    %v1743 = vld [vmem:[#allocation8 + $0xd0] sm:$0xff]
    %v1744 = vld [vmem:[#allocation8 + $0xd8] sm:$0xff]
    %v1745 = vld [vmem:[#allocation8 + $0xe0] sm:$0xff]
    %v1746 = vld [vmem:[#allocation8 + $0xe8] sm:$0xff]
    %v1747 = vld [vmem:[#allocation8 + $0xf0] sm:$0xff]
    %v1748 = vld [vmem:[#allocation8 + $0xf8] sm:$0xff]
    %v1749 = vld [vmem:[#allocation8 + $0x100] sm:$0xff]
    %v1750 = vld [vmem:[#allocation8 + $0x108] sm:$0xff]
    %v1751 = vld [vmem:[#allocation8 + $0x110] sm:$0xff]
    %v1752 = vld [vmem:[#allocation8 + $0x118] sm:$0xff]
    %v1753 = vld [vmem:[#allocation8 + $0x120] sm:$0xff]
    %v1754 = vld [vmem:[#allocation8 + $0x128] sm:$0xff]
    %v1755 = vld [vmem:[#allocation8 + $0x130] sm:$0xff]
    %v1756 = vld [vmem:[#allocation8 + $0x138] sm:$0xff]
    %v1757 = vld [vmem:[#allocation8 + $0x140] sm:$0xff]
    %v1758 = vld [vmem:[#allocation8 + $0x148] sm:$0xff]
    %v1759 = vld [vmem:[#allocation8 + $0x150] sm:$0xff]
    %v1760 = vld [vmem:[#allocation8 + $0x158] sm:$0xff]
    %v1761 = vld [vmem:[#allocation8 + $0x160] sm:$0xff]
    %v1762 = vld [vmem:[#allocation8 + $0x168] sm:$0xff]
    %v1763 = vld [vmem:[#allocation8 + $0x170] sm:$0xff]
    %v1764 = vld [vmem:[#allocation8 + $0x178] sm:$0xff]
    %v1765 = vand.u32 %v1718, 4294901760
    %1766 = vmatprep.subr.mxu0 %v1765
    %v1767 = vand.u32 %v1717, 4294901760
    %1768 = vmatpush1.msra.mxu0 %v1767
    %v1769 = vand.u32 %v1721, 4294901760
    %1770 = vmatprep.subr.mxu0 %v1769
    %v1771 = vand.u32 %v1720, 4294901760
    %1772 = vmatpush1.msra.mxu0 %v1771
    %v1773 = vand.u32 %v1724, 4294901760
    %1774 = vmatprep.subr.mxu0 %v1773
    %v1775 = vand.u32 %v1723, 4294901760
    %1776 = vmatpush1.msra.mxu0 %v1775
    %v1777 = vand.u32 %v1727, 4294901760
    %1778 = vmatprep.subr.mxu0 %v1777
    %v1779 = vand.u32 %v1726, 4294901760
    %1780 = vmatpush1.msra.mxu0 %v1779
    %v1781 = vand.u32 %v1730, 4294901760
    %1782 = vmatprep.subr.mxu0 %v1781
    %v1783 = vand.u32 %v1729, 4294901760
    %1784 = vmatpush1.msra.mxu0 %v1783
    %v1785 = vand.u32 %v1733, 4294901760
    %1786 = vmatprep.subr.mxu0 %v1785
    %v1787 = vand.u32 %v1732, 4294901760
    %1788 = vmatpush1.msra.mxu0 %v1787
    %v1789 = vand.u32 %v1736, 4294901760
    %1790 = vmatprep.subr.mxu0 %v1789
    %v1791 = vand.u32 %v1735, 4294901760
    %1792 = vmatpush1.msra.mxu0 %v1791
    %v1793 = vand.u32 %v1739, 4294901760
    %1794 = vmatprep.subr.mxu0 %v1793
    %v1795 = vand.u32 %v1738, 4294901760
    %1796 = vmatpush1.msra.mxu0 %v1795
    %v1797 = vand.u32 %v1742, 4294901760
    %1798 = vmatprep.subr.mxu0 %v1797
    %v1799 = vand.u32 %v1741, 4294901760
    %1800 = vmatpush1.msra.mxu0 %v1799
    %v1801 = vand.u32 %v1745, 4294901760
    %1802 = vmatprep.subr.mxu0 %v1801
    %v1803 = vand.u32 %v1744, 4294901760
    %1804 = vmatpush1.msra.mxu0 %v1803
    %v1805 = vand.u32 %v1748, 4294901760
    %1806 = vmatprep.subr.mxu0 %v1805
    %v1807 = vand.u32 %v1747, 4294901760
    %1808 = vmatpush1.msra.mxu0 %v1807
    %v1809 = vand.u32 %v1751, 4294901760
    %1810 = vmatprep.subr.mxu0 %v1809
    %v1811 = vand.u32 %v1750, 4294901760
    %1812 = vmatpush1.msra.mxu0 %v1811
    %v1813 = vand.u32 %v1754, 4294901760
    %1814 = vmatprep.subr.mxu0 %v1813
    %v1815 = vand.u32 %v1753, 4294901760
    %1816 = vmatpush1.msra.mxu0 %v1815
    %v1817 = vand.u32 %v1757, 4294901760
    %1818 = vmatprep.subr.mxu0 %v1817
    %v1819 = vand.u32 %v1756, 4294901760
    %1820 = vmatpush1.msra.mxu0 %v1819
    %v1821 = vand.u32 %v1760, 4294901760
    %1822 = vmatprep.subr.mxu0 %v1821
    %v1823 = vand.u32 %v1759, 4294901760
    %1824 = vmatpush1.msra.mxu0 %v1823
    %v1825 = vand.u32 %v1763, 4294901760
    %1826 = vmatprep.subr.mxu0 %v1825
    %v1827 = vand.u32 %v1762, 4294901760
    %1828 = vmatpush1.msra.mxu0 %v1827
    %1829 = vmatprep.subr.mxu0 0.0
    %1830 = vmatpush1.msra.mxu0 0.0
    %1831 = vmatprep.subr.mxu0 0.0
    %1832 = vmatpush1.msra.mxu0 0.0
    %1833 = vmatprep.subr.mxu0 0.0
    %1834 = vmatpush1.msra.mxu0 0.0
    %1835 = vmatprep.subr.mxu0 0.0
    %1836 = vmatpush1.msra.mxu0 0.0
    %1837 = vmatprep.subr.mxu0 0.0
    %1838 = vmatpush1.msra.mxu0 0.0
    %1839 = vmatprep.subr.mxu0 0.0
    %1840 = vmatpush1.msra.mxu0 0.0
    %1841 = vmatprep.subr.mxu0 0.0
    %1842 = vmatpush1.msra.mxu0 0.0
    %1843 = vmatprep.subr.mxu0 0.0
    %1844 = vmatpush1.msra.mxu0 0.0
    %1845 = vmatprep.subr.mxu0 0.0
    %1846 = vmatpush1.msra.mxu0 0.0
    %1847 = vmatprep.subr.mxu0 0.0
    %1848 = vmatpush1.msra.mxu0 0.0
    %1849 = vmatprep.subr.mxu0 0.0
    %1850 = vmatpush1.msra.mxu0 0.0
    %1851 = vmatprep.subr.mxu0 0.0
    %1852 = vmatpush1.msra.mxu0 0.0
    %1853 = vmatprep.subr.mxu0 0.0
    %1854 = vmatpush1.msra.mxu0 0.0
    %1855 = vmatprep.subr.mxu0 0.0
    %1856 = vmatpush1.msra.mxu0 0.0
    %1857 = vmatprep.subr.mxu0 0.0
    %1858 = vmatpush1.msra.mxu0 0.0
    %1859 = vmatprep.subr.mxu0 0.0
    %1860 = vmatpush1.msra.mxu0 0.0
    %1861 = vmatprep.mubr.f32.mxu0 0.0
    %v1862 = vand.u32 %v79, 4294901760
    %v1863 = vsub.f32 %v79, %v1862
    %v1864 = vand.u32 %v1863, 4294901760
    %v1865 = vsub.f32 %v1863, %v1864
    %v1866 = vand.u32 %v1865, 4294901760
    %1867 = vmatmul.mubr.f32.gmra.mrb[0].mxu0 %v1866
    %v1868 = vpop.f32.mrb[0].mxu0
    %v1869 = vadd.f32 0.0, %v1868
    %v1870 = vpop.f32.mrb[0].mxu0
    %v1871 = vadd.f32 0.0, %v1870
    %1872 = vmatprep.mubr.f32.mxu0 0.0
    %v1873 = vand.u32 %v80, 4294901760
    %v1874 = vsub.f32 %v80, %v1873
    %v1875 = vand.u32 %v1874, 4294901760
    %v1876 = vsub.f32 %v1874, %v1875
    %v1877 = vand.u32 %v1876, 4294901760
    %1878 = vmatmul.mubr.f32.gmra.mrb[0].mxu0 %v1877
    %v1879 = vpop.f32.mrb[0].mxu0
    %v1880 = vadd.f32 0.0, %v1879
    %v1881 = vpop.f32.mrb[0].mxu0
    %v1882 = vadd.f32 0.0, %v1881
    %1883 = vdwg.mxu0
    %v1884 = vand.u32 %v1718, 4294901760
    %v1885 = vsub.f32 %v1718, %v1884
    %v1886 = vand.u32 %v1885, 4294901760
    %v1887 = vsub.f32 %v1885, %v1886
    %v1888 = vand.u32 %v1887, 4294901760
    %1889 = vmatprep.subr.mxu0 %v1888
    %v1890 = vand.u32 %v1717, 4294901760
    %v1891 = vsub.f32 %v1717, %v1890
    %v1892 = vand.u32 %v1891, 4294901760
    %v1893 = vsub.f32 %v1891, %v1892
    %v1894 = vand.u32 %v1893, 4294901760
    %1895 = vmatpush1.msra.mxu0 %v1894
    %v1896 = vand.u32 %v1721, 4294901760
    %v1897 = vsub.f32 %v1721, %v1896
    %v1898 = vand.u32 %v1897, 4294901760
    %v1899 = vsub.f32 %v1897, %v1898
    %v1900 = vand.u32 %v1899, 4294901760
    %1901 = vmatprep.subr.mxu0 %v1900
    %v1902 = vand.u32 %v1720, 4294901760
    %v1903 = vsub.f32 %v1720, %v1902
    %v1904 = vand.u32 %v1903, 4294901760
    %v1905 = vsub.f32 %v1903, %v1904
    %v1906 = vand.u32 %v1905, 4294901760
    %1907 = vmatpush1.msra.mxu0 %v1906
    %v1908 = vand.u32 %v1724, 4294901760
    %v1909 = vsub.f32 %v1724, %v1908
    %v1910 = vand.u32 %v1909, 4294901760
    %v1911 = vsub.f32 %v1909, %v1910
    %v1912 = vand.u32 %v1911, 4294901760
    %1913 = vmatprep.subr.mxu0 %v1912
    %v1914 = vand.u32 %v1723, 4294901760
    %v1915 = vsub.f32 %v1723, %v1914
    %v1916 = vand.u32 %v1915, 4294901760
    %v1917 = vsub.f32 %v1915, %v1916
    %v1918 = vand.u32 %v1917, 4294901760
    %1919 = vmatpush1.msra.mxu0 %v1918
    %v1920 = vand.u32 %v1727, 4294901760
    %v1921 = vsub.f32 %v1727, %v1920
    %v1922 = vand.u32 %v1921, 4294901760
    %v1923 = vsub.f32 %v1921, %v1922
    %v1924 = vand.u32 %v1923, 4294901760
    %1925 = vmatprep.subr.mxu0 %v1924
    %v1926 = vand.u32 %v1726, 4294901760
    %v1927 = vsub.f32 %v1726, %v1926
    %v1928 = vand.u32 %v1927, 4294901760
    %v1929 = vsub.f32 %v1927, %v1928
    %v1930 = vand.u32 %v1929, 4294901760
    %1931 = vmatpush1.msra.mxu0 %v1930
    %v1932 = vand.u32 %v1730, 4294901760
    %v1933 = vsub.f32 %v1730, %v1932
    %v1934 = vand.u32 %v1933, 4294901760
    %v1935 = vsub.f32 %v1933, %v1934
    %v1936 = vand.u32 %v1935, 4294901760
    %1937 = vmatprep.subr.mxu0 %v1936
    %v1938 = vand.u32 %v1729, 4294901760
    %v1939 = vsub.f32 %v1729, %v1938
    %v1940 = vand.u32 %v1939, 4294901760
    %v1941 = vsub.f32 %v1939, %v1940
    %v1942 = vand.u32 %v1941, 4294901760
    %1943 = vmatpush1.msra.mxu0 %v1942
    %v1944 = vand.u32 %v1733, 4294901760
    %v1945 = vsub.f32 %v1733, %v1944
    %v1946 = vand.u32 %v1945, 4294901760
    %v1947 = vsub.f32 %v1945, %v1946
    %v1948 = vand.u32 %v1947, 4294901760
    %1949 = vmatprep.subr.mxu0 %v1948
    %v1950 = vand.u32 %v1732, 4294901760
    %v1951 = vsub.f32 %v1732, %v1950
    %v1952 = vand.u32 %v1951, 4294901760
    %v1953 = vsub.f32 %v1951, %v1952
    %v1954 = vand.u32 %v1953, 4294901760
    %1955 = vmatpush1.msra.mxu0 %v1954
    %v1956 = vand.u32 %v1736, 4294901760
    %v1957 = vsub.f32 %v1736, %v1956
    %v1958 = vand.u32 %v1957, 4294901760
    %v1959 = vsub.f32 %v1957, %v1958
    %v1960 = vand.u32 %v1959, 4294901760
    %1961 = vmatprep.subr.mxu0 %v1960
    %v1962 = vand.u32 %v1735, 4294901760
    %v1963 = vsub.f32 %v1735, %v1962
    %v1964 = vand.u32 %v1963, 4294901760
    %v1965 = vsub.f32 %v1963, %v1964
    %v1966 = vand.u32 %v1965, 4294901760
    %1967 = vmatpush1.msra.mxu0 %v1966
    %v1968 = vand.u32 %v1739, 4294901760
    %v1969 = vsub.f32 %v1739, %v1968
    %v1970 = vand.u32 %v1969, 4294901760
    %v1971 = vsub.f32 %v1969, %v1970
    %v1972 = vand.u32 %v1971, 4294901760
    %1973 = vmatprep.subr.mxu0 %v1972
    %v1974 = vand.u32 %v1738, 4294901760
    %v1975 = vsub.f32 %v1738, %v1974
    %v1976 = vand.u32 %v1975, 4294901760
    %v1977 = vsub.f32 %v1975, %v1976
    %v1978 = vand.u32 %v1977, 4294901760
    %1979 = vmatpush1.msra.mxu0 %v1978
    %v1980 = vand.u32 %v1742, 4294901760
    %v1981 = vsub.f32 %v1742, %v1980
    %v1982 = vand.u32 %v1981, 4294901760
    %v1983 = vsub.f32 %v1981, %v1982
    %v1984 = vand.u32 %v1983, 4294901760
    %1985 = vmatprep.subr.mxu0 %v1984
    %v1986 = vand.u32 %v1741, 4294901760
    %v1987 = vsub.f32 %v1741, %v1986
    %v1988 = vand.u32 %v1987, 4294901760
    %v1989 = vsub.f32 %v1987, %v1988
    %v1990 = vand.u32 %v1989, 4294901760
    %1991 = vmatpush1.msra.mxu0 %v1990
    %v1992 = vand.u32 %v1745, 4294901760
    %v1993 = vsub.f32 %v1745, %v1992
    %v1994 = vand.u32 %v1993, 4294901760
    %v1995 = vsub.f32 %v1993, %v1994
    %v1996 = vand.u32 %v1995, 4294901760
    %1997 = vmatprep.subr.mxu0 %v1996
    %v1998 = vand.u32 %v1744, 4294901760
    %v1999 = vsub.f32 %v1744, %v1998
    %v2000 = vand.u32 %v1999, 4294901760
    %v2001 = vsub.f32 %v1999, %v2000
    %v2002 = vand.u32 %v2001, 4294901760
    %2003 = vmatpush1.msra.mxu0 %v2002
    %v2004 = vand.u32 %v1748, 4294901760
    %v2005 = vsub.f32 %v1748, %v2004
    %v2006 = vand.u32 %v2005, 4294901760
    %v2007 = vsub.f32 %v2005, %v2006
    %v2008 = vand.u32 %v2007, 4294901760
    %2009 = vmatprep.subr.mxu0 %v2008
    %v2010 = vand.u32 %v1747, 4294901760
    %v2011 = vsub.f32 %v1747, %v2010
    %v2012 = vand.u32 %v2011, 4294901760
    %v2013 = vsub.f32 %v2011, %v2012
    %v2014 = vand.u32 %v2013, 4294901760
    %2015 = vmatpush1.msra.mxu0 %v2014
    %v2016 = vand.u32 %v1751, 4294901760
    %v2017 = vsub.f32 %v1751, %v2016
    %v2018 = vand.u32 %v2017, 4294901760
    %v2019 = vsub.f32 %v2017, %v2018
    %v2020 = vand.u32 %v2019, 4294901760
    %2021 = vmatprep.subr.mxu0 %v2020
    %v2022 = vand.u32 %v1750, 4294901760
    %v2023 = vsub.f32 %v1750, %v2022
    %v2024 = vand.u32 %v2023, 4294901760
    %v2025 = vsub.f32 %v2023, %v2024
    %v2026 = vand.u32 %v2025, 4294901760
    %2027 = vmatpush1.msra.mxu0 %v2026
    %v2028 = vand.u32 %v1754, 4294901760
    %v2029 = vsub.f32 %v1754, %v2028
    %v2030 = vand.u32 %v2029, 4294901760
    %v2031 = vsub.f32 %v2029, %v2030
    %v2032 = vand.u32 %v2031, 4294901760
    %2033 = vmatprep.subr.mxu0 %v2032
    %v2034 = vand.u32 %v1753, 4294901760
    %v2035 = vsub.f32 %v1753, %v2034
    %v2036 = vand.u32 %v2035, 4294901760
    %v2037 = vsub.f32 %v2035, %v2036
    %v2038 = vand.u32 %v2037, 4294901760
    %2039 = vmatpush1.msra.mxu0 %v2038
    %v2040 = vand.u32 %v1757, 4294901760
    %v2041 = vsub.f32 %v1757, %v2040
    %v2042 = vand.u32 %v2041, 4294901760
    %v2043 = vsub.f32 %v2041, %v2042
    %v2044 = vand.u32 %v2043, 4294901760
    %2045 = vmatprep.subr.mxu0 %v2044
    %v2046 = vand.u32 %v1756, 4294901760
    %v2047 = vsub.f32 %v1756, %v2046
    %v2048 = vand.u32 %v2047, 4294901760
    %v2049 = vsub.f32 %v2047, %v2048
    %v2050 = vand.u32 %v2049, 4294901760
    %2051 = vmatpush1.msra.mxu0 %v2050
    %v2052 = vand.u32 %v1760, 4294901760
    %v2053 = vsub.f32 %v1760, %v2052
    %v2054 = vand.u32 %v2053, 4294901760
    %v2055 = vsub.f32 %v2053, %v2054
    %v2056 = vand.u32 %v2055, 4294901760
    %2057 = vmatprep.subr.mxu0 %v2056
    %v2058 = vand.u32 %v1759, 4294901760
    %v2059 = vsub.f32 %v1759, %v2058
    %v2060 = vand.u32 %v2059, 4294901760
    %v2061 = vsub.f32 %v2059, %v2060
    %v2062 = vand.u32 %v2061, 4294901760
    %2063 = vmatpush1.msra.mxu0 %v2062
    %v2064 = vand.u32 %v1763, 4294901760
    %v2065 = vsub.f32 %v1763, %v2064
    %v2066 = vand.u32 %v2065, 4294901760
    %v2067 = vsub.f32 %v2065, %v2066
    %v2068 = vand.u32 %v2067, 4294901760
    %2069 = vmatprep.subr.mxu0 %v2068
    %v2070 = vand.u32 %v1762, 4294901760
    %v2071 = vsub.f32 %v1762, %v2070
    %v2072 = vand.u32 %v2071, 4294901760
    %v2073 = vsub.f32 %v2071, %v2072
    %v2074 = vand.u32 %v2073, 4294901760
    %2075 = vmatpush1.msra.mxu0 %v2074
    %2076 = vmatprep.subr.mxu0 0.0
    %2077 = vmatpush1.msra.mxu0 0.0
    %2078 = vmatprep.subr.mxu0 0.0
    %2079 = vmatpush1.msra.mxu0 0.0
    %2080 = vmatprep.subr.mxu0 0.0
    %2081 = vmatpush1.msra.mxu0 0.0
    %2082 = vmatprep.subr.mxu0 0.0
    %2083 = vmatpush1.msra.mxu0 0.0
    %2084 = vmatprep.subr.mxu0 0.0
    %2085 = vmatpush1.msra.mxu0 0.0
    %2086 = vmatprep.subr.mxu0 0.0
    %2087 = vmatpush1.msra.mxu0 0.0
    %2088 = vmatprep.subr.mxu0 0.0
    %2089 = vmatpush1.msra.mxu0 0.0
    %2090 = vmatprep.subr.mxu0 0.0
    %2091 = vmatpush1.msra.mxu0 0.0
    %2092 = vmatprep.subr.mxu0 0.0
    %2093 = vmatpush1.msra.mxu0 0.0
    %2094 = vmatprep.subr.mxu0 0.0
    %2095 = vmatpush1.msra.mxu0 0.0
    %2096 = vmatprep.subr.mxu0 0.0
    %2097 = vmatpush1.msra.mxu0 0.0
    %2098 = vmatprep.subr.mxu0 0.0
    %2099 = vmatpush1.msra.mxu0 0.0
    %2100 = vmatprep.subr.mxu0 0.0
    %2101 = vmatpush1.msra.mxu0 0.0
    %2102 = vmatprep.subr.mxu0 0.0
    %2103 = vmatpush1.msra.mxu0 0.0
    %2104 = vmatprep.subr.mxu0 0.0
    %2105 = vmatpush1.msra.mxu0 0.0
    %2106 = vmatprep.subr.mxu0 0.0
    %2107 = vmatpush1.msra.mxu0 0.0
    %2108 = vmatprep.mubr.f32.mxu0 0.0
    %v2109 = vand.u32 %v79, 4294901760
    %2110 = vmatmul.mubr.f32.gmra.mrb[0].mxu0 %v2109
    %v2111 = vpop.f32.mrb[0].mxu0
    %v2112 = vadd.f32 %v1869, %v2111
    %v2113 = vpop.f32.mrb[0].mxu0
    %v2114 = vadd.f32 %v1871, %v2113
    %2115 = vmatprep.mubr.f32.mxu0 0.0
    %v2116 = vand.u32 %v80, 4294901760
    %2117 = vmatmul.mubr.f32.gmra.mrb[0].mxu0 %v2116
    %v2118 = vpop.f32.mrb[0].mxu0
    %v2119 = vadd.f32 %v1880, %v2118
    %v2120 = vpop.f32.mrb[0].mxu0
    %v2121 = vadd.f32 %v1882, %v2120
    %2122 = vdwg.mxu0
    %v2123 = vand.u32 %v1718, 4294901760
    %v2124 = vsub.f32 %v1718, %v2123
    %2125 = vmatprep.subr.mxu0 %v2124
    %v2126 = vand.u32 %v1717, 4294901760
    %v2127 = vsub.f32 %v1717, %v2126
    %2128 = vmatpush1.msra.mxu0 %v2127
    %v2129 = vand.u32 %v1721, 4294901760
    %v2130 = vsub.f32 %v1721, %v2129
    %2131 = vmatprep.subr.mxu0 %v2130
    %v2132 = vand.u32 %v1720, 4294901760
    %v2133 = vsub.f32 %v1720, %v2132
    %2134 = vmatpush1.msra.mxu0 %v2133
    %v2135 = vand.u32 %v1724, 4294901760
    %v2136 = vsub.f32 %v1724, %v2135
    %2137 = vmatprep.subr.mxu0 %v2136
    %v2138 = vand.u32 %v1723, 4294901760
    %v2139 = vsub.f32 %v1723, %v2138
    %2140 = vmatpush1.msra.mxu0 %v2139
    %v2141 = vand.u32 %v1727, 4294901760
    %v2142 = vsub.f32 %v1727, %v2141
    %2143 = vmatprep.subr.mxu0 %v2142
    %v2144 = vand.u32 %v1726, 4294901760
    %v2145 = vsub.f32 %v1726, %v2144
    %2146 = vmatpush1.msra.mxu0 %v2145
    %v2147 = vand.u32 %v1730, 4294901760
    %v2148 = vsub.f32 %v1730, %v2147
    %2149 = vmatprep.subr.mxu0 %v2148
    %v2150 = vand.u32 %v1729, 4294901760
    %v2151 = vsub.f32 %v1729, %v2150
    %2152 = vmatpush1.msra.mxu0 %v2151
    %v2153 = vand.u32 %v1733, 4294901760
    %v2154 = vsub.f32 %v1733, %v2153
    %2155 = vmatprep.subr.mxu0 %v2154
    %v2156 = vand.u32 %v1732, 4294901760
    %v2157 = vsub.f32 %v1732, %v2156
    %2158 = vmatpush1.msra.mxu0 %v2157
    %v2159 = vand.u32 %v1736, 4294901760
    %v2160 = vsub.f32 %v1736, %v2159
    %2161 = vmatprep.subr.mxu0 %v2160
    %v2162 = vand.u32 %v1735, 4294901760
    %v2163 = vsub.f32 %v1735, %v2162
    %2164 = vmatpush1.msra.mxu0 %v2163
    %v2165 = vand.u32 %v1739, 4294901760
    %v2166 = vsub.f32 %v1739, %v2165
    %2167 = vmatprep.subr.mxu0 %v2166
    %v2168 = vand.u32 %v1738, 4294901760
    %v2169 = vsub.f32 %v1738, %v2168
    %2170 = vmatpush1.msra.mxu0 %v2169
    %v2171 = vand.u32 %v1742, 4294901760
    %v2172 = vsub.f32 %v1742, %v2171
    %2173 = vmatprep.subr.mxu0 %v2172
    %v2174 = vand.u32 %v1741, 4294901760
    %v2175 = vsub.f32 %v1741, %v2174
    %2176 = vmatpush1.msra.mxu0 %v2175
    %v2177 = vand.u32 %v1745, 4294901760
    %v2178 = vsub.f32 %v1745, %v2177
    %2179 = vmatprep.subr.mxu0 %v2178
    %v2180 = vand.u32 %v1744, 4294901760
    %v2181 = vsub.f32 %v1744, %v2180
    %2182 = vmatpush1.msra.mxu0 %v2181
    %v2183 = vand.u32 %v1748, 4294901760
    %v2184 = vsub.f32 %v1748, %v2183
    %2185 = vmatprep.subr.mxu0 %v2184
    %v2186 = vand.u32 %v1747, 4294901760
    %v2187 = vsub.f32 %v1747, %v2186
    %2188 = vmatpush1.msra.mxu0 %v2187
    %v2189 = vand.u32 %v1751, 4294901760
    %v2190 = vsub.f32 %v1751, %v2189
    %2191 = vmatprep.subr.mxu0 %v2190
    %v2192 = vand.u32 %v1750, 4294901760
    %v2193 = vsub.f32 %v1750, %v2192
    %2194 = vmatpush1.msra.mxu0 %v2193
    %v2195 = vand.u32 %v1754, 4294901760
    %v2196 = vsub.f32 %v1754, %v2195
    %2197 = vmatprep.subr.mxu0 %v2196
    %v2198 = vand.u32 %v1753, 4294901760
    %v2199 = vsub.f32 %v1753, %v2198
    %2200 = vmatpush1.msra.mxu0 %v2199
    %v2201 = vand.u32 %v1757, 4294901760
    %v2202 = vsub.f32 %v1757, %v2201
    %2203 = vmatprep.subr.mxu0 %v2202
    %v2204 = vand.u32 %v1756, 4294901760
    %v2205 = vsub.f32 %v1756, %v2204
    %2206 = vmatpush1.msra.mxu0 %v2205
    %v2207 = vand.u32 %v1760, 4294901760
    %v2208 = vsub.f32 %v1760, %v2207
    %2209 = vmatprep.subr.mxu0 %v2208
    %v2210 = vand.u32 %v1759, 4294901760
    %v2211 = vsub.f32 %v1759, %v2210
    %2212 = vmatpush1.msra.mxu0 %v2211
    %v2213 = vand.u32 %v1763, 4294901760
    %v2214 = vsub.f32 %v1763, %v2213
    %2215 = vmatprep.subr.mxu0 %v2214
    %v2216 = vand.u32 %v1762, 4294901760
    %v2217 = vsub.f32 %v1762, %v2216
    %2218 = vmatpush1.msra.mxu0 %v2217
    %2219 = vmatprep.subr.mxu0 0.0
    %2220 = vmatpush1.msra.mxu0 0.0
    %2221 = vmatprep.subr.mxu0 0.0
    %2222 = vmatpush1.msra.mxu0 0.0
    %2223 = vmatprep.subr.mxu0 0.0
    %2224 = vmatpush1.msra.mxu0 0.0
    %2225 = vmatprep.subr.mxu0 0.0
    %2226 = vmatpush1.msra.mxu0 0.0
    %2227 = vmatprep.subr.mxu0 0.0
    %2228 = vmatpush1.msra.mxu0 0.0
    %2229 = vmatprep.subr.mxu0 0.0
    %2230 = vmatpush1.msra.mxu0 0.0
    %2231 = vmatprep.subr.mxu0 0.0
    %2232 = vmatpush1.msra.mxu0 0.0
    %2233 = vmatprep.subr.mxu0 0.0
    %2234 = vmatpush1.msra.mxu0 0.0
    %2235 = vmatprep.subr.mxu0 0.0
    %2236 = vmatpush1.msra.mxu0 0.0
    %2237 = vmatprep.subr.mxu0 0.0
    %2238 = vmatpush1.msra.mxu0 0.0
    %2239 = vmatprep.subr.mxu0 0.0
    %2240 = vmatpush1.msra.mxu0 0.0
    %2241 = vmatprep.subr.mxu0 0.0
    %2242 = vmatpush1.msra.mxu0 0.0
    %2243 = vmatprep.subr.mxu0 0.0
    %2244 = vmatpush1.msra.mxu0 0.0
    %2245 = vmatprep.subr.mxu0 0.0
    %2246 = vmatpush1.msra.mxu0 0.0
    %2247 = vmatprep.subr.mxu0 0.0
    %2248 = vmatpush1.msra.mxu0 0.0
    %2249 = vmatprep.subr.mxu0 0.0
    %2250 = vmatpush1.msra.mxu0 0.0
    %2251 = vmatprep.mubr.f32.mxu0 0.0
    %v2252 = vand.u32 %v79, 4294901760
    %v2253 = vsub.f32 %v79, %v2252
    %2254 = vmatmul.mubr.f32.gmra.mrb[0].mxu0 %v2253
    %v2255 = vpop.f32.mrb[0].mxu0
    %v2256 = vadd.f32 %v2112, %v2255
    %v2257 = vpop.f32.mrb[0].mxu0
    %v2258 = vadd.f32 %v2114, %v2257
    %2259 = vmatprep.mubr.f32.mxu0 0.0
    %v2260 = vand.u32 %v80, 4294901760
    %v2261 = vsub.f32 %v80, %v2260
    %2262 = vmatmul.mubr.f32.gmra.mrb[0].mxu0 %v2261
    %v2263 = vpop.f32.mrb[0].mxu0
    %v2264 = vadd.f32 %v2119, %v2263
    %v2265 = vpop.f32.mrb[0].mxu0
    %v2266 = vadd.f32 %v2121, %v2265
    %2267 = vdwg.mxu0
    %v2268 = vand.u32 %v1718, 4294901760
    %2269 = vmatprep.subr.mxu0 %v2268
    %v2270 = vand.u32 %v1717, 4294901760
    %2271 = vmatpush1.msra.mxu0 %v2270
    %v2272 = vand.u32 %v1721, 4294901760
    %2273 = vmatprep.subr.mxu0 %v2272
    %v2274 = vand.u32 %v1720, 4294901760
    %2275 = vmatpush1.msra.mxu0 %v2274
    %v2276 = vand.u32 %v1724, 4294901760
    %2277 = vmatprep.subr.mxu0 %v2276
    %v2278 = vand.u32 %v1723, 4294901760
    %2279 = vmatpush1.msra.mxu0 %v2278
    %v2280 = vand.u32 %v1727, 4294901760
    %2281 = vmatprep.subr.mxu0 %v2280
    %v2282 = vand.u32 %v1726, 4294901760
    %2283 = vmatpush1.msra.mxu0 %v2282
    %v2284 = vand.u32 %v1730, 4294901760
    %2285 = vmatprep.subr.mxu0 %v2284
    %v2286 = vand.u32 %v1729, 4294901760
    %2287 = vmatpush1.msra.mxu0 %v2286
    %v2288 = vand.u32 %v1733, 4294901760
    %2289 = vmatprep.subr.mxu0 %v2288
    %v2290 = vand.u32 %v1732, 4294901760
    %2291 = vmatpush1.msra.mxu0 %v2290
    %v2292 = vand.u32 %v1736, 4294901760
    %2293 = vmatprep.subr.mxu0 %v2292
    %v2294 = vand.u32 %v1735, 4294901760
    %2295 = vmatpush1.msra.mxu0 %v2294
    %v2296 = vand.u32 %v1739, 4294901760
    %2297 = vmatprep.subr.mxu0 %v2296
    %v2298 = vand.u32 %v1738, 4294901760
    %2299 = vmatpush1.msra.mxu0 %v2298
    %v2300 = vand.u32 %v1742, 4294901760
    %2301 = vmatprep.subr.mxu0 %v2300
    %v2302 = vand.u32 %v1741, 4294901760
    %2303 = vmatpush1.msra.mxu0 %v2302
    %v2304 = vand.u32 %v1745, 4294901760
    %2305 = vmatprep.subr.mxu0 %v2304
    %v2306 = vand.u32 %v1744, 4294901760
    %2307 = vmatpush1.msra.mxu0 %v2306
    %v2308 = vand.u32 %v1748, 4294901760
    %2309 = vmatprep.subr.mxu0 %v2308
    %v2310 = vand.u32 %v1747, 4294901760
    %2311 = vmatpush1.msra.mxu0 %v2310
    %v2312 = vand.u32 %v1751, 4294901760
    %2313 = vmatprep.subr.mxu0 %v2312
    %v2314 = vand.u32 %v1750, 4294901760
    %2315 = vmatpush1.msra.mxu0 %v2314
    %v2316 = vand.u32 %v1754, 4294901760
    %2317 = vmatprep.subr.mxu0 %v2316
    %v2318 = vand.u32 %v1753, 4294901760
    %2319 = vmatpush1.msra.mxu0 %v2318
    %v2320 = vand.u32 %v1757, 4294901760
    %2321 = vmatprep.subr.mxu0 %v2320
    %v2322 = vand.u32 %v1756, 4294901760
    %2323 = vmatpush1.msra.mxu0 %v2322
    %v2324 = vand.u32 %v1760, 4294901760
    %2325 = vmatprep.subr.mxu0 %v2324
    %v2326 = vand.u32 %v1759, 4294901760
    %2327 = vmatpush1.msra.mxu0 %v2326
    %v2328 = vand.u32 %v1763, 4294901760
    %2329 = vmatprep.subr.mxu0 %v2328
    %v2330 = vand.u32 %v1762, 4294901760
    %2331 = vmatpush1.msra.mxu0 %v2330
    %2332 = vmatprep.subr.mxu0 0.0
    %2333 = vmatpush1.msra.mxu0 0.0
    %2334 = vmatprep.subr.mxu0 0.0
    %2335 = vmatpush1.msra.mxu0 0.0
    %2336 = vmatprep.subr.mxu0 0.0
    %2337 = vmatpush1.msra.mxu0 0.0
    %2338 = vmatprep.subr.mxu0 0.0
    %2339 = vmatpush1.msra.mxu0 0.0
    %2340 = vmatprep.subr.mxu0 0.0
    %2341 = vmatpush1.msra.mxu0 0.0
    %2342 = vmatprep.subr.mxu0 0.0
    %2343 = vmatpush1.msra.mxu0 0.0
    %2344 = vmatprep.subr.mxu0 0.0
    %2345 = vmatpush1.msra.mxu0 0.0
    %2346 = vmatprep.subr.mxu0 0.0
    %2347 = vmatpush1.msra.mxu0 0.0
    %2348 = vmatprep.subr.mxu0 0.0
    %2349 = vmatpush1.msra.mxu0 0.0
    %2350 = vmatprep.subr.mxu0 0.0
    %2351 = vmatpush1.msra.mxu0 0.0
    %2352 = vmatprep.subr.mxu0 0.0
    %2353 = vmatpush1.msra.mxu0 0.0
    %2354 = vmatprep.subr.mxu0 0.0
    %2355 = vmatpush1.msra.mxu0 0.0
    %2356 = vmatprep.subr.mxu0 0.0
    %2357 = vmatpush1.msra.mxu0 0.0
    %2358 = vmatprep.subr.mxu0 0.0
    %2359 = vmatpush1.msra.mxu0 0.0
    %2360 = vmatprep.subr.mxu0 0.0
    %2361 = vmatpush1.msra.mxu0 0.0
    %2362 = vmatprep.subr.mxu0 0.0
    %2363 = vmatpush1.msra.mxu0 0.0
    %2364 = vmatprep.mubr.f32.mxu0 0.0
    %v2365 = vand.u32 %v79, 4294901760
    %v2366 = vsub.f32 %v79, %v2365
    %v2367 = vand.u32 %v2366, 4294901760
    %2368 = vmatmul.mubr.f32.gmra.mrb[0].mxu0 %v2367
    %v2369 = vpop.f32.mrb[0].mxu0
    %v2370 = vadd.f32 %v2256, %v2369
    %v2371 = vpop.f32.mrb[0].mxu0
    %v2372 = vadd.f32 %v2258, %v2371
    %2373 = vmatprep.mubr.f32.mxu0 0.0
    %v2374 = vand.u32 %v80, 4294901760
    %v2375 = vsub.f32 %v80, %v2374
    %v2376 = vand.u32 %v2375, 4294901760
    %2377 = vmatmul.mubr.f32.gmra.mrb[0].mxu0 %v2376
    %v2378 = vpop.f32.mrb[0].mxu0
    %v2379 = vadd.f32 %v2264, %v2378
    %v2380 = vpop.f32.mrb[0].mxu0
    %v2381 = vadd.f32 %v2266, %v2380
    %2382 = vdwg.mxu0
    %v2383 = vand.u32 %v1718, 4294901760
    %v2384 = vsub.f32 %v1718, %v2383
    %v2385 = vand.u32 %v2384, 4294901760
    %2386 = vmatprep.subr.mxu0 %v2385
    %v2387 = vand.u32 %v1717, 4294901760
    %v2388 = vsub.f32 %v1717, %v2387
    %v2389 = vand.u32 %v2388, 4294901760
    %2390 = vmatpush1.msra.mxu0 %v2389
    %v2391 = vand.u32 %v1721, 4294901760
    %v2392 = vsub.f32 %v1721, %v2391
    %v2393 = vand.u32 %v2392, 4294901760
    %2394 = vmatprep.subr.mxu0 %v2393
    %v2395 = vand.u32 %v1720, 4294901760
    %v2396 = vsub.f32 %v1720, %v2395
    %v2397 = vand.u32 %v2396, 4294901760
    %2398 = vmatpush1.msra.mxu0 %v2397
    %v2399 = vand.u32 %v1724, 4294901760
    %v2400 = vsub.f32 %v1724, %v2399
    %v2401 = vand.u32 %v2400, 4294901760
    %2402 = vmatprep.subr.mxu0 %v2401
    %v2403 = vand.u32 %v1723, 4294901760
    %v2404 = vsub.f32 %v1723, %v2403
    %v2405 = vand.u32 %v2404, 4294901760
    %2406 = vmatpush1.msra.mxu0 %v2405
    %v2407 = vand.u32 %v1727, 4294901760
    %v2408 = vsub.f32 %v1727, %v2407
    %v2409 = vand.u32 %v2408, 4294901760
    %2410 = vmatprep.subr.mxu0 %v2409
    %v2411 = vand.u32 %v1726, 4294901760
    %v2412 = vsub.f32 %v1726, %v2411
    %v2413 = vand.u32 %v2412, 4294901760
    %2414 = vmatpush1.msra.mxu0 %v2413
    %v2415 = vand.u32 %v1730, 4294901760
    %v2416 = vsub.f32 %v1730, %v2415
    %v2417 = vand.u32 %v2416, 4294901760
    %2418 = vmatprep.subr.mxu0 %v2417
    %v2419 = vand.u32 %v1729, 4294901760
    %v2420 = vsub.f32 %v1729, %v2419
    %v2421 = vand.u32 %v2420, 4294901760
    %2422 = vmatpush1.msra.mxu0 %v2421
    %v2423 = vand.u32 %v1733, 4294901760
    %v2424 = vsub.f32 %v1733, %v2423
    %v2425 = vand.u32 %v2424, 4294901760
    %2426 = vmatprep.subr.mxu0 %v2425
    %v2427 = vand.u32 %v1732, 4294901760
    %v2428 = vsub.f32 %v1732, %v2427
    %v2429 = vand.u32 %v2428, 4294901760
    %2430 = vmatpush1.msra.mxu0 %v2429
    %v2431 = vand.u32 %v1736, 4294901760
    %v2432 = vsub.f32 %v1736, %v2431
    %v2433 = vand.u32 %v2432, 4294901760
    %2434 = vmatprep.subr.mxu0 %v2433
    %v2435 = vand.u32 %v1735, 4294901760
    %v2436 = vsub.f32 %v1735, %v2435
    %v2437 = vand.u32 %v2436, 4294901760
    %2438 = vmatpush1.msra.mxu0 %v2437
    %v2439 = vand.u32 %v1739, 4294901760
    %v2440 = vsub.f32 %v1739, %v2439
    %v2441 = vand.u32 %v2440, 4294901760
    %2442 = vmatprep.subr.mxu0 %v2441
    %v2443 = vand.u32 %v1738, 4294901760
    %v2444 = vsub.f32 %v1738, %v2443
    %v2445 = vand.u32 %v2444, 4294901760
    %2446 = vmatpush1.msra.mxu0 %v2445
    %v2447 = vand.u32 %v1742, 4294901760
    %v2448 = vsub.f32 %v1742, %v2447
    %v2449 = vand.u32 %v2448, 4294901760
    %2450 = vmatprep.subr.mxu0 %v2449
    %v2451 = vand.u32 %v1741, 4294901760
    %v2452 = vsub.f32 %v1741, %v2451
    %v2453 = vand.u32 %v2452, 4294901760
    %2454 = vmatpush1.msra.mxu0 %v2453
    %v2455 = vand.u32 %v1745, 4294901760
    %v2456 = vsub.f32 %v1745, %v2455
    %v2457 = vand.u32 %v2456, 4294901760
    %2458 = vmatprep.subr.mxu0 %v2457
    %v2459 = vand.u32 %v1744, 4294901760
    %v2460 = vsub.f32 %v1744, %v2459
    %v2461 = vand.u32 %v2460, 4294901760
    %2462 = vmatpush1.msra.mxu0 %v2461
    %v2463 = vand.u32 %v1748, 4294901760
    %v2464 = vsub.f32 %v1748, %v2463
    %v2465 = vand.u32 %v2464, 4294901760
    %2466 = vmatprep.subr.mxu0 %v2465
    %v2467 = vand.u32 %v1747, 4294901760
    %v2468 = vsub.f32 %v1747, %v2467
    %v2469 = vand.u32 %v2468, 4294901760
    %2470 = vmatpush1.msra.mxu0 %v2469
    %v2471 = vand.u32 %v1751, 4294901760
    %v2472 = vsub.f32 %v1751, %v2471
    %v2473 = vand.u32 %v2472, 4294901760
    %2474 = vmatprep.subr.mxu0 %v2473
    %v2475 = vand.u32 %v1750, 4294901760
    %v2476 = vsub.f32 %v1750, %v2475
    %v2477 = vand.u32 %v2476, 4294901760
    %2478 = vmatpush1.msra.mxu0 %v2477
    %v2479 = vand.u32 %v1754, 4294901760
    %v2480 = vsub.f32 %v1754, %v2479
    %v2481 = vand.u32 %v2480, 4294901760
    %2482 = vmatprep.subr.mxu0 %v2481
    %v2483 = vand.u32 %v1753, 4294901760
    %v2484 = vsub.f32 %v1753, %v2483
    %v2485 = vand.u32 %v2484, 4294901760
    %2486 = vmatpush1.msra.mxu0 %v2485
    %v2487 = vand.u32 %v1757, 4294901760
    %v2488 = vsub.f32 %v1757, %v2487
    %v2489 = vand.u32 %v2488, 4294901760
    %2490 = vmatprep.subr.mxu0 %v2489
    %v2491 = vand.u32 %v1756, 4294901760
    %v2492 = vsub.f32 %v1756, %v2491
    %v2493 = vand.u32 %v2492, 4294901760
    %2494 = vmatpush1.msra.mxu0 %v2493
    %v2495 = vand.u32 %v1760, 4294901760
    %v2496 = vsub.f32 %v1760, %v2495
    %v2497 = vand.u32 %v2496, 4294901760
    %2498 = vmatprep.subr.mxu0 %v2497
    %v2499 = vand.u32 %v1759, 4294901760
    %v2500 = vsub.f32 %v1759, %v2499
    %v2501 = vand.u32 %v2500, 4294901760
    %2502 = vmatpush1.msra.mxu0 %v2501
    %v2503 = vand.u32 %v1763, 4294901760
    %v2504 = vsub.f32 %v1763, %v2503
    %v2505 = vand.u32 %v2504, 4294901760
    %2506 = vmatprep.subr.mxu0 %v2505
    %v2507 = vand.u32 %v1762, 4294901760
    %v2508 = vsub.f32 %v1762, %v2507
    %v2509 = vand.u32 %v2508, 4294901760
    %2510 = vmatpush1.msra.mxu0 %v2509
    %2511 = vmatprep.subr.mxu0 0.0
    %2512 = vmatpush1.msra.mxu0 0.0
    %2513 = vmatprep.subr.mxu0 0.0
    %2514 = vmatpush1.msra.mxu0 0.0
    %2515 = vmatprep.subr.mxu0 0.0
    %2516 = vmatpush1.msra.mxu0 0.0
    %2517 = vmatprep.subr.mxu0 0.0
    %2518 = vmatpush1.msra.mxu0 0.0
    %2519 = vmatprep.subr.mxu0 0.0
    %2520 = vmatpush1.msra.mxu0 0.0
    %2521 = vmatprep.subr.mxu0 0.0
    %2522 = vmatpush1.msra.mxu0 0.0
    %2523 = vmatprep.subr.mxu0 0.0
    %2524 = vmatpush1.msra.mxu0 0.0
    %2525 = vmatprep.subr.mxu0 0.0
    %2526 = vmatpush1.msra.mxu0 0.0
    %2527 = vmatprep.subr.mxu0 0.0
    %2528 = vmatpush1.msra.mxu0 0.0
    %2529 = vmatprep.subr.mxu0 0.0
    %2530 = vmatpush1.msra.mxu0 0.0
    %2531 = vmatprep.subr.mxu0 0.0
    %2532 = vmatpush1.msra.mxu0 0.0
    %2533 = vmatprep.subr.mxu0 0.0
    %2534 = vmatpush1.msra.mxu0 0.0
    %2535 = vmatprep.subr.mxu0 0.0
    %2536 = vmatpush1.msra.mxu0 0.0
    %2537 = vmatprep.subr.mxu0 0.0
    %2538 = vmatpush1.msra.mxu0 0.0
    %2539 = vmatprep.subr.mxu0 0.0
    %2540 = vmatpush1.msra.mxu0 0.0
    %2541 = vmatprep.subr.mxu0 0.0
    %2542 = vmatpush1.msra.mxu0 0.0
    %2543 = vmatprep.mubr.f32.mxu0 0.0
    %v2544 = vand.u32 %v79, 4294901760
    %2545 = vmatmul.mubr.f32.gmra.mrb[0].mxu0 %v2544
    %v2546 = vpop.f32.mrb[0].mxu0
    %v2547 = vadd.f32 %v2370, %v2546
    %v2548 = vpop.f32.mrb[0].mxu0
    %v2549 = vadd.f32 %v2372, %v2548
    %2550 = vmatprep.mubr.f32.mxu0 0.0
    %v2551 = vand.u32 %v80, 4294901760
    %2552 = vmatmul.mubr.f32.gmra.mrb[0].mxu0 %v2551
    %v2553 = vpop.f32.mrb[0].mxu0
    %v2554 = vadd.f32 %v2379, %v2553
    %v2555 = vpop.f32.mrb[0].mxu0
    %v2556 = vadd.f32 %v2381, %v2555
    %2557 = vdwg.mxu0
    %v2558 = vand.u32 %v1718, 4294901760
    %2559 = vmatprep.subr.mxu0 %v2558
    %v2560 = vand.u32 %v1717, 4294901760
    %2561 = vmatpush1.msra.mxu0 %v2560
    %v2562 = vand.u32 %v1721, 4294901760
    %2563 = vmatprep.subr.mxu0 %v2562
    %v2564 = vand.u32 %v1720, 4294901760
    %2565 = vmatpush1.msra.mxu0 %v2564
    %v2566 = vand.u32 %v1724, 4294901760
    %2567 = vmatprep.subr.mxu0 %v2566
    %v2568 = vand.u32 %v1723, 4294901760
    %2569 = vmatpush1.msra.mxu0 %v2568
    %v2570 = vand.u32 %v1727, 4294901760
    %2571 = vmatprep.subr.mxu0 %v2570
    %v2572 = vand.u32 %v1726, 4294901760
    %2573 = vmatpush1.msra.mxu0 %v2572
    %v2574 = vand.u32 %v1730, 4294901760
    %2575 = vmatprep.subr.mxu0 %v2574
    %v2576 = vand.u32 %v1729, 4294901760
    %2577 = vmatpush1.msra.mxu0 %v2576
    %v2578 = vand.u32 %v1733, 4294901760
    %2579 = vmatprep.subr.mxu0 %v2578
    %v2580 = vand.u32 %v1732, 4294901760
    %2581 = vmatpush1.msra.mxu0 %v2580
    %v2582 = vand.u32 %v1736, 4294901760
    %2583 = vmatprep.subr.mxu0 %v2582
    %v2584 = vand.u32 %v1735, 4294901760
    %2585 = vmatpush1.msra.mxu0 %v2584
    %v2586 = vand.u32 %v1739, 4294901760
    %2587 = vmatprep.subr.mxu0 %v2586
    %v2588 = vand.u32 %v1738, 4294901760
    %2589 = vmatpush1.msra.mxu0 %v2588
    %v2590 = vand.u32 %v1742, 4294901760
    %2591 = vmatprep.subr.mxu0 %v2590
    %v2592 = vand.u32 %v1741, 4294901760
    %2593 = vmatpush1.msra.mxu0 %v2592
    %v2594 = vand.u32 %v1745, 4294901760
    %2595 = vmatprep.subr.mxu0 %v2594
    %v2596 = vand.u32 %v1744, 4294901760
    %2597 = vmatpush1.msra.mxu0 %v2596
    %v2598 = vand.u32 %v1748, 4294901760
    %2599 = vmatprep.subr.mxu0 %v2598
    %v2600 = vand.u32 %v1747, 4294901760
    %2601 = vmatpush1.msra.mxu0 %v2600
    %v2602 = vand.u32 %v1751, 4294901760
    %2603 = vmatprep.subr.mxu0 %v2602
    %v2604 = vand.u32 %v1750, 4294901760
    %2605 = vmatpush1.msra.mxu0 %v2604
    %v2606 = vand.u32 %v1754, 4294901760
    %2607 = vmatprep.subr.mxu0 %v2606
    %v2608 = vand.u32 %v1753, 4294901760
    %2609 = vmatpush1.msra.mxu0 %v2608
    %v2610 = vand.u32 %v1757, 4294901760
    %2611 = vmatprep.subr.mxu0 %v2610
    %v2612 = vand.u32 %v1756, 4294901760
    %2613 = vmatpush1.msra.mxu0 %v2612
    %v2614 = vand.u32 %v1760, 4294901760
    %2615 = vmatprep.subr.mxu0 %v2614
    %v2616 = vand.u32 %v1759, 4294901760
    %2617 = vmatpush1.msra.mxu0 %v2616
    %v2618 = vand.u32 %v1763, 4294901760
    %2619 = vmatprep.subr.mxu0 %v2618
    %v2620 = vand.u32 %v1762, 4294901760
    %2621 = vmatpush1.msra.mxu0 %v2620
    %2622 = vmatprep.subr.mxu0 0.0
    %2623 = vmatpush1.msra.mxu0 0.0
    %2624 = vmatprep.subr.mxu0 0.0
    %2625 = vmatpush1.msra.mxu0 0.0
    %2626 = vmatprep.subr.mxu0 0.0
    %2627 = vmatpush1.msra.mxu0 0.0
    %2628 = vmatprep.subr.mxu0 0.0
    %2629 = vmatpush1.msra.mxu0 0.0
    %2630 = vmatprep.subr.mxu0 0.0
    %2631 = vmatpush1.msra.mxu0 0.0
    %2632 = vmatprep.subr.mxu0 0.0
    %2633 = vmatpush1.msra.mxu0 0.0
    %2634 = vmatprep.subr.mxu0 0.0
    %2635 = vmatpush1.msra.mxu0 0.0
    %2636 = vmatprep.subr.mxu0 0.0
    %2637 = vmatpush1.msra.mxu0 0.0
    %2638 = vmatprep.subr.mxu0 0.0
    %2639 = vmatpush1.msra.mxu0 0.0
    %2640 = vmatprep.subr.mxu0 0.0
    %2641 = vmatpush1.msra.mxu0 0.0
    %2642 = vmatprep.subr.mxu0 0.0
    %2643 = vmatpush1.msra.mxu0 0.0
    %2644 = vmatprep.subr.mxu0 0.0
    %2645 = vmatpush1.msra.mxu0 0.0
    %2646 = vmatprep.subr.mxu0 0.0
    %2647 = vmatpush1.msra.mxu0 0.0
    %2648 = vmatprep.subr.mxu0 0.0
    %2649 = vmatpush1.msra.mxu0 0.0
    %2650 = vmatprep.subr.mxu0 0.0
    %2651 = vmatpush1.msra.mxu0 0.0
    %2652 = vmatprep.subr.mxu0 0.0
    %2653 = vmatpush1.msra.mxu0 0.0
    %2654 = vmatprep.mubr.f32.mxu0 0.0
    %v2655 = vand.u32 %v79, 4294901760
    %2656 = vmatmul.mubr.f32.gmra.mrb[0].mxu0 %v2655
    %v2657 = vpop.f32.mrb[0].mxu0
    %v2658 = vadd.f32 %v2547, %v2657
    %v2659 = vpop.f32.mrb[0].mxu0
    %v2660 = vadd.f32 %v2549, %v2659
    %2661 = vmatprep.mubr.f32.mxu0 0.0
    %v2662 = vand.u32 %v80, 4294901760
    %2663 = vmatmul.mubr.f32.gmra.mrb[0].mxu0 %v2662
    %v2664 = vpop.f32.mrb[0].mxu0
    %v2665 = vadd.f32 %v2554, %v2664
    %v2666 = vpop.f32.mrb[0].mxu0
    %v2667 = vadd.f32 %v2556, %v2666
    %2668 = vdwg.mxu0
    %2669 = vmatprep.subr.mxu0 0.0
    %v2670 = vand.u32 %v1719, 4294901760
    %2671 = vmatpush1.msra.mxu0 %v2670
    %2672 = vmatprep.subr.mxu0 0.0
    %v2673 = vand.u32 %v1722, 4294901760
    %2674 = vmatpush1.msra.mxu0 %v2673
    %2675 = vmatprep.subr.mxu0 0.0
    %v2676 = vand.u32 %v1725, 4294901760
    %2677 = vmatpush1.msra.mxu0 %v2676
    %2678 = vmatprep.subr.mxu0 0.0
    %v2679 = vand.u32 %v1728, 4294901760
    %2680 = vmatpush1.msra.mxu0 %v2679
    %2681 = vmatprep.subr.mxu0 0.0
    %v2682 = vand.u32 %v1731, 4294901760
    %2683 = vmatpush1.msra.mxu0 %v2682
    %2684 = vmatprep.subr.mxu0 0.0
    %v2685 = vand.u32 %v1734, 4294901760
    %2686 = vmatpush1.msra.mxu0 %v2685
    %2687 = vmatprep.subr.mxu0 0.0
    %v2688 = vand.u32 %v1737, 4294901760
    %2689 = vmatpush1.msra.mxu0 %v2688
    %2690 = vmatprep.subr.mxu0 0.0
    %v2691 = vand.u32 %v1740, 4294901760
    %2692 = vmatpush1.msra.mxu0 %v2691
    %2693 = vmatprep.subr.mxu0 0.0
    %v2694 = vand.u32 %v1743, 4294901760
    %2695 = vmatpush1.msra.mxu0 %v2694
    %2696 = vmatprep.subr.mxu0 0.0
    %v2697 = vand.u32 %v1746, 4294901760
    %2698 = vmatpush1.msra.mxu0 %v2697
    %2699 = vmatprep.subr.mxu0 0.0
    %v2700 = vand.u32 %v1749, 4294901760
    %2701 = vmatpush1.msra.mxu0 %v2700
    %2702 = vmatprep.subr.mxu0 0.0
    %v2703 = vand.u32 %v1752, 4294901760
    %2704 = vmatpush1.msra.mxu0 %v2703
    %2705 = vmatprep.subr.mxu0 0.0
    %v2706 = vand.u32 %v1755, 4294901760
    %2707 = vmatpush1.msra.mxu0 %v2706
    %2708 = vmatprep.subr.mxu0 0.0
    %v2709 = vand.u32 %v1758, 4294901760
    %2710 = vmatpush1.msra.mxu0 %v2709
    %2711 = vmatprep.subr.mxu0 0.0
    %v2712 = vand.u32 %v1761, 4294901760
    %2713 = vmatpush1.msra.mxu0 %v2712
    %2714 = vmatprep.subr.mxu0 0.0
    %v2715 = vand.u32 %v1764, 4294901760
    %2716 = vmatpush1.msra.mxu0 %v2715
    %2717 = vmatprep.subr.mxu0 0.0
    %2718 = vmatpush1.msra.mxu0 0.0
    %2719 = vmatprep.subr.mxu0 0.0
    %2720 = vmatpush1.msra.mxu0 0.0
    %2721 = vmatprep.subr.mxu0 0.0
    %2722 = vmatpush1.msra.mxu0 0.0
    %2723 = vmatprep.subr.mxu0 0.0
    %2724 = vmatpush1.msra.mxu0 0.0
    %2725 = vmatprep.subr.mxu0 0.0
    %2726 = vmatpush1.msra.mxu0 0.0
    %2727 = vmatprep.subr.mxu0 0.0
    %2728 = vmatpush1.msra.mxu0 0.0
    %2729 = vmatprep.subr.mxu0 0.0
    %2730 = vmatpush1.msra.mxu0 0.0
    %2731 = vmatprep.subr.mxu0 0.0
    %2732 = vmatpush1.msra.mxu0 0.0
    %2733 = vmatprep.subr.mxu0 0.0
    %2734 = vmatpush1.msra.mxu0 0.0
    %2735 = vmatprep.subr.mxu0 0.0
    %2736 = vmatpush1.msra.mxu0 0.0
    %2737 = vmatprep.subr.mxu0 0.0
    %2738 = vmatpush1.msra.mxu0 0.0
    %2739 = vmatprep.subr.mxu0 0.0
    %2740 = vmatpush1.msra.mxu0 0.0
    %2741 = vmatprep.subr.mxu0 0.0
    %2742 = vmatpush1.msra.mxu0 0.0
    %2743 = vmatprep.subr.mxu0 0.0
    %2744 = vmatpush1.msra.mxu0 0.0
    %2745 = vmatprep.subr.mxu0 0.0
    %2746 = vmatpush1.msra.mxu0 0.0
    %2747 = vmatprep.subr.mxu0 0.0
    %2748 = vmatpush1.msra.mxu0 0.0
    %2749 = vmatprep.mubr.f32.mxu0 0.0
    %v2750 = vand.u32 %v79, 4294901760
    %v2751 = vsub.f32 %v79, %v2750
    %v2752 = vand.u32 %v2751, 4294901760
    %v2753 = vsub.f32 %v2751, %v2752
    %v2754 = vand.u32 %v2753, 4294901760
    %2755 = vmatmul.mubr.f32.gmra.mrb[0].mxu0 %v2754
    %v2756 = vpop.f32.mrb[0].mxu0
    %v2757 = vadd.f32 0.0, %v2756
    %v2758 = vpop.f32.mrb[0].mxu0
    %2759 = vmatprep.mubr.f32.mxu0 0.0
    %v2760 = vand.u32 %v80, 4294901760
    %v2761 = vsub.f32 %v80, %v2760
    %v2762 = vand.u32 %v2761, 4294901760
    %v2763 = vsub.f32 %v2761, %v2762
    %v2764 = vand.u32 %v2763, 4294901760
    %2765 = vmatmul.mubr.f32.gmra.mrb[0].mxu0 %v2764
    %v2766 = vpop.f32.mrb[0].mxu0
    %v2767 = vadd.f32 0.0, %v2766
    %v2768 = vpop.f32.mrb[0].mxu0
    %2769 = vdwg.mxu0
    %2770 = vmatprep.subr.mxu0 0.0
    %v2771 = vand.u32 %v1719, 4294901760
    %v2772 = vsub.f32 %v1719, %v2771
    %v2773 = vand.u32 %v2772, 4294901760
    %v2774 = vsub.f32 %v2772, %v2773
    %v2775 = vand.u32 %v2774, 4294901760
    %2776 = vmatpush1.msra.mxu0 %v2775
    %2777 = vmatprep.subr.mxu0 0.0
    %v2778 = vand.u32 %v1722, 4294901760
    %v2779 = vsub.f32 %v1722, %v2778
    %v2780 = vand.u32 %v2779, 4294901760
    %v2781 = vsub.f32 %v2779, %v2780
    %v2782 = vand.u32 %v2781, 4294901760
    %2783 = vmatpush1.msra.mxu0 %v2782
    %2784 = vmatprep.subr.mxu0 0.0
    %v2785 = vand.u32 %v1725, 4294901760
    %v2786 = vsub.f32 %v1725, %v2785
    %v2787 = vand.u32 %v2786, 4294901760
    %v2788 = vsub.f32 %v2786, %v2787
    %v2789 = vand.u32 %v2788, 4294901760
    %2790 = vmatpush1.msra.mxu0 %v2789
    %2791 = vmatprep.subr.mxu0 0.0
    %v2792 = vand.u32 %v1728, 4294901760
    %v2793 = vsub.f32 %v1728, %v2792
    %v2794 = vand.u32 %v2793, 4294901760
    %v2795 = vsub.f32 %v2793, %v2794
    %v2796 = vand.u32 %v2795, 4294901760
    %2797 = vmatpush1.msra.mxu0 %v2796
    %2798 = vmatprep.subr.mxu0 0.0
    %v2799 = vand.u32 %v1731, 4294901760
    %v2800 = vsub.f32 %v1731, %v2799
    %v2801 = vand.u32 %v2800, 4294901760
    %v2802 = vsub.f32 %v2800, %v2801
    %v2803 = vand.u32 %v2802, 4294901760
    %2804 = vmatpush1.msra.mxu0 %v2803
    %2805 = vmatprep.subr.mxu0 0.0
    %v2806 = vand.u32 %v1734, 4294901760
    %v2807 = vsub.f32 %v1734, %v2806
    %v2808 = vand.u32 %v2807, 4294901760
    %v2809 = vsub.f32 %v2807, %v2808
    %v2810 = vand.u32 %v2809, 4294901760
    %2811 = vmatpush1.msra.mxu0 %v2810
    %2812 = vmatprep.subr.mxu0 0.0
    %v2813 = vand.u32 %v1737, 4294901760
    %v2814 = vsub.f32 %v1737, %v2813
    %v2815 = vand.u32 %v2814, 4294901760
    %v2816 = vsub.f32 %v2814, %v2815
    %v2817 = vand.u32 %v2816, 4294901760
    %2818 = vmatpush1.msra.mxu0 %v2817
    %2819 = vmatprep.subr.mxu0 0.0
    %v2820 = vand.u32 %v1740, 4294901760
    %v2821 = vsub.f32 %v1740, %v2820
    %v2822 = vand.u32 %v2821, 4294901760
    %v2823 = vsub.f32 %v2821, %v2822
    %v2824 = vand.u32 %v2823, 4294901760
    %2825 = vmatpush1.msra.mxu0 %v2824
    %2826 = vmatprep.subr.mxu0 0.0
    %v2827 = vand.u32 %v1743, 4294901760
    %v2828 = vsub.f32 %v1743, %v2827
    %v2829 = vand.u32 %v2828, 4294901760
    %v2830 = vsub.f32 %v2828, %v2829
    %v2831 = vand.u32 %v2830, 4294901760
    %2832 = vmatpush1.msra.mxu0 %v2831
    %2833 = vmatprep.subr.mxu0 0.0
    %v2834 = vand.u32 %v1746, 4294901760
    %v2835 = vsub.f32 %v1746, %v2834
    %v2836 = vand.u32 %v2835, 4294901760
    %v2837 = vsub.f32 %v2835, %v2836
    %v2838 = vand.u32 %v2837, 4294901760
    %2839 = vmatpush1.msra.mxu0 %v2838
    %2840 = vmatprep.subr.mxu0 0.0
    %v2841 = vand.u32 %v1749, 4294901760
    %v2842 = vsub.f32 %v1749, %v2841
    %v2843 = vand.u32 %v2842, 4294901760
    %v2844 = vsub.f32 %v2842, %v2843
    %v2845 = vand.u32 %v2844, 4294901760
    %2846 = vmatpush1.msra.mxu0 %v2845
    %2847 = vmatprep.subr.mxu0 0.0
    %v2848 = vand.u32 %v1752, 4294901760
    %v2849 = vsub.f32 %v1752, %v2848
    %v2850 = vand.u32 %v2849, 4294901760
    %v2851 = vsub.f32 %v2849, %v2850
    %v2852 = vand.u32 %v2851, 4294901760
    %2853 = vmatpush1.msra.mxu0 %v2852
    %2854 = vmatprep.subr.mxu0 0.0
    %v2855 = vand.u32 %v1755, 4294901760
    %v2856 = vsub.f32 %v1755, %v2855
    %v2857 = vand.u32 %v2856, 4294901760
    %v2858 = vsub.f32 %v2856, %v2857
    %v2859 = vand.u32 %v2858, 4294901760
    %2860 = vmatpush1.msra.mxu0 %v2859
    %2861 = vmatprep.subr.mxu0 0.0
    %v2862 = vand.u32 %v1758, 4294901760
    %v2863 = vsub.f32 %v1758, %v2862
    %v2864 = vand.u32 %v2863, 4294901760
    %v2865 = vsub.f32 %v2863, %v2864
    %v2866 = vand.u32 %v2865, 4294901760
    %2867 = vmatpush1.msra.mxu0 %v2866
    %2868 = vmatprep.subr.mxu0 0.0
    %v2869 = vand.u32 %v1761, 4294901760
    %v2870 = vsub.f32 %v1761, %v2869
    %v2871 = vand.u32 %v2870, 4294901760
    %v2872 = vsub.f32 %v2870, %v2871
    %v2873 = vand.u32 %v2872, 4294901760
    %2874 = vmatpush1.msra.mxu0 %v2873
    %2875 = vmatprep.subr.mxu0 0.0
    %v2876 = vand.u32 %v1764, 4294901760
    %v2877 = vsub.f32 %v1764, %v2876
    %v2878 = vand.u32 %v2877, 4294901760
    %v2879 = vsub.f32 %v2877, %v2878
    %v2880 = vand.u32 %v2879, 4294901760
    %2881 = vmatpush1.msra.mxu0 %v2880
    %2882 = vmatprep.subr.mxu0 0.0
    %2883 = vmatpush1.msra.mxu0 0.0
    %2884 = vmatprep.subr.mxu0 0.0
    %2885 = vmatpush1.msra.mxu0 0.0
    %2886 = vmatprep.subr.mxu0 0.0
    %2887 = vmatpush1.msra.mxu0 0.0
    %2888 = vmatprep.subr.mxu0 0.0
    %2889 = vmatpush1.msra.mxu0 0.0
    %2890 = vmatprep.subr.mxu0 0.0
    %2891 = vmatpush1.msra.mxu0 0.0
    %2892 = vmatprep.subr.mxu0 0.0
    %2893 = vmatpush1.msra.mxu0 0.0
    %2894 = vmatprep.subr.mxu0 0.0
    %2895 = vmatpush1.msra.mxu0 0.0
    %2896 = vmatprep.subr.mxu0 0.0
    %2897 = vmatpush1.msra.mxu0 0.0
    %2898 = vmatprep.subr.mxu0 0.0
    %2899 = vmatpush1.msra.mxu0 0.0
    %2900 = vmatprep.subr.mxu0 0.0
    %2901 = vmatpush1.msra.mxu0 0.0
    %2902 = vmatprep.subr.mxu0 0.0
    %2903 = vmatpush1.msra.mxu0 0.0
    %2904 = vmatprep.subr.mxu0 0.0
    %2905 = vmatpush1.msra.mxu0 0.0
    %2906 = vmatprep.subr.mxu0 0.0
    %2907 = vmatpush1.msra.mxu0 0.0
    %2908 = vmatprep.subr.mxu0 0.0
    %2909 = vmatpush1.msra.mxu0 0.0
    %2910 = vmatprep.subr.mxu0 0.0
    %2911 = vmatpush1.msra.mxu0 0.0
    %2912 = vmatprep.subr.mxu0 0.0
    %2913 = vmatpush1.msra.mxu0 0.0
    %2914 = vmatprep.mubr.f32.mxu0 0.0
    %v2915 = vand.u32 %v79, 4294901760
    %2916 = vmatmul.mubr.f32.gmra.mrb[0].mxu0 %v2915
    %v2917 = vpop.f32.mrb[0].mxu0
    %v2918 = vadd.f32 %v2757, %v2917
    %v2919 = vpop.f32.mrb[0].mxu0
    %2920 = vmatprep.mubr.f32.mxu0 0.0
    %v2921 = vand.u32 %v80, 4294901760
    %2922 = vmatmul.mubr.f32.gmra.mrb[0].mxu0 %v2921
    %v2923 = vpop.f32.mrb[0].mxu0
    %v2924 = vadd.f32 %v2767, %v2923
    %v2925 = vpop.f32.mrb[0].mxu0
    %2926 = vdwg.mxu0
    %2927 = vmatprep.subr.mxu0 0.0
    %v2928 = vand.u32 %v1719, 4294901760
    %v2929 = vsub.f32 %v1719, %v2928
    %2930 = vmatpush1.msra.mxu0 %v2929
    %2931 = vmatprep.subr.mxu0 0.0
    %v2932 = vand.u32 %v1722, 4294901760
    %v2933 = vsub.f32 %v1722, %v2932
    %2934 = vmatpush1.msra.mxu0 %v2933
    %2935 = vmatprep.subr.mxu0 0.0
    %v2936 = vand.u32 %v1725, 4294901760
    %v2937 = vsub.f32 %v1725, %v2936
    %2938 = vmatpush1.msra.mxu0 %v2937
    %2939 = vmatprep.subr.mxu0 0.0
    %v2940 = vand.u32 %v1728, 4294901760
    %v2941 = vsub.f32 %v1728, %v2940
    %2942 = vmatpush1.msra.mxu0 %v2941
    %2943 = vmatprep.subr.mxu0 0.0
    %v2944 = vand.u32 %v1731, 4294901760
    %v2945 = vsub.f32 %v1731, %v2944
    %2946 = vmatpush1.msra.mxu0 %v2945
    %2947 = vmatprep.subr.mxu0 0.0
    %v2948 = vand.u32 %v1734, 4294901760
    %v2949 = vsub.f32 %v1734, %v2948
    %2950 = vmatpush1.msra.mxu0 %v2949
    %2951 = vmatprep.subr.mxu0 0.0
    %v2952 = vand.u32 %v1737, 4294901760
    %v2953 = vsub.f32 %v1737, %v2952
    %2954 = vmatpush1.msra.mxu0 %v2953
    %2955 = vmatprep.subr.mxu0 0.0
    %v2956 = vand.u32 %v1740, 4294901760
    %v2957 = vsub.f32 %v1740, %v2956
    %2958 = vmatpush1.msra.mxu0 %v2957
    %2959 = vmatprep.subr.mxu0 0.0
    %v2960 = vand.u32 %v1743, 4294901760
    %v2961 = vsub.f32 %v1743, %v2960
    %2962 = vmatpush1.msra.mxu0 %v2961
    %2963 = vmatprep.subr.mxu0 0.0
    %v2964 = vand.u32 %v1746, 4294901760
    %v2965 = vsub.f32 %v1746, %v2964
    %2966 = vmatpush1.msra.mxu0 %v2965
    %2967 = vmatprep.subr.mxu0 0.0
    %v2968 = vand.u32 %v1749, 4294901760
    %v2969 = vsub.f32 %v1749, %v2968
    %2970 = vmatpush1.msra.mxu0 %v2969
    %2971 = vmatprep.subr.mxu0 0.0
    %v2972 = vand.u32 %v1752, 4294901760
    %v2973 = vsub.f32 %v1752, %v2972
    %2974 = vmatpush1.msra.mxu0 %v2973
    %2975 = vmatprep.subr.mxu0 0.0
    %v2976 = vand.u32 %v1755, 4294901760
    %v2977 = vsub.f32 %v1755, %v2976
    %2978 = vmatpush1.msra.mxu0 %v2977
    %2979 = vmatprep.subr.mxu0 0.0
    %v2980 = vand.u32 %v1758, 4294901760
    %v2981 = vsub.f32 %v1758, %v2980
    %2982 = vmatpush1.msra.mxu0 %v2981
    %2983 = vmatprep.subr.mxu0 0.0
    %v2984 = vand.u32 %v1761, 4294901760
    %v2985 = vsub.f32 %v1761, %v2984
    %2986 = vmatpush1.msra.mxu0 %v2985
    %2987 = vmatprep.subr.mxu0 0.0
    %v2988 = vand.u32 %v1764, 4294901760
    %v2989 = vsub.f32 %v1764, %v2988
    %2990 = vmatpush1.msra.mxu0 %v2989
    %2991 = vmatprep.subr.mxu0 0.0
    %2992 = vmatpush1.msra.mxu0 0.0
    %2993 = vmatprep.subr.mxu0 0.0
    %2994 = vmatpush1.msra.mxu0 0.0
    %2995 = vmatprep.subr.mxu0 0.0
    %2996 = vmatpush1.msra.mxu0 0.0
    %2997 = vmatprep.subr.mxu0 0.0
    %2998 = vmatpush1.msra.mxu0 0.0
    %2999 = vmatprep.subr.mxu0 0.0
    %3000 = vmatpush1.msra.mxu0 0.0
    %3001 = vmatprep.subr.mxu0 0.0
    %3002 = vmatpush1.msra.mxu0 0.0
    %3003 = vmatprep.subr.mxu0 0.0
    %3004 = vmatpush1.msra.mxu0 0.0
    %3005 = vmatprep.subr.mxu0 0.0
    %3006 = vmatpush1.msra.mxu0 0.0
    %3007 = vmatprep.subr.mxu0 0.0
    %3008 = vmatpush1.msra.mxu0 0.0
    %3009 = vmatprep.subr.mxu0 0.0
    %3010 = vmatpush1.msra.mxu0 0.0
    %3011 = vmatprep.subr.mxu0 0.0
    %3012 = vmatpush1.msra.mxu0 0.0
    %3013 = vmatprep.subr.mxu0 0.0
    %3014 = vmatpush1.msra.mxu0 0.0
    %3015 = vmatprep.subr.mxu0 0.0
    %3016 = vmatpush1.msra.mxu0 0.0
    %3017 = vmatprep.subr.mxu0 0.0
    %3018 = vmatpush1.msra.mxu0 0.0
    %3019 = vmatprep.subr.mxu0 0.0
    %3020 = vmatpush1.msra.mxu0 0.0
    %3021 = vmatprep.subr.mxu0 0.0
    %3022 = vmatpush1.msra.mxu0 0.0
    %3023 = vmatprep.mubr.f32.mxu0 0.0
    %v3024 = vand.u32 %v79, 4294901760
    %v3025 = vsub.f32 %v79, %v3024
    %3026 = vmatmul.mubr.f32.gmra.mrb[0].mxu0 %v3025
    %v3027 = vpop.f32.mrb[0].mxu0
    %v3028 = vadd.f32 %v2918, %v3027
    %v3029 = vpop.f32.mrb[0].mxu0
    %3030 = vmatprep.mubr.f32.mxu0 0.0
    %v3031 = vand.u32 %v80, 4294901760
    %v3032 = vsub.f32 %v80, %v3031
    %3033 = vmatmul.mubr.f32.gmra.mrb[0].mxu0 %v3032
    %v3034 = vpop.f32.mrb[0].mxu0
    %v3035 = vadd.f32 %v2924, %v3034
    %v3036 = vpop.f32.mrb[0].mxu0
    %3037 = vdwg.mxu0
    %3038 = vmatprep.subr.mxu0 0.0
    %v3039 = vand.u32 %v1719, 4294901760
    %3040 = vmatpush1.msra.mxu0 %v3039
    %3041 = vmatprep.subr.mxu0 0.0
    %v3042 = vand.u32 %v1722, 4294901760
    %3043 = vmatpush1.msra.mxu0 %v3042
    %3044 = vmatprep.subr.mxu0 0.0
    %v3045 = vand.u32 %v1725, 4294901760
    %3046 = vmatpush1.msra.mxu0 %v3045
    %3047 = vmatprep.subr.mxu0 0.0
    %v3048 = vand.u32 %v1728, 4294901760
    %3049 = vmatpush1.msra.mxu0 %v3048
    %3050 = vmatprep.subr.mxu0 0.0
    %v3051 = vand.u32 %v1731, 4294901760
    %3052 = vmatpush1.msra.mxu0 %v3051
    %3053 = vmatprep.subr.mxu0 0.0
    %v3054 = vand.u32 %v1734, 4294901760
    %3055 = vmatpush1.msra.mxu0 %v3054
    %3056 = vmatprep.subr.mxu0 0.0
    %v3057 = vand.u32 %v1737, 4294901760
    %3058 = vmatpush1.msra.mxu0 %v3057
    %3059 = vmatprep.subr.mxu0 0.0
    %v3060 = vand.u32 %v1740, 4294901760
    %3061 = vmatpush1.msra.mxu0 %v3060
    %3062 = vmatprep.subr.mxu0 0.0
    %v3063 = vand.u32 %v1743, 4294901760
    %3064 = vmatpush1.msra.mxu0 %v3063
    %3065 = vmatprep.subr.mxu0 0.0
    %v3066 = vand.u32 %v1746, 4294901760
    %3067 = vmatpush1.msra.mxu0 %v3066
    %3068 = vmatprep.subr.mxu0 0.0
    %v3069 = vand.u32 %v1749, 4294901760
    %3070 = vmatpush1.msra.mxu0 %v3069
    %3071 = vmatprep.subr.mxu0 0.0
    %v3072 = vand.u32 %v1752, 4294901760
    %3073 = vmatpush1.msra.mxu0 %v3072
    %3074 = vmatprep.subr.mxu0 0.0
    %v3075 = vand.u32 %v1755, 4294901760
    %3076 = vmatpush1.msra.mxu0 %v3075
    %3077 = vmatprep.subr.mxu0 0.0
    %v3078 = vand.u32 %v1758, 4294901760
    %3079 = vmatpush1.msra.mxu0 %v3078
    %3080 = vmatprep.subr.mxu0 0.0
    %v3081 = vand.u32 %v1761, 4294901760
    %3082 = vmatpush1.msra.mxu0 %v3081
    %3083 = vmatprep.subr.mxu0 0.0
    %v3084 = vand.u32 %v1764, 4294901760
    %3085 = vmatpush1.msra.mxu0 %v3084
    %3086 = vmatprep.subr.mxu0 0.0
    %3087 = vmatpush1.msra.mxu0 0.0
    %3088 = vmatprep.subr.mxu0 0.0
    %3089 = vmatpush1.msra.mxu0 0.0
    %3090 = vmatprep.subr.mxu0 0.0
    %3091 = vmatpush1.msra.mxu0 0.0
    %3092 = vmatprep.subr.mxu0 0.0
    %3093 = vmatpush1.msra.mxu0 0.0
    %3094 = vmatprep.subr.mxu0 0.0
    %3095 = vmatpush1.msra.mxu0 0.0
    %3096 = vmatprep.subr.mxu0 0.0
    %3097 = vmatpush1.msra.mxu0 0.0
    %3098 = vmatprep.subr.mxu0 0.0
    %3099 = vmatpush1.msra.mxu0 0.0
    %3100 = vmatprep.subr.mxu0 0.0
    %3101 = vmatpush1.msra.mxu0 0.0
    %3102 = vmatprep.subr.mxu0 0.0
    %3103 = vmatpush1.msra.mxu0 0.0
    %3104 = vmatprep.subr.mxu0 0.0
    %3105 = vmatpush1.msra.mxu0 0.0
    %3106 = vmatprep.subr.mxu0 0.0
    %3107 = vmatpush1.msra.mxu0 0.0
    %3108 = vmatprep.subr.mxu0 0.0
    %3109 = vmatpush1.msra.mxu0 0.0
    %3110 = vmatprep.subr.mxu0 0.0
    %3111 = vmatpush1.msra.mxu0 0.0
    %3112 = vmatprep.subr.mxu0 0.0
    %3113 = vmatpush1.msra.mxu0 0.0
    %3114 = vmatprep.subr.mxu0 0.0
    %3115 = vmatpush1.msra.mxu0 0.0
    %3116 = vmatprep.subr.mxu0 0.0
    %3117 = vmatpush1.msra.mxu0 0.0
    %3118 = vmatprep.mubr.f32.mxu0 0.0
    %v3119 = vand.u32 %v79, 4294901760
    %v3120 = vsub.f32 %v79, %v3119
    %v3121 = vand.u32 %v3120, 4294901760
    %3122 = vmatmul.mubr.f32.gmra.mrb[0].mxu0 %v3121
    %v3123 = vpop.f32.mrb[0].mxu0
    %v3124 = vadd.f32 %v3028, %v3123
    %v3125 = vpop.f32.mrb[0].mxu0
    %3126 = vmatprep.mubr.f32.mxu0 0.0
    %v3127 = vand.u32 %v80, 4294901760
    %v3128 = vsub.f32 %v80, %v3127
    %v3129 = vand.u32 %v3128, 4294901760
    %3130 = vmatmul.mubr.f32.gmra.mrb[0].mxu0 %v3129
    %v3131 = vpop.f32.mrb[0].mxu0
    %v3132 = vadd.f32 %v3035, %v3131
    %v3133 = vpop.f32.mrb[0].mxu0
    %3134 = vdwg.mxu0
    %3135 = vmatprep.subr.mxu0 0.0
    %v3136 = vand.u32 %v1719, 4294901760
    %v3137 = vsub.f32 %v1719, %v3136
    %v3138 = vand.u32 %v3137, 4294901760
    %3139 = vmatpush1.msra.mxu0 %v3138
    %3140 = vmatprep.subr.mxu0 0.0
    %v3141 = vand.u32 %v1722, 4294901760
    %v3142 = vsub.f32 %v1722, %v3141
    %v3143 = vand.u32 %v3142, 4294901760
    %3144 = vmatpush1.msra.mxu0 %v3143
    %3145 = vmatprep.subr.mxu0 0.0
    %v3146 = vand.u32 %v1725, 4294901760
    %v3147 = vsub.f32 %v1725, %v3146
    %v3148 = vand.u32 %v3147, 4294901760
    %3149 = vmatpush1.msra.mxu0 %v3148
    %3150 = vmatprep.subr.mxu0 0.0
    %v3151 = vand.u32 %v1728, 4294901760
    %v3152 = vsub.f32 %v1728, %v3151
    %v3153 = vand.u32 %v3152, 4294901760
    %3154 = vmatpush1.msra.mxu0 %v3153
    %3155 = vmatprep.subr.mxu0 0.0
    %v3156 = vand.u32 %v1731, 4294901760
    %v3157 = vsub.f32 %v1731, %v3156
    %v3158 = vand.u32 %v3157, 4294901760
    %3159 = vmatpush1.msra.mxu0 %v3158
    %3160 = vmatprep.subr.mxu0 0.0
    %v3161 = vand.u32 %v1734, 4294901760
    %v3162 = vsub.f32 %v1734, %v3161
    %v3163 = vand.u32 %v3162, 4294901760
    %3164 = vmatpush1.msra.mxu0 %v3163
    %3165 = vmatprep.subr.mxu0 0.0
    %v3166 = vand.u32 %v1737, 4294901760
    %v3167 = vsub.f32 %v1737, %v3166
    %v3168 = vand.u32 %v3167, 4294901760
    %3169 = vmatpush1.msra.mxu0 %v3168
    %3170 = vmatprep.subr.mxu0 0.0
    %v3171 = vand.u32 %v1740, 4294901760
    %v3172 = vsub.f32 %v1740, %v3171
    %v3173 = vand.u32 %v3172, 4294901760
    %3174 = vmatpush1.msra.mxu0 %v3173
    %3175 = vmatprep.subr.mxu0 0.0
    %v3176 = vand.u32 %v1743, 4294901760
    %v3177 = vsub.f32 %v1743, %v3176
    %v3178 = vand.u32 %v3177, 4294901760
    %3179 = vmatpush1.msra.mxu0 %v3178
    %3180 = vmatprep.subr.mxu0 0.0
    %v3181 = vand.u32 %v1746, 4294901760
    %v3182 = vsub.f32 %v1746, %v3181
    %v3183 = vand.u32 %v3182, 4294901760
    %3184 = vmatpush1.msra.mxu0 %v3183
    %3185 = vmatprep.subr.mxu0 0.0
    %v3186 = vand.u32 %v1749, 4294901760
    %v3187 = vsub.f32 %v1749, %v3186
    %v3188 = vand.u32 %v3187, 4294901760
    %3189 = vmatpush1.msra.mxu0 %v3188
    %3190 = vmatprep.subr.mxu0 0.0
    %v3191 = vand.u32 %v1752, 4294901760
    %v3192 = vsub.f32 %v1752, %v3191
    %v3193 = vand.u32 %v3192, 4294901760
    %3194 = vmatpush1.msra.mxu0 %v3193
    %3195 = vmatprep.subr.mxu0 0.0
    %v3196 = vand.u32 %v1755, 4294901760
    %v3197 = vsub.f32 %v1755, %v3196
    %v3198 = vand.u32 %v3197, 4294901760
    %3199 = vmatpush1.msra.mxu0 %v3198
    %3200 = vmatprep.subr.mxu0 0.0
    %v3201 = vand.u32 %v1758, 4294901760
    %v3202 = vsub.f32 %v1758, %v3201
    %v3203 = vand.u32 %v3202, 4294901760
    %3204 = vmatpush1.msra.mxu0 %v3203
    %3205 = vmatprep.subr.mxu0 0.0
    %v3206 = vand.u32 %v1761, 4294901760
    %v3207 = vsub.f32 %v1761, %v3206
    %v3208 = vand.u32 %v3207, 4294901760
    %3209 = vmatpush1.msra.mxu0 %v3208
    %3210 = vmatprep.subr.mxu0 0.0
    %v3211 = vand.u32 %v1764, 4294901760
    %v3212 = vsub.f32 %v1764, %v3211
    %v3213 = vand.u32 %v3212, 4294901760
    %3214 = vmatpush1.msra.mxu0 %v3213
    %3215 = vmatprep.subr.mxu0 0.0
    %3216 = vmatpush1.msra.mxu0 0.0
    %3217 = vmatprep.subr.mxu0 0.0
    %3218 = vmatpush1.msra.mxu0 0.0
    %3219 = vmatprep.subr.mxu0 0.0
    %3220 = vmatpush1.msra.mxu0 0.0
    %3221 = vmatprep.subr.mxu0 0.0
    %3222 = vmatpush1.msra.mxu0 0.0
    %3223 = vmatprep.subr.mxu0 0.0
    %3224 = vmatpush1.msra.mxu0 0.0
    %3225 = vmatprep.subr.mxu0 0.0
    %3226 = vmatpush1.msra.mxu0 0.0
    %3227 = vmatprep.subr.mxu0 0.0
    %3228 = vmatpush1.msra.mxu0 0.0
    %3229 = vmatprep.subr.mxu0 0.0
    %3230 = vmatpush1.msra.mxu0 0.0
    %3231 = vmatprep.subr.mxu0 0.0
    %3232 = vmatpush1.msra.mxu0 0.0
    %3233 = vmatprep.subr.mxu0 0.0
    %3234 = vmatpush1.msra.mxu0 0.0
    %3235 = vmatprep.subr.mxu0 0.0
    %3236 = vmatpush1.msra.mxu0 0.0
    %3237 = vmatprep.subr.mxu0 0.0
    %3238 = vmatpush1.msra.mxu0 0.0
    %3239 = vmatprep.subr.mxu0 0.0
    %3240 = vmatpush1.msra.mxu0 0.0
    %3241 = vmatprep.subr.mxu0 0.0
    %3242 = vmatpush1.msra.mxu0 0.0
    %3243 = vmatprep.subr.mxu0 0.0
    %3244 = vmatpush1.msra.mxu0 0.0
    %3245 = vmatprep.subr.mxu0 0.0
    %3246 = vmatpush1.msra.mxu0 0.0
    %3247 = vmatprep.mubr.f32.mxu0 0.0
    %v3248 = vand.u32 %v79, 4294901760
    %3249 = vmatmul.mubr.f32.gmra.mrb[0].mxu0 %v3248
    %v3250 = vpop.f32.mrb[0].mxu0
    %v3251 = vadd.f32 %v3124, %v3250
    %v3252 = vpop.f32.mrb[0].mxu0
    %3253 = vmatprep.mubr.f32.mxu0 0.0
    %v3254 = vand.u32 %v80, 4294901760
    %3255 = vmatmul.mubr.f32.gmra.mrb[0].mxu0 %v3254
    %v3256 = vpop.f32.mrb[0].mxu0
    %v3257 = vadd.f32 %v3132, %v3256
    %v3258 = vpop.f32.mrb[0].mxu0
    %3259 = vdwg.mxu0
    %3260 = vmatprep.subr.mxu0 0.0
    %v3261 = vand.u32 %v1719, 4294901760
    %3262 = vmatpush1.msra.mxu0 %v3261
    %3263 = vmatprep.subr.mxu0 0.0
    %v3264 = vand.u32 %v1722, 4294901760
    %3265 = vmatpush1.msra.mxu0 %v3264
    %3266 = vmatprep.subr.mxu0 0.0
    %v3267 = vand.u32 %v1725, 4294901760
    %3268 = vmatpush1.msra.mxu0 %v3267
    %3269 = vmatprep.subr.mxu0 0.0
    %v3270 = vand.u32 %v1728, 4294901760
    %3271 = vmatpush1.msra.mxu0 %v3270
    %3272 = vmatprep.subr.mxu0 0.0
    %v3273 = vand.u32 %v1731, 4294901760
    %3274 = vmatpush1.msra.mxu0 %v3273
    %3275 = vmatprep.subr.mxu0 0.0
    %v3276 = vand.u32 %v1734, 4294901760
    %3277 = vmatpush1.msra.mxu0 %v3276
    %3278 = vmatprep.subr.mxu0 0.0
    %v3279 = vand.u32 %v1737, 4294901760
    %3280 = vmatpush1.msra.mxu0 %v3279
    %3281 = vmatprep.subr.mxu0 0.0
    %v3282 = vand.u32 %v1740, 4294901760
    %3283 = vmatpush1.msra.mxu0 %v3282
    %3284 = vmatprep.subr.mxu0 0.0
    %v3285 = vand.u32 %v1743, 4294901760
    %3286 = vmatpush1.msra.mxu0 %v3285
    %3287 = vmatprep.subr.mxu0 0.0
    %v3288 = vand.u32 %v1746, 4294901760
    %3289 = vmatpush1.msra.mxu0 %v3288
    %3290 = vmatprep.subr.mxu0 0.0
    %v3291 = vand.u32 %v1749, 4294901760
    %3292 = vmatpush1.msra.mxu0 %v3291
    %3293 = vmatprep.subr.mxu0 0.0
    %v3294 = vand.u32 %v1752, 4294901760
    %3295 = vmatpush1.msra.mxu0 %v3294
    %3296 = vmatprep.subr.mxu0 0.0
    %v3297 = vand.u32 %v1755, 4294901760
    %3298 = vmatpush1.msra.mxu0 %v3297
    %3299 = vmatprep.subr.mxu0 0.0
    %v3300 = vand.u32 %v1758, 4294901760
    %3301 = vmatpush1.msra.mxu0 %v3300
    %3302 = vmatprep.subr.mxu0 0.0
    %v3303 = vand.u32 %v1761, 4294901760
    %3304 = vmatpush1.msra.mxu0 %v3303
    %3305 = vmatprep.subr.mxu0 0.0
    %v3306 = vand.u32 %v1764, 4294901760
    %3307 = vmatpush1.msra.mxu0 %v3306
    %3308 = vmatprep.subr.mxu0 0.0
    %3309 = vmatpush1.msra.mxu0 0.0
    %3310 = vmatprep.subr.mxu0 0.0
    %3311 = vmatpush1.msra.mxu0 0.0
    %3312 = vmatprep.subr.mxu0 0.0
    %3313 = vmatpush1.msra.mxu0 0.0
    %3314 = vmatprep.subr.mxu0 0.0
    %3315 = vmatpush1.msra.mxu0 0.0
    %3316 = vmatprep.subr.mxu0 0.0
    %3317 = vmatpush1.msra.mxu0 0.0
    %3318 = vmatprep.subr.mxu0 0.0
    %3319 = vmatpush1.msra.mxu0 0.0
    %3320 = vmatprep.subr.mxu0 0.0
    %3321 = vmatpush1.msra.mxu0 0.0
    %3322 = vmatprep.subr.mxu0 0.0
    %3323 = vmatpush1.msra.mxu0 0.0
    %3324 = vmatprep.subr.mxu0 0.0
    %3325 = vmatpush1.msra.mxu0 0.0
    %3326 = vmatprep.subr.mxu0 0.0
    %3327 = vmatpush1.msra.mxu0 0.0
    %3328 = vmatprep.subr.mxu0 0.0
    %3329 = vmatpush1.msra.mxu0 0.0
    %3330 = vmatprep.subr.mxu0 0.0
    %3331 = vmatpush1.msra.mxu0 0.0
    %3332 = vmatprep.subr.mxu0 0.0
    %3333 = vmatpush1.msra.mxu0 0.0
    %3334 = vmatprep.subr.mxu0 0.0
    %3335 = vmatpush1.msra.mxu0 0.0
    %3336 = vmatprep.subr.mxu0 0.0
    %3337 = vmatpush1.msra.mxu0 0.0
    %3338 = vmatprep.subr.mxu0 0.0
    %3339 = vmatpush1.msra.mxu0 0.0
    %3340 = vmatprep.mubr.f32.mxu0 0.0
    %v3341 = vand.u32 %v79, 4294901760
    %3342 = vmatmul.mubr.f32.gmra.mrb[0].mxu0 %v3341
    %v3343 = vpop.f32.mrb[0].mxu0
    %v3344 = vadd.f32 %v3251, %v3343
    %v3345 = vpop.f32.mrb[0].mxu0
    %3346 = vmatprep.mubr.f32.mxu0 0.0
    %v3347 = vand.u32 %v80, 4294901760
    %3348 = vmatmul.mubr.f32.gmra.mrb[0].mxu0 %v3347
    %v3349 = vpop.f32.mrb[0].mxu0
    %v3350 = vadd.f32 %v3257, %v3349
    %v3351 = vpop.f32.mrb[0].mxu0
    %3352 = vdwg.mxu0
    %v3353 = vxor.u32 %v1022, 2147483648
    %v3354 = vxor.u32 %v1024, 2147483648
    %v3355 = vxor.u32 %v1708, 2147483648
    %v3356 = vxor.u32 %v1029, 2147483648
    %v3357 = vxor.u32 %v1031, 2147483648
    %v3358 = vxor.u32 %v1714, 2147483648
    %v3359 = vmul.f32 %v3353, 1.442695
    %v3360 = vpow.pop %v3359
    %v3361 = vmul.f32 %v3354, 1.442695
    %v3362 = vpow.pop %v3361
    %v3363 = vmul.f32 %v3355, 1.442695
    %v3364 = vpow.pop %v3363
    %v3365 = vmul.f32 %v3356, 1.442695
    %v3366 = vpow.pop %v3365
    %v3367 = vmul.f32 %v3357, 1.442695
    %v3368 = vpow.pop %v3367
    %v3369 = vmul.f32 %v3358, 1.442695
    %v3370 = vpow.pop %v3369
    %v3371 = vadd.f32 %v3360, 1.0
    %v3372 = vadd.f32 %v3362, 1.0
    %v3373 = vadd.f32 %v3364, 1.0
    %v3374 = vadd.f32 %v3366, 1.0
    %v3375 = vadd.f32 %v3368, 1.0
    %v3376 = vadd.f32 %v3370, 1.0
    %v3377 = vrcp.pop %v3371
    %v3378 = vmul.f32 1.0, %v3377
    %v3379 = vrcp.pop %v3372
    %v3380 = vmul.f32 1.0, %v3379
    %v3381 = vrcp.pop %v3373
    %v3382 = vmul.f32 1.0, %v3381
    %v3383 = vrcp.pop %v3374
    %v3384 = vmul.f32 1.0, %v3383
    %v3385 = vrcp.pop %v3375
    %v3386 = vmul.f32 1.0, %v3385
    %v3387 = vrcp.pop %v3376
    %v3388 = vmul.f32 1.0, %v3387
    %v3389 = vmul.f32 %v1022, %v3378
    %v3390 = vmul.f32 %v1024, %v3380
    %v3391 = vmul.f32 %v1708, %v3382
    %v3392 = vmul.f32 %v1029, %v3384
    %v3393 = vmul.f32 %v1031, %v3386
    %v3394 = vmul.f32 %v1714, %v3388
    %v3395 = vmul.f32 %v3389, %v2658
    %v3396 = vmul.f32 %v3390, %v2660
    %v3397 = vmul.f32 %v3391, %v3344
    %v3398 = vmul.f32 %v3392, %v2665
    %v3399 = vmul.f32 %v3393, %v2667
    %v3400 = vmul.f32 %v3394, %v3350
    %v3401 = vld [vmem:[#allocation2] sm:$0xff]
    %v3402 = vld [vmem:[#allocation2 + $0x8] sm:$0xff]
    %v3403 = vld [vmem:[#allocation9] sm:$0xff]
    %v3404 = vld [vmem:[#allocation9 + $0x8] sm:$0xff]
    %v3405 = vld [vmem:[#allocation9 + $0x10] sm:$0xff]
    %v3406 = vld [vmem:[#allocation9 + $0x18] sm:$0xff]
    %v3407 = vld [vmem:[#allocation9 + $0x20] sm:$0xff]
    %v3408 = vld [vmem:[#allocation9 + $0x28] sm:$0xff]
    %v3409 = vld [vmem:[#allocation9 + $0x30] sm:$0xff]
    %v3410 = vld [vmem:[#allocation9 + $0x38] sm:$0xff]
    %v3411 = vld [vmem:[#allocation9 + $0x40] sm:$0xff]
    %v3412 = vld [vmem:[#allocation9 + $0x48] sm:$0xff]
    %v3413 = vld [vmem:[#allocation9 + $0x50] sm:$0xff]
    %v3414 = vld [vmem:[#allocation9 + $0x58] sm:$0xff]
    %v3415 = vld [vmem:[#allocation9 + $0x60] sm:$0xff]
    %v3416 = vld [vmem:[#allocation9 + $0x68] sm:$0xff]
    %v3417 = vld [vmem:[#allocation9 + $0x70] sm:$0xff]
    %v3418 = vld [vmem:[#allocation9 + $0x78] sm:$0xff]
    %v3419 = vld [vmem:[#allocation9 + $0x80] sm:$0xff]
    %v3420 = vld [vmem:[#allocation9 + $0x88] sm:$0xff]
    %v3421 = vld [vmem:[#allocation9 + $0x90] sm:$0xff]
    %v3422 = vld [vmem:[#allocation9 + $0x98] sm:$0xff]
    %v3423 = vld [vmem:[#allocation9 + $0xa0] sm:$0xff]
    %v3424 = vld [vmem:[#allocation9 + $0xa8] sm:$0xff]
    %v3425 = vld [vmem:[#allocation9 + $0xb0] sm:$0xff]
    %v3426 = vld [vmem:[#allocation9 + $0xb8] sm:$0xff]
    %v3427 = vld [vmem:[#allocation9 + $0xc0] sm:$0xff]
    %v3428 = vld [vmem:[#allocation9 + $0xc8] sm:$0xff]
    %v3429 = vld [vmem:[#allocation9 + $0xd0] sm:$0xff]
    %v3430 = vld [vmem:[#allocation9 + $0xd8] sm:$0xff]
    %v3431 = vld [vmem:[#allocation9 + $0xe0] sm:$0xff]
    %v3432 = vld [vmem:[#allocation9 + $0xe8] sm:$0xff]
    %v3433 = vld [vmem:[#allocation9 + $0xf0] sm:$0xff]
    %v3434 = vld [vmem:[#allocation9 + $0xf8] sm:$0xff]
    %v3435 = vld [vmem:[#allocation9 + $0x100] sm:$0xff]
    %v3436 = vld [vmem:[#allocation9 + $0x108] sm:$0xff]
    %v3437 = vld [vmem:[#allocation9 + $0x110] sm:$0xff]
    %v3438 = vld [vmem:[#allocation9 + $0x118] sm:$0xff]
    %v3439 = vld [vmem:[#allocation9 + $0x120] sm:$0xff]
    %v3440 = vld [vmem:[#allocation9 + $0x128] sm:$0xff]
    %v3441 = vld [vmem:[#allocation9 + $0x130] sm:$0xff]
    %v3442 = vld [vmem:[#allocation9 + $0x138] sm:$0xff]
    %v3443 = vld [vmem:[#allocation9 + $0x140] sm:$0xff]
    %v3444 = vld [vmem:[#allocation9 + $0x148] sm:$0xff]
    %v3445 = vld [vmem:[#allocation9 + $0x150] sm:$0xff]
    %v3446 = vld [vmem:[#allocation9 + $0x158] sm:$0xff]
    %v3447 = vld [vmem:[#allocation9 + $0x160] sm:$0xff]
    %v3448 = vld [vmem:[#allocation9 + $0x168] sm:$0xff]
    %v3449 = vld [vmem:[#allocation9 + $0x170] sm:$0xff]
    %v3450 = vld [vmem:[#allocation9 + $0x178] sm:$0xff]
    %3451 = vmatprep.subr.mxu0 0.0
    %v3452 = vand.u32 %v3403, 4294901760
    %3453 = vmatpush1.msra.mxu0 %v3452
    %3454 = vmatprep.subr.mxu0 0.0
    %v3455 = vand.u32 %v3404, 4294901760
    %3456 = vmatpush1.msra.mxu0 %v3455
    %3457 = vmatprep.subr.mxu0 0.0
    %v3458 = vand.u32 %v3405, 4294901760
    %3459 = vmatpush1.msra.mxu0 %v3458
    %3460 = vmatprep.subr.mxu0 0.0
    %v3461 = vand.u32 %v3406, 4294901760
    %3462 = vmatpush1.msra.mxu0 %v3461
    %3463 = vmatprep.subr.mxu0 0.0
    %v3464 = vand.u32 %v3407, 4294901760
    %3465 = vmatpush1.msra.mxu0 %v3464
    %3466 = vmatprep.subr.mxu0 0.0
    %v3467 = vand.u32 %v3408, 4294901760
    %3468 = vmatpush1.msra.mxu0 %v3467
    %3469 = vmatprep.subr.mxu0 0.0
    %v3470 = vand.u32 %v3409, 4294901760
    %3471 = vmatpush1.msra.mxu0 %v3470
    %3472 = vmatprep.subr.mxu0 0.0
    %v3473 = vand.u32 %v3410, 4294901760
    %3474 = vmatpush1.msra.mxu0 %v3473
    %3475 = vmatprep.subr.mxu0 0.0
    %v3476 = vand.u32 %v3411, 4294901760
    %3477 = vmatpush1.msra.mxu0 %v3476
    %3478 = vmatprep.subr.mxu0 0.0
    %v3479 = vand.u32 %v3412, 4294901760
    %3480 = vmatpush1.msra.mxu0 %v3479
    %3481 = vmatprep.subr.mxu0 0.0
    %v3482 = vand.u32 %v3413, 4294901760
    %3483 = vmatpush1.msra.mxu0 %v3482
    %3484 = vmatprep.subr.mxu0 0.0
    %v3485 = vand.u32 %v3414, 4294901760
    %3486 = vmatpush1.msra.mxu0 %v3485
    %3487 = vmatprep.subr.mxu0 0.0
    %v3488 = vand.u32 %v3415, 4294901760
    %3489 = vmatpush1.msra.mxu0 %v3488
    %3490 = vmatprep.subr.mxu0 0.0
    %v3491 = vand.u32 %v3416, 4294901760
    %3492 = vmatpush1.msra.mxu0 %v3491
    %3493 = vmatprep.subr.mxu0 0.0
    %v3494 = vand.u32 %v3417, 4294901760
    %3495 = vmatpush1.msra.mxu0 %v3494
    %3496 = vmatprep.subr.mxu0 0.0
    %v3497 = vand.u32 %v3418, 4294901760
    %3498 = vmatpush1.msra.mxu0 %v3497
    %3499 = vmatprep.subr.mxu0 0.0
    %v3500 = vand.u32 %v3419, 4294901760
    %3501 = vmatpush1.msra.mxu0 %v3500
    %3502 = vmatprep.subr.mxu0 0.0
    %v3503 = vand.u32 %v3420, 4294901760
    %3504 = vmatpush1.msra.mxu0 %v3503
    %3505 = vmatprep.subr.mxu0 0.0
    %v3506 = vand.u32 %v3421, 4294901760
    %3507 = vmatpush1.msra.mxu0 %v3506
    %3508 = vmatprep.subr.mxu0 0.0
    %v3509 = vand.u32 %v3422, 4294901760
    %3510 = vmatpush1.msra.mxu0 %v3509
    %3511 = vmatprep.subr.mxu0 0.0
    %v3512 = vand.u32 %v3423, 4294901760
    %3513 = vmatpush1.msra.mxu0 %v3512
    %3514 = vmatprep.subr.mxu0 0.0
    %v3515 = vand.u32 %v3424, 4294901760
    %3516 = vmatpush1.msra.mxu0 %v3515
    %3517 = vmatprep.subr.mxu0 0.0
    %v3518 = vand.u32 %v3425, 4294901760
    %3519 = vmatpush1.msra.mxu0 %v3518
    %3520 = vmatprep.subr.mxu0 0.0
    %v3521 = vand.u32 %v3426, 4294901760
    %3522 = vmatpush1.msra.mxu0 %v3521
    %3523 = vmatprep.subr.mxu0 0.0
    %v3524 = vand.u32 %v3427, 4294901760
    %3525 = vmatpush1.msra.mxu0 %v3524
    %3526 = vmatprep.subr.mxu0 0.0
    %v3527 = vand.u32 %v3428, 4294901760
    %3528 = vmatpush1.msra.mxu0 %v3527
    %3529 = vmatprep.subr.mxu0 0.0
    %v3530 = vand.u32 %v3429, 4294901760
    %3531 = vmatpush1.msra.mxu0 %v3530
    %3532 = vmatprep.subr.mxu0 0.0
    %v3533 = vand.u32 %v3430, 4294901760
    %3534 = vmatpush1.msra.mxu0 %v3533
    %3535 = vmatprep.subr.mxu0 0.0
    %v3536 = vand.u32 %v3431, 4294901760
    %3537 = vmatpush1.msra.mxu0 %v3536
    %3538 = vmatprep.subr.mxu0 0.0
    %v3539 = vand.u32 %v3432, 4294901760
    %3540 = vmatpush1.msra.mxu0 %v3539
    %3541 = vmatprep.subr.mxu0 0.0
    %v3542 = vand.u32 %v3433, 4294901760
    %3543 = vmatpush1.msra.mxu0 %v3542
    %3544 = vmatprep.subr.mxu0 0.0
    %v3545 = vand.u32 %v3434, 4294901760
    %3546 = vmatpush1.msra.mxu0 %v3545
    %v3547 = vand.u32 %v3396, 4294901760
    %v3548 = vsub.f32 %v3396, %v3547
    %v3549 = vand.u32 %v3548, 4294901760
    %v3550 = vsub.f32 %v3548, %v3549
    %v3551 = vand.u32 %v3550, 4294901760
    %3552 = vmatprep.mubr.f32.mxu0 %v3551
    %v3553 = vand.u32 %v3395, 4294901760
    %v3554 = vsub.f32 %v3395, %v3553
    %v3555 = vand.u32 %v3554, 4294901760
    %v3556 = vsub.f32 %v3554, %v3555
    %v3557 = vand.u32 %v3556, 4294901760
    %3558 = vmatmul.mubr.f32.gmra.mrb[0].mxu0 %v3557
    %v3559 = vpop.f32.mrb[0].mxu0
    %v3560 = vadd.f32 0.0, %v3559
    %v3561 = vpop.f32.mrb[0].mxu0
    %v3562 = vand.u32 %v3399, 4294901760
    %v3563 = vsub.f32 %v3399, %v3562
    %v3564 = vand.u32 %v3563, 4294901760
    %v3565 = vsub.f32 %v3563, %v3564
    %v3566 = vand.u32 %v3565, 4294901760
    %3567 = vmatprep.mubr.f32.mxu0 %v3566
    %v3568 = vand.u32 %v3398, 4294901760
    %v3569 = vsub.f32 %v3398, %v3568
    %v3570 = vand.u32 %v3569, 4294901760
    %v3571 = vsub.f32 %v3569, %v3570
    %v3572 = vand.u32 %v3571, 4294901760
    %3573 = vmatmul.mubr.f32.gmra.mrb[0].mxu0 %v3572
    %v3574 = vpop.f32.mrb[0].mxu0
    %v3575 = vadd.f32 0.0, %v3574
    %v3576 = vpop.f32.mrb[0].mxu0
    %3577 = vdwg.mxu0
    %3578 = vmatprep.subr.mxu0 0.0
    %v3579 = vand.u32 %v3403, 4294901760
    %v3580 = vsub.f32 %v3403, %v3579
    %v3581 = vand.u32 %v3580, 4294901760
    %v3582 = vsub.f32 %v3580, %v3581
    %v3583 = vand.u32 %v3582, 4294901760
    %3584 = vmatpush1.msra.mxu0 %v3583
    %3585 = vmatprep.subr.mxu0 0.0
    %v3586 = vand.u32 %v3404, 4294901760
    %v3587 = vsub.f32 %v3404, %v3586
    %v3588 = vand.u32 %v3587, 4294901760
    %v3589 = vsub.f32 %v3587, %v3588
    %v3590 = vand.u32 %v3589, 4294901760
    %3591 = vmatpush1.msra.mxu0 %v3590
    %3592 = vmatprep.subr.mxu0 0.0
    %v3593 = vand.u32 %v3405, 4294901760
    %v3594 = vsub.f32 %v3405, %v3593
    %v3595 = vand.u32 %v3594, 4294901760
    %v3596 = vsub.f32 %v3594, %v3595
    %v3597 = vand.u32 %v3596, 4294901760
    %3598 = vmatpush1.msra.mxu0 %v3597
    %3599 = vmatprep.subr.mxu0 0.0
    %v3600 = vand.u32 %v3406, 4294901760
    %v3601 = vsub.f32 %v3406, %v3600
    %v3602 = vand.u32 %v3601, 4294901760
    %v3603 = vsub.f32 %v3601, %v3602
    %v3604 = vand.u32 %v3603, 4294901760
    %3605 = vmatpush1.msra.mxu0 %v3604
    %3606 = vmatprep.subr.mxu0 0.0
    %v3607 = vand.u32 %v3407, 4294901760
    %v3608 = vsub.f32 %v3407, %v3607
    %v3609 = vand.u32 %v3608, 4294901760
    %v3610 = vsub.f32 %v3608, %v3609
    %v3611 = vand.u32 %v3610, 4294901760
    %3612 = vmatpush1.msra.mxu0 %v3611
    %3613 = vmatprep.subr.mxu0 0.0
    %v3614 = vand.u32 %v3408, 4294901760
    %v3615 = vsub.f32 %v3408, %v3614
    %v3616 = vand.u32 %v3615, 4294901760
    %v3617 = vsub.f32 %v3615, %v3616
    %v3618 = vand.u32 %v3617, 4294901760
    %3619 = vmatpush1.msra.mxu0 %v3618
    %3620 = vmatprep.subr.mxu0 0.0
    %v3621 = vand.u32 %v3409, 4294901760
    %v3622 = vsub.f32 %v3409, %v3621
    %v3623 = vand.u32 %v3622, 4294901760
    %v3624 = vsub.f32 %v3622, %v3623
    %v3625 = vand.u32 %v3624, 4294901760
    %3626 = vmatpush1.msra.mxu0 %v3625
    %3627 = vmatprep.subr.mxu0 0.0
    %v3628 = vand.u32 %v3410, 4294901760
    %v3629 = vsub.f32 %v3410, %v3628
    %v3630 = vand.u32 %v3629, 4294901760
    %v3631 = vsub.f32 %v3629, %v3630
    %v3632 = vand.u32 %v3631, 4294901760
    %3633 = vmatpush1.msra.mxu0 %v3632
    %3634 = vmatprep.subr.mxu0 0.0
    %v3635 = vand.u32 %v3411, 4294901760
    %v3636 = vsub.f32 %v3411, %v3635
    %v3637 = vand.u32 %v3636, 4294901760
    %v3638 = vsub.f32 %v3636, %v3637
    %v3639 = vand.u32 %v3638, 4294901760
    %3640 = vmatpush1.msra.mxu0 %v3639
    %3641 = vmatprep.subr.mxu0 0.0
    %v3642 = vand.u32 %v3412, 4294901760
    %v3643 = vsub.f32 %v3412, %v3642
    %v3644 = vand.u32 %v3643, 4294901760
    %v3645 = vsub.f32 %v3643, %v3644
    %v3646 = vand.u32 %v3645, 4294901760
    %3647 = vmatpush1.msra.mxu0 %v3646
    %3648 = vmatprep.subr.mxu0 0.0
    %v3649 = vand.u32 %v3413, 4294901760
    %v3650 = vsub.f32 %v3413, %v3649
    %v3651 = vand.u32 %v3650, 4294901760
    %v3652 = vsub.f32 %v3650, %v3651
    %v3653 = vand.u32 %v3652, 4294901760
    %3654 = vmatpush1.msra.mxu0 %v3653
    %3655 = vmatprep.subr.mxu0 0.0
    %v3656 = vand.u32 %v3414, 4294901760
    %v3657 = vsub.f32 %v3414, %v3656
    %v3658 = vand.u32 %v3657, 4294901760
    %v3659 = vsub.f32 %v3657, %v3658
    %v3660 = vand.u32 %v3659, 4294901760
    %3661 = vmatpush1.msra.mxu0 %v3660
    %3662 = vmatprep.subr.mxu0 0.0
    %v3663 = vand.u32 %v3415, 4294901760
    %v3664 = vsub.f32 %v3415, %v3663
    %v3665 = vand.u32 %v3664, 4294901760
    %v3666 = vsub.f32 %v3664, %v3665
    %v3667 = vand.u32 %v3666, 4294901760
    %3668 = vmatpush1.msra.mxu0 %v3667
    %3669 = vmatprep.subr.mxu0 0.0
    %v3670 = vand.u32 %v3416, 4294901760
    %v3671 = vsub.f32 %v3416, %v3670
    %v3672 = vand.u32 %v3671, 4294901760
    %v3673 = vsub.f32 %v3671, %v3672
    %v3674 = vand.u32 %v3673, 4294901760
    %3675 = vmatpush1.msra.mxu0 %v3674
    %3676 = vmatprep.subr.mxu0 0.0
    %v3677 = vand.u32 %v3417, 4294901760
    %v3678 = vsub.f32 %v3417, %v3677
    %v3679 = vand.u32 %v3678, 4294901760
    %v3680 = vsub.f32 %v3678, %v3679
    %v3681 = vand.u32 %v3680, 4294901760
    %3682 = vmatpush1.msra.mxu0 %v3681
    %3683 = vmatprep.subr.mxu0 0.0
    %v3684 = vand.u32 %v3418, 4294901760
    %v3685 = vsub.f32 %v3418, %v3684
    %v3686 = vand.u32 %v3685, 4294901760
    %v3687 = vsub.f32 %v3685, %v3686
    %v3688 = vand.u32 %v3687, 4294901760
    %3689 = vmatpush1.msra.mxu0 %v3688
    %3690 = vmatprep.subr.mxu0 0.0
    %v3691 = vand.u32 %v3419, 4294901760
    %v3692 = vsub.f32 %v3419, %v3691
    %v3693 = vand.u32 %v3692, 4294901760
    %v3694 = vsub.f32 %v3692, %v3693
    %v3695 = vand.u32 %v3694, 4294901760
    %3696 = vmatpush1.msra.mxu0 %v3695
    %3697 = vmatprep.subr.mxu0 0.0
    %v3698 = vand.u32 %v3420, 4294901760
    %v3699 = vsub.f32 %v3420, %v3698
    %v3700 = vand.u32 %v3699, 4294901760
    %v3701 = vsub.f32 %v3699, %v3700
    %v3702 = vand.u32 %v3701, 4294901760
    %3703 = vmatpush1.msra.mxu0 %v3702
    %3704 = vmatprep.subr.mxu0 0.0
    %v3705 = vand.u32 %v3421, 4294901760
    %v3706 = vsub.f32 %v3421, %v3705
    %v3707 = vand.u32 %v3706, 4294901760
    %v3708 = vsub.f32 %v3706, %v3707
    %v3709 = vand.u32 %v3708, 4294901760
    %3710 = vmatpush1.msra.mxu0 %v3709
    %3711 = vmatprep.subr.mxu0 0.0
    %v3712 = vand.u32 %v3422, 4294901760
    %v3713 = vsub.f32 %v3422, %v3712
    %v3714 = vand.u32 %v3713, 4294901760
    %v3715 = vsub.f32 %v3713, %v3714
    %v3716 = vand.u32 %v3715, 4294901760
    %3717 = vmatpush1.msra.mxu0 %v3716
    %3718 = vmatprep.subr.mxu0 0.0
    %v3719 = vand.u32 %v3423, 4294901760
    %v3720 = vsub.f32 %v3423, %v3719
    %v3721 = vand.u32 %v3720, 4294901760
    %v3722 = vsub.f32 %v3720, %v3721
    %v3723 = vand.u32 %v3722, 4294901760
    %3724 = vmatpush1.msra.mxu0 %v3723
    %3725 = vmatprep.subr.mxu0 0.0
    %v3726 = vand.u32 %v3424, 4294901760
    %v3727 = vsub.f32 %v3424, %v3726
    %v3728 = vand.u32 %v3727, 4294901760
    %v3729 = vsub.f32 %v3727, %v3728
    %v3730 = vand.u32 %v3729, 4294901760
    %3731 = vmatpush1.msra.mxu0 %v3730
    %3732 = vmatprep.subr.mxu0 0.0
    %v3733 = vand.u32 %v3425, 4294901760
    %v3734 = vsub.f32 %v3425, %v3733
    %v3735 = vand.u32 %v3734, 4294901760
    %v3736 = vsub.f32 %v3734, %v3735
    %v3737 = vand.u32 %v3736, 4294901760
    %3738 = vmatpush1.msra.mxu0 %v3737
    %3739 = vmatprep.subr.mxu0 0.0
    %v3740 = vand.u32 %v3426, 4294901760
    %v3741 = vsub.f32 %v3426, %v3740
    %v3742 = vand.u32 %v3741, 4294901760
    %v3743 = vsub.f32 %v3741, %v3742
    %v3744 = vand.u32 %v3743, 4294901760
    %3745 = vmatpush1.msra.mxu0 %v3744
    %3746 = vmatprep.subr.mxu0 0.0
    %v3747 = vand.u32 %v3427, 4294901760
    %v3748 = vsub.f32 %v3427, %v3747
    %v3749 = vand.u32 %v3748, 4294901760
    %v3750 = vsub.f32 %v3748, %v3749
    %v3751 = vand.u32 %v3750, 4294901760
    %3752 = vmatpush1.msra.mxu0 %v3751
    %3753 = vmatprep.subr.mxu0 0.0
    %v3754 = vand.u32 %v3428, 4294901760
    %v3755 = vsub.f32 %v3428, %v3754
    %v3756 = vand.u32 %v3755, 4294901760
    %v3757 = vsub.f32 %v3755, %v3756
    %v3758 = vand.u32 %v3757, 4294901760
    %3759 = vmatpush1.msra.mxu0 %v3758
    %3760 = vmatprep.subr.mxu0 0.0
    %v3761 = vand.u32 %v3429, 4294901760
    %v3762 = vsub.f32 %v3429, %v3761
    %v3763 = vand.u32 %v3762, 4294901760
    %v3764 = vsub.f32 %v3762, %v3763
    %v3765 = vand.u32 %v3764, 4294901760
    %3766 = vmatpush1.msra.mxu0 %v3765
    %3767 = vmatprep.subr.mxu0 0.0
    %v3768 = vand.u32 %v3430, 4294901760
    %v3769 = vsub.f32 %v3430, %v3768
    %v3770 = vand.u32 %v3769, 4294901760
    %v3771 = vsub.f32 %v3769, %v3770
    %v3772 = vand.u32 %v3771, 4294901760
    %3773 = vmatpush1.msra.mxu0 %v3772
    %3774 = vmatprep.subr.mxu0 0.0
    %v3775 = vand.u32 %v3431, 4294901760
    %v3776 = vsub.f32 %v3431, %v3775
    %v3777 = vand.u32 %v3776, 4294901760
    %v3778 = vsub.f32 %v3776, %v3777
    %v3779 = vand.u32 %v3778, 4294901760
    %3780 = vmatpush1.msra.mxu0 %v3779
    %3781 = vmatprep.subr.mxu0 0.0
    %v3782 = vand.u32 %v3432, 4294901760
    %v3783 = vsub.f32 %v3432, %v3782
    %v3784 = vand.u32 %v3783, 4294901760
    %v3785 = vsub.f32 %v3783, %v3784
    %v3786 = vand.u32 %v3785, 4294901760
    %3787 = vmatpush1.msra.mxu0 %v3786
    %3788 = vmatprep.subr.mxu0 0.0
    %v3789 = vand.u32 %v3433, 4294901760
    %v3790 = vsub.f32 %v3433, %v3789
    %v3791 = vand.u32 %v3790, 4294901760
    %v3792 = vsub.f32 %v3790, %v3791
    %v3793 = vand.u32 %v3792, 4294901760
    %3794 = vmatpush1.msra.mxu0 %v3793
    %3795 = vmatprep.subr.mxu0 0.0
    %v3796 = vand.u32 %v3434, 4294901760
    %v3797 = vsub.f32 %v3434, %v3796
    %v3798 = vand.u32 %v3797, 4294901760
    %v3799 = vsub.f32 %v3797, %v3798
    %v3800 = vand.u32 %v3799, 4294901760
    %3801 = vmatpush1.msra.mxu0 %v3800
    %v3802 = vand.u32 %v3396, 4294901760
    %3803 = vmatprep.mubr.f32.mxu0 %v3802
    %v3804 = vand.u32 %v3395, 4294901760
    %3805 = vmatmul.mubr.f32.gmra.mrb[0].mxu0 %v3804
    %v3806 = vpop.f32.mrb[0].mxu0
    %v3807 = vadd.f32 %v3560, %v3806
    %v3808 = vpop.f32.mrb[0].mxu0
    %v3809 = vand.u32 %v3399, 4294901760
    %3810 = vmatprep.mubr.f32.mxu0 %v3809
    %v3811 = vand.u32 %v3398, 4294901760
    %3812 = vmatmul.mubr.f32.gmra.mrb[0].mxu0 %v3811
    %v3813 = vpop.f32.mrb[0].mxu0
    %v3814 = vadd.f32 %v3575, %v3813
    %v3815 = vpop.f32.mrb[0].mxu0
    %3816 = vdwg.mxu0
    %3817 = vmatprep.subr.mxu0 0.0
    %v3818 = vand.u32 %v3403, 4294901760
    %v3819 = vsub.f32 %v3403, %v3818
    %3820 = vmatpush1.msra.mxu0 %v3819
    %3821 = vmatprep.subr.mxu0 0.0
    %v3822 = vand.u32 %v3404, 4294901760
    %v3823 = vsub.f32 %v3404, %v3822
    %3824 = vmatpush1.msra.mxu0 %v3823
    %3825 = vmatprep.subr.mxu0 0.0
    %v3826 = vand.u32 %v3405, 4294901760
    %v3827 = vsub.f32 %v3405, %v3826
    %3828 = vmatpush1.msra.mxu0 %v3827
    %3829 = vmatprep.subr.mxu0 0.0
    %v3830 = vand.u32 %v3406, 4294901760
    %v3831 = vsub.f32 %v3406, %v3830
    %3832 = vmatpush1.msra.mxu0 %v3831
    %3833 = vmatprep.subr.mxu0 0.0
    %v3834 = vand.u32 %v3407, 4294901760
    %v3835 = vsub.f32 %v3407, %v3834
    %3836 = vmatpush1.msra.mxu0 %v3835
    %3837 = vmatprep.subr.mxu0 0.0
    %v3838 = vand.u32 %v3408, 4294901760
    %v3839 = vsub.f32 %v3408, %v3838
    %3840 = vmatpush1.msra.mxu0 %v3839
    %3841 = vmatprep.subr.mxu0 0.0
    %v3842 = vand.u32 %v3409, 4294901760
    %v3843 = vsub.f32 %v3409, %v3842
    %3844 = vmatpush1.msra.mxu0 %v3843
    %3845 = vmatprep.subr.mxu0 0.0
    %v3846 = vand.u32 %v3410, 4294901760
    %v3847 = vsub.f32 %v3410, %v3846
    %3848 = vmatpush1.msra.mxu0 %v3847
    %3849 = vmatprep.subr.mxu0 0.0
    %v3850 = vand.u32 %v3411, 4294901760
    %v3851 = vsub.f32 %v3411, %v3850
    %3852 = vmatpush1.msra.mxu0 %v3851
    %3853 = vmatprep.subr.mxu0 0.0
    %v3854 = vand.u32 %v3412, 4294901760
    %v3855 = vsub.f32 %v3412, %v3854
    %3856 = vmatpush1.msra.mxu0 %v3855
    %3857 = vmatprep.subr.mxu0 0.0
    %v3858 = vand.u32 %v3413, 4294901760
    %v3859 = vsub.f32 %v3413, %v3858
    %3860 = vmatpush1.msra.mxu0 %v3859
    %3861 = vmatprep.subr.mxu0 0.0
    %v3862 = vand.u32 %v3414, 4294901760
    %v3863 = vsub.f32 %v3414, %v3862
    %3864 = vmatpush1.msra.mxu0 %v3863
    %3865 = vmatprep.subr.mxu0 0.0
    %v3866 = vand.u32 %v3415, 4294901760
    %v3867 = vsub.f32 %v3415, %v3866
    %3868 = vmatpush1.msra.mxu0 %v3867
    %3869 = vmatprep.subr.mxu0 0.0
    %v3870 = vand.u32 %v3416, 4294901760
    %v3871 = vsub.f32 %v3416, %v3870
    %3872 = vmatpush1.msra.mxu0 %v3871
    %3873 = vmatprep.subr.mxu0 0.0
    %v3874 = vand.u32 %v3417, 4294901760
    %v3875 = vsub.f32 %v3417, %v3874
    %3876 = vmatpush1.msra.mxu0 %v3875
    %3877 = vmatprep.subr.mxu0 0.0
    %v3878 = vand.u32 %v3418, 4294901760
    %v3879 = vsub.f32 %v3418, %v3878
    %3880 = vmatpush1.msra.mxu0 %v3879
    %3881 = vmatprep.subr.mxu0 0.0
    %v3882 = vand.u32 %v3419, 4294901760
    %v3883 = vsub.f32 %v3419, %v3882
    %3884 = vmatpush1.msra.mxu0 %v3883
    %3885 = vmatprep.subr.mxu0 0.0
    %v3886 = vand.u32 %v3420, 4294901760
    %v3887 = vsub.f32 %v3420, %v3886
    %3888 = vmatpush1.msra.mxu0 %v3887
    %3889 = vmatprep.subr.mxu0 0.0
    %v3890 = vand.u32 %v3421, 4294901760
    %v3891 = vsub.f32 %v3421, %v3890
    %3892 = vmatpush1.msra.mxu0 %v3891
    %3893 = vmatprep.subr.mxu0 0.0
    %v3894 = vand.u32 %v3422, 4294901760
    %v3895 = vsub.f32 %v3422, %v3894
    %3896 = vmatpush1.msra.mxu0 %v3895
    %3897 = vmatprep.subr.mxu0 0.0
    %v3898 = vand.u32 %v3423, 4294901760
    %v3899 = vsub.f32 %v3423, %v3898
    %3900 = vmatpush1.msra.mxu0 %v3899
    %3901 = vmatprep.subr.mxu0 0.0
    %v3902 = vand.u32 %v3424, 4294901760
    %v3903 = vsub.f32 %v3424, %v3902
    %3904 = vmatpush1.msra.mxu0 %v3903
    %3905 = vmatprep.subr.mxu0 0.0
    %v3906 = vand.u32 %v3425, 4294901760
    %v3907 = vsub.f32 %v3425, %v3906
    %3908 = vmatpush1.msra.mxu0 %v3907
    %3909 = vmatprep.subr.mxu0 0.0
    %v3910 = vand.u32 %v3426, 4294901760
    %v3911 = vsub.f32 %v3426, %v3910
    %3912 = vmatpush1.msra.mxu0 %v3911
    %3913 = vmatprep.subr.mxu0 0.0
    %v3914 = vand.u32 %v3427, 4294901760
    %v3915 = vsub.f32 %v3427, %v3914
    %3916 = vmatpush1.msra.mxu0 %v3915
    %3917 = vmatprep.subr.mxu0 0.0
    %v3918 = vand.u32 %v3428, 4294901760
    %v3919 = vsub.f32 %v3428, %v3918
    %3920 = vmatpush1.msra.mxu0 %v3919
    %3921 = vmatprep.subr.mxu0 0.0
    %v3922 = vand.u32 %v3429, 4294901760
    %v3923 = vsub.f32 %v3429, %v3922
    %3924 = vmatpush1.msra.mxu0 %v3923
    %3925 = vmatprep.subr.mxu0 0.0
    %v3926 = vand.u32 %v3430, 4294901760
    %v3927 = vsub.f32 %v3430, %v3926
    %3928 = vmatpush1.msra.mxu0 %v3927
    %3929 = vmatprep.subr.mxu0 0.0
    %v3930 = vand.u32 %v3431, 4294901760
    %v3931 = vsub.f32 %v3431, %v3930
    %3932 = vmatpush1.msra.mxu0 %v3931
    %3933 = vmatprep.subr.mxu0 0.0
    %v3934 = vand.u32 %v3432, 4294901760
    %v3935 = vsub.f32 %v3432, %v3934
    %3936 = vmatpush1.msra.mxu0 %v3935
    %3937 = vmatprep.subr.mxu0 0.0
    %v3938 = vand.u32 %v3433, 4294901760
    %v3939 = vsub.f32 %v3433, %v3938
    %3940 = vmatpush1.msra.mxu0 %v3939
    %3941 = vmatprep.subr.mxu0 0.0
    %v3942 = vand.u32 %v3434, 4294901760
    %v3943 = vsub.f32 %v3434, %v3942
    %3944 = vmatpush1.msra.mxu0 %v3943
    %v3945 = vand.u32 %v3396, 4294901760
    %v3946 = vsub.f32 %v3396, %v3945
    %3947 = vmatprep.mubr.f32.mxu0 %v3946
    %v3948 = vand.u32 %v3395, 4294901760
    %v3949 = vsub.f32 %v3395, %v3948
    %3950 = vmatmul.mubr.f32.gmra.mrb[0].mxu0 %v3949
    %v3951 = vpop.f32.mrb[0].mxu0
    %v3952 = vadd.f32 %v3807, %v3951
    %v3953 = vpop.f32.mrb[0].mxu0
    %v3954 = vand.u32 %v3399, 4294901760
    %v3955 = vsub.f32 %v3399, %v3954
    %3956 = vmatprep.mubr.f32.mxu0 %v3955
    %v3957 = vand.u32 %v3398, 4294901760
    %v3958 = vsub.f32 %v3398, %v3957
    %3959 = vmatmul.mubr.f32.gmra.mrb[0].mxu0 %v3958
    %v3960 = vpop.f32.mrb[0].mxu0
    %v3961 = vadd.f32 %v3814, %v3960
    %v3962 = vpop.f32.mrb[0].mxu0
    %3963 = vdwg.mxu0
    %3964 = vmatprep.subr.mxu0 0.0
    %v3965 = vand.u32 %v3403, 4294901760
    %3966 = vmatpush1.msra.mxu0 %v3965
    %3967 = vmatprep.subr.mxu0 0.0
    %v3968 = vand.u32 %v3404, 4294901760
    %3969 = vmatpush1.msra.mxu0 %v3968
    %3970 = vmatprep.subr.mxu0 0.0
    %v3971 = vand.u32 %v3405, 4294901760
    %3972 = vmatpush1.msra.mxu0 %v3971
    %3973 = vmatprep.subr.mxu0 0.0
    %v3974 = vand.u32 %v3406, 4294901760
    %3975 = vmatpush1.msra.mxu0 %v3974
    %3976 = vmatprep.subr.mxu0 0.0
    %v3977 = vand.u32 %v3407, 4294901760
    %3978 = vmatpush1.msra.mxu0 %v3977
    %3979 = vmatprep.subr.mxu0 0.0
    %v3980 = vand.u32 %v3408, 4294901760
    %3981 = vmatpush1.msra.mxu0 %v3980
    %3982 = vmatprep.subr.mxu0 0.0
    %v3983 = vand.u32 %v3409, 4294901760
    %3984 = vmatpush1.msra.mxu0 %v3983
    %3985 = vmatprep.subr.mxu0 0.0
    %v3986 = vand.u32 %v3410, 4294901760
    %3987 = vmatpush1.msra.mxu0 %v3986
    %3988 = vmatprep.subr.mxu0 0.0
    %v3989 = vand.u32 %v3411, 4294901760
    %3990 = vmatpush1.msra.mxu0 %v3989
    %3991 = vmatprep.subr.mxu0 0.0
    %v3992 = vand.u32 %v3412, 4294901760
    %3993 = vmatpush1.msra.mxu0 %v3992
    %3994 = vmatprep.subr.mxu0 0.0
    %v3995 = vand.u32 %v3413, 4294901760
    %3996 = vmatpush1.msra.mxu0 %v3995
    %3997 = vmatprep.subr.mxu0 0.0
    %v3998 = vand.u32 %v3414, 4294901760
    %3999 = vmatpush1.msra.mxu0 %v3998
    %4000 = vmatprep.subr.mxu0 0.0
    %v4001 = vand.u32 %v3415, 4294901760
    %4002 = vmatpush1.msra.mxu0 %v4001
    %4003 = vmatprep.subr.mxu0 0.0
    %v4004 = vand.u32 %v3416, 4294901760
    %4005 = vmatpush1.msra.mxu0 %v4004
    %4006 = vmatprep.subr.mxu0 0.0
    %v4007 = vand.u32 %v3417, 4294901760
    %4008 = vmatpush1.msra.mxu0 %v4007
    %4009 = vmatprep.subr.mxu0 0.0
    %v4010 = vand.u32 %v3418, 4294901760
    %4011 = vmatpush1.msra.mxu0 %v4010
    %4012 = vmatprep.subr.mxu0 0.0
    %v4013 = vand.u32 %v3419, 4294901760
    %4014 = vmatpush1.msra.mxu0 %v4013
    %4015 = vmatprep.subr.mxu0 0.0
    %v4016 = vand.u32 %v3420, 4294901760
    %4017 = vmatpush1.msra.mxu0 %v4016
    %4018 = vmatprep.subr.mxu0 0.0
    %v4019 = vand.u32 %v3421, 4294901760
    %4020 = vmatpush1.msra.mxu0 %v4019
    %4021 = vmatprep.subr.mxu0 0.0
    %v4022 = vand.u32 %v3422, 4294901760
    %4023 = vmatpush1.msra.mxu0 %v4022
    %4024 = vmatprep.subr.mxu0 0.0
    %v4025 = vand.u32 %v3423, 4294901760
    %4026 = vmatpush1.msra.mxu0 %v4025
    %4027 = vmatprep.subr.mxu0 0.0
    %v4028 = vand.u32 %v3424, 4294901760
    %4029 = vmatpush1.msra.mxu0 %v4028
    %4030 = vmatprep.subr.mxu0 0.0
    %v4031 = vand.u32 %v3425, 4294901760
    %4032 = vmatpush1.msra.mxu0 %v4031
    %4033 = vmatprep.subr.mxu0 0.0
    %v4034 = vand.u32 %v3426, 4294901760
    %4035 = vmatpush1.msra.mxu0 %v4034
    %4036 = vmatprep.subr.mxu0 0.0
    %v4037 = vand.u32 %v3427, 4294901760
    %4038 = vmatpush1.msra.mxu0 %v4037
    %4039 = vmatprep.subr.mxu0 0.0
    %v4040 = vand.u32 %v3428, 4294901760
    %4041 = vmatpush1.msra.mxu0 %v4040
    %4042 = vmatprep.subr.mxu0 0.0
    %v4043 = vand.u32 %v3429, 4294901760
    %4044 = vmatpush1.msra.mxu0 %v4043
    %4045 = vmatprep.subr.mxu0 0.0
    %v4046 = vand.u32 %v3430, 4294901760
    %4047 = vmatpush1.msra.mxu0 %v4046
    %4048 = vmatprep.subr.mxu0 0.0
    %v4049 = vand.u32 %v3431, 4294901760
    %4050 = vmatpush1.msra.mxu0 %v4049
    %4051 = vmatprep.subr.mxu0 0.0
    %v4052 = vand.u32 %v3432, 4294901760
    %4053 = vmatpush1.msra.mxu0 %v4052
    %4054 = vmatprep.subr.mxu0 0.0
    %v4055 = vand.u32 %v3433, 4294901760
    %4056 = vmatpush1.msra.mxu0 %v4055
    %4057 = vmatprep.subr.mxu0 0.0
    %v4058 = vand.u32 %v3434, 4294901760
    %4059 = vmatpush1.msra.mxu0 %v4058
    %v4060 = vand.u32 %v3396, 4294901760
    %v4061 = vsub.f32 %v3396, %v4060
    %v4062 = vand.u32 %v4061, 4294901760
    %4063 = vmatprep.mubr.f32.mxu0 %v4062
    %v4064 = vand.u32 %v3395, 4294901760
    %v4065 = vsub.f32 %v3395, %v4064
    %v4066 = vand.u32 %v4065, 4294901760
    %4067 = vmatmul.mubr.f32.gmra.mrb[0].mxu0 %v4066
    %v4068 = vpop.f32.mrb[0].mxu0
    %v4069 = vadd.f32 %v3952, %v4068
    %v4070 = vpop.f32.mrb[0].mxu0
    %v4071 = vand.u32 %v3399, 4294901760
    %v4072 = vsub.f32 %v3399, %v4071
    %v4073 = vand.u32 %v4072, 4294901760
    %4074 = vmatprep.mubr.f32.mxu0 %v4073
    %v4075 = vand.u32 %v3398, 4294901760
    %v4076 = vsub.f32 %v3398, %v4075
    %v4077 = vand.u32 %v4076, 4294901760
    %4078 = vmatmul.mubr.f32.gmra.mrb[0].mxu0 %v4077
    %v4079 = vpop.f32.mrb[0].mxu0
    %v4080 = vadd.f32 %v3961, %v4079
    %v4081 = vpop.f32.mrb[0].mxu0
    %4082 = vdwg.mxu0
    %4083 = vmatprep.subr.mxu0 0.0
    %v4084 = vand.u32 %v3403, 4294901760
    %v4085 = vsub.f32 %v3403, %v4084
    %v4086 = vand.u32 %v4085, 4294901760
    %4087 = vmatpush1.msra.mxu0 %v4086
    %4088 = vmatprep.subr.mxu0 0.0
    %v4089 = vand.u32 %v3404, 4294901760
    %v4090 = vsub.f32 %v3404, %v4089
    %v4091 = vand.u32 %v4090, 4294901760
    %4092 = vmatpush1.msra.mxu0 %v4091
    %4093 = vmatprep.subr.mxu0 0.0
    %v4094 = vand.u32 %v3405, 4294901760
    %v4095 = vsub.f32 %v3405, %v4094
    %v4096 = vand.u32 %v4095, 4294901760
    %4097 = vmatpush1.msra.mxu0 %v4096
    %4098 = vmatprep.subr.mxu0 0.0
    %v4099 = vand.u32 %v3406, 4294901760
    %v4100 = vsub.f32 %v3406, %v4099
    %v4101 = vand.u32 %v4100, 4294901760
    %4102 = vmatpush1.msra.mxu0 %v4101
    %4103 = vmatprep.subr.mxu0 0.0
    %v4104 = vand.u32 %v3407, 4294901760
    %v4105 = vsub.f32 %v3407, %v4104
    %v4106 = vand.u32 %v4105, 4294901760
    %4107 = vmatpush1.msra.mxu0 %v4106
    %4108 = vmatprep.subr.mxu0 0.0
    %v4109 = vand.u32 %v3408, 4294901760
    %v4110 = vsub.f32 %v3408, %v4109
    %v4111 = vand.u32 %v4110, 4294901760
    %4112 = vmatpush1.msra.mxu0 %v4111
    %4113 = vmatprep.subr.mxu0 0.0
    %v4114 = vand.u32 %v3409, 4294901760
    %v4115 = vsub.f32 %v3409, %v4114
    %v4116 = vand.u32 %v4115, 4294901760
    %4117 = vmatpush1.msra.mxu0 %v4116
    %4118 = vmatprep.subr.mxu0 0.0
    %v4119 = vand.u32 %v3410, 4294901760
    %v4120 = vsub.f32 %v3410, %v4119
    %v4121 = vand.u32 %v4120, 4294901760
    %4122 = vmatpush1.msra.mxu0 %v4121
    %4123 = vmatprep.subr.mxu0 0.0
    %v4124 = vand.u32 %v3411, 4294901760
    %v4125 = vsub.f32 %v3411, %v4124
    %v4126 = vand.u32 %v4125, 4294901760
    %4127 = vmatpush1.msra.mxu0 %v4126
    %4128 = vmatprep.subr.mxu0 0.0
    %v4129 = vand.u32 %v3412, 4294901760
    %v4130 = vsub.f32 %v3412, %v4129
    %v4131 = vand.u32 %v4130, 4294901760
    %4132 = vmatpush1.msra.mxu0 %v4131
    %4133 = vmatprep.subr.mxu0 0.0
    %v4134 = vand.u32 %v3413, 4294901760
    %v4135 = vsub.f32 %v3413, %v4134
    %v4136 = vand.u32 %v4135, 4294901760
    %4137 = vmatpush1.msra.mxu0 %v4136
    %4138 = vmatprep.subr.mxu0 0.0
    %v4139 = vand.u32 %v3414, 4294901760
    %v4140 = vsub.f32 %v3414, %v4139
    %v4141 = vand.u32 %v4140, 4294901760
    %4142 = vmatpush1.msra.mxu0 %v4141
    %4143 = vmatprep.subr.mxu0 0.0
    %v4144 = vand.u32 %v3415, 4294901760
    %v4145 = vsub.f32 %v3415, %v4144
    %v4146 = vand.u32 %v4145, 4294901760
    %4147 = vmatpush1.msra.mxu0 %v4146
    %4148 = vmatprep.subr.mxu0 0.0
    %v4149 = vand.u32 %v3416, 4294901760
    %v4150 = vsub.f32 %v3416, %v4149
    %v4151 = vand.u32 %v4150, 4294901760
    %4152 = vmatpush1.msra.mxu0 %v4151
    %4153 = vmatprep.subr.mxu0 0.0
    %v4154 = vand.u32 %v3417, 4294901760
    %v4155 = vsub.f32 %v3417, %v4154
    %v4156 = vand.u32 %v4155, 4294901760
    %4157 = vmatpush1.msra.mxu0 %v4156
    %4158 = vmatprep.subr.mxu0 0.0
    %v4159 = vand.u32 %v3418, 4294901760
    %v4160 = vsub.f32 %v3418, %v4159
    %v4161 = vand.u32 %v4160, 4294901760
    %4162 = vmatpush1.msra.mxu0 %v4161
    %4163 = vmatprep.subr.mxu0 0.0
    %v4164 = vand.u32 %v3419, 4294901760
    %v4165 = vsub.f32 %v3419, %v4164
    %v4166 = vand.u32 %v4165, 4294901760
    %4167 = vmatpush1.msra.mxu0 %v4166
    %4168 = vmatprep.subr.mxu0 0.0
    %v4169 = vand.u32 %v3420, 4294901760
    %v4170 = vsub.f32 %v3420, %v4169
    %v4171 = vand.u32 %v4170, 4294901760
    %4172 = vmatpush1.msra.mxu0 %v4171
    %4173 = vmatprep.subr.mxu0 0.0
    %v4174 = vand.u32 %v3421, 4294901760
    %v4175 = vsub.f32 %v3421, %v4174
    %v4176 = vand.u32 %v4175, 4294901760
    %4177 = vmatpush1.msra.mxu0 %v4176
    %4178 = vmatprep.subr.mxu0 0.0
    %v4179 = vand.u32 %v3422, 4294901760
    %v4180 = vsub.f32 %v3422, %v4179
    %v4181 = vand.u32 %v4180, 4294901760
    %4182 = vmatpush1.msra.mxu0 %v4181
    %4183 = vmatprep.subr.mxu0 0.0
    %v4184 = vand.u32 %v3423, 4294901760
    %v4185 = vsub.f32 %v3423, %v4184
    %v4186 = vand.u32 %v4185, 4294901760
    %4187 = vmatpush1.msra.mxu0 %v4186
    %4188 = vmatprep.subr.mxu0 0.0
    %v4189 = vand.u32 %v3424, 4294901760
    %v4190 = vsub.f32 %v3424, %v4189
    %v4191 = vand.u32 %v4190, 4294901760
    %4192 = vmatpush1.msra.mxu0 %v4191
    %4193 = vmatprep.subr.mxu0 0.0
    %v4194 = vand.u32 %v3425, 4294901760
    %v4195 = vsub.f32 %v3425, %v4194
    %v4196 = vand.u32 %v4195, 4294901760
    %4197 = vmatpush1.msra.mxu0 %v4196
    %4198 = vmatprep.subr.mxu0 0.0
    %v4199 = vand.u32 %v3426, 4294901760
    %v4200 = vsub.f32 %v3426, %v4199
    %v4201 = vand.u32 %v4200, 4294901760
    %4202 = vmatpush1.msra.mxu0 %v4201
    %4203 = vmatprep.subr.mxu0 0.0
    %v4204 = vand.u32 %v3427, 4294901760
    %v4205 = vsub.f32 %v3427, %v4204
    %v4206 = vand.u32 %v4205, 4294901760
    %4207 = vmatpush1.msra.mxu0 %v4206
    %4208 = vmatprep.subr.mxu0 0.0
    %v4209 = vand.u32 %v3428, 4294901760
    %v4210 = vsub.f32 %v3428, %v4209
    %v4211 = vand.u32 %v4210, 4294901760
    %4212 = vmatpush1.msra.mxu0 %v4211
    %4213 = vmatprep.subr.mxu0 0.0
    %v4214 = vand.u32 %v3429, 4294901760
    %v4215 = vsub.f32 %v3429, %v4214
    %v4216 = vand.u32 %v4215, 4294901760
    %4217 = vmatpush1.msra.mxu0 %v4216
    %4218 = vmatprep.subr.mxu0 0.0
    %v4219 = vand.u32 %v3430, 4294901760
    %v4220 = vsub.f32 %v3430, %v4219
    %v4221 = vand.u32 %v4220, 4294901760
    %4222 = vmatpush1.msra.mxu0 %v4221
    %4223 = vmatprep.subr.mxu0 0.0
    %v4224 = vand.u32 %v3431, 4294901760
    %v4225 = vsub.f32 %v3431, %v4224
    %v4226 = vand.u32 %v4225, 4294901760
    %4227 = vmatpush1.msra.mxu0 %v4226
    %4228 = vmatprep.subr.mxu0 0.0
    %v4229 = vand.u32 %v3432, 4294901760
    %v4230 = vsub.f32 %v3432, %v4229
    %v4231 = vand.u32 %v4230, 4294901760
    %4232 = vmatpush1.msra.mxu0 %v4231
    %4233 = vmatprep.subr.mxu0 0.0
    %v4234 = vand.u32 %v3433, 4294901760
    %v4235 = vsub.f32 %v3433, %v4234
    %v4236 = vand.u32 %v4235, 4294901760
    %4237 = vmatpush1.msra.mxu0 %v4236
    %4238 = vmatprep.subr.mxu0 0.0
    %v4239 = vand.u32 %v3434, 4294901760
    %v4240 = vsub.f32 %v3434, %v4239
    %v4241 = vand.u32 %v4240, 4294901760
    %4242 = vmatpush1.msra.mxu0 %v4241
    %v4243 = vand.u32 %v3396, 4294901760
    %4244 = vmatprep.mubr.f32.mxu0 %v4243
    %v4245 = vand.u32 %v3395, 4294901760
    %4246 = vmatmul.mubr.f32.gmra.mrb[0].mxu0 %v4245
    %v4247 = vpop.f32.mrb[0].mxu0
    %v4248 = vadd.f32 %v4069, %v4247
    %v4249 = vpop.f32.mrb[0].mxu0
    %v4250 = vand.u32 %v3399, 4294901760
    %4251 = vmatprep.mubr.f32.mxu0 %v4250
    %v4252 = vand.u32 %v3398, 4294901760
    %4253 = vmatmul.mubr.f32.gmra.mrb[0].mxu0 %v4252
    %v4254 = vpop.f32.mrb[0].mxu0
    %v4255 = vadd.f32 %v4080, %v4254
    %v4256 = vpop.f32.mrb[0].mxu0
    %4257 = vdwg.mxu0
    %4258 = vmatprep.subr.mxu0 0.0
    %v4259 = vand.u32 %v3403, 4294901760
    %4260 = vmatpush1.msra.mxu0 %v4259
    %4261 = vmatprep.subr.mxu0 0.0
    %v4262 = vand.u32 %v3404, 4294901760
    %4263 = vmatpush1.msra.mxu0 %v4262
    %4264 = vmatprep.subr.mxu0 0.0
    %v4265 = vand.u32 %v3405, 4294901760
    %4266 = vmatpush1.msra.mxu0 %v4265
    %4267 = vmatprep.subr.mxu0 0.0
    %v4268 = vand.u32 %v3406, 4294901760
    %4269 = vmatpush1.msra.mxu0 %v4268
    %4270 = vmatprep.subr.mxu0 0.0
    %v4271 = vand.u32 %v3407, 4294901760
    %4272 = vmatpush1.msra.mxu0 %v4271
    %4273 = vmatprep.subr.mxu0 0.0
    %v4274 = vand.u32 %v3408, 4294901760
    %4275 = vmatpush1.msra.mxu0 %v4274
    %4276 = vmatprep.subr.mxu0 0.0
    %v4277 = vand.u32 %v3409, 4294901760
    %4278 = vmatpush1.msra.mxu0 %v4277
    %4279 = vmatprep.subr.mxu0 0.0
    %v4280 = vand.u32 %v3410, 4294901760
    %4281 = vmatpush1.msra.mxu0 %v4280
    %4282 = vmatprep.subr.mxu0 0.0
    %v4283 = vand.u32 %v3411, 4294901760
    %4284 = vmatpush1.msra.mxu0 %v4283
    %4285 = vmatprep.subr.mxu0 0.0
    %v4286 = vand.u32 %v3412, 4294901760
    %4287 = vmatpush1.msra.mxu0 %v4286
    %4288 = vmatprep.subr.mxu0 0.0
    %v4289 = vand.u32 %v3413, 4294901760
    %4290 = vmatpush1.msra.mxu0 %v4289
    %4291 = vmatprep.subr.mxu0 0.0
    %v4292 = vand.u32 %v3414, 4294901760
    %4293 = vmatpush1.msra.mxu0 %v4292
    %4294 = vmatprep.subr.mxu0 0.0
    %v4295 = vand.u32 %v3415, 4294901760
    %4296 = vmatpush1.msra.mxu0 %v4295
    %4297 = vmatprep.subr.mxu0 0.0
    %v4298 = vand.u32 %v3416, 4294901760
    %4299 = vmatpush1.msra.mxu0 %v4298
    %4300 = vmatprep.subr.mxu0 0.0
    %v4301 = vand.u32 %v3417, 4294901760
    %4302 = vmatpush1.msra.mxu0 %v4301
    %4303 = vmatprep.subr.mxu0 0.0
    %v4304 = vand.u32 %v3418, 4294901760
    %4305 = vmatpush1.msra.mxu0 %v4304
    %4306 = vmatprep.subr.mxu0 0.0
    %v4307 = vand.u32 %v3419, 4294901760
    %4308 = vmatpush1.msra.mxu0 %v4307
    %4309 = vmatprep.subr.mxu0 0.0
    %v4310 = vand.u32 %v3420, 4294901760
    %4311 = vmatpush1.msra.mxu0 %v4310
    %4312 = vmatprep.subr.mxu0 0.0
    %v4313 = vand.u32 %v3421, 4294901760
    %4314 = vmatpush1.msra.mxu0 %v4313
    %4315 = vmatprep.subr.mxu0 0.0
    %v4316 = vand.u32 %v3422, 4294901760
    %4317 = vmatpush1.msra.mxu0 %v4316
    %4318 = vmatprep.subr.mxu0 0.0
    %v4319 = vand.u32 %v3423, 4294901760
    %4320 = vmatpush1.msra.mxu0 %v4319
    %4321 = vmatprep.subr.mxu0 0.0
    %v4322 = vand.u32 %v3424, 4294901760
    %4323 = vmatpush1.msra.mxu0 %v4322
    %4324 = vmatprep.subr.mxu0 0.0
    %v4325 = vand.u32 %v3425, 4294901760
    %4326 = vmatpush1.msra.mxu0 %v4325
    %4327 = vmatprep.subr.mxu0 0.0
    %v4328 = vand.u32 %v3426, 4294901760
    %4329 = vmatpush1.msra.mxu0 %v4328
    %4330 = vmatprep.subr.mxu0 0.0
    %v4331 = vand.u32 %v3427, 4294901760
    %4332 = vmatpush1.msra.mxu0 %v4331
    %4333 = vmatprep.subr.mxu0 0.0
    %v4334 = vand.u32 %v3428, 4294901760
    %4335 = vmatpush1.msra.mxu0 %v4334
    %4336 = vmatprep.subr.mxu0 0.0
    %v4337 = vand.u32 %v3429, 4294901760
    %4338 = vmatpush1.msra.mxu0 %v4337
    %4339 = vmatprep.subr.mxu0 0.0
    %v4340 = vand.u32 %v3430, 4294901760
    %4341 = vmatpush1.msra.mxu0 %v4340
    %4342 = vmatprep.subr.mxu0 0.0
    %v4343 = vand.u32 %v3431, 4294901760
    %4344 = vmatpush1.msra.mxu0 %v4343
    %4345 = vmatprep.subr.mxu0 0.0
    %v4346 = vand.u32 %v3432, 4294901760
    %4347 = vmatpush1.msra.mxu0 %v4346
    %4348 = vmatprep.subr.mxu0 0.0
    %v4349 = vand.u32 %v3433, 4294901760
    %4350 = vmatpush1.msra.mxu0 %v4349
    %4351 = vmatprep.subr.mxu0 0.0
    %v4352 = vand.u32 %v3434, 4294901760
    %4353 = vmatpush1.msra.mxu0 %v4352
    %v4354 = vand.u32 %v3396, 4294901760
    %4355 = vmatprep.mubr.f32.mxu0 %v4354
    %v4356 = vand.u32 %v3395, 4294901760
    %4357 = vmatmul.mubr.f32.gmra.mrb[0].mxu0 %v4356
    %v4358 = vpop.f32.mrb[0].mxu0
    %v4359 = vadd.f32 %v4248, %v4358
    %v4360 = vpop.f32.mrb[0].mxu0
    %v4361 = vand.u32 %v3399, 4294901760
    %4362 = vmatprep.mubr.f32.mxu0 %v4361
    %v4363 = vand.u32 %v3398, 4294901760
    %4364 = vmatmul.mubr.f32.gmra.mrb[0].mxu0 %v4363
    %v4365 = vpop.f32.mrb[0].mxu0
    %v4366 = vadd.f32 %v4255, %v4365
    %v4367 = vpop.f32.mrb[0].mxu0
    %4368 = vdwg.mxu0
    %4369 = vmatprep.subr.mxu0 0.0
    %v4370 = vand.u32 %v3435, 4294901760
    %4371 = vmatpush1.msra.mxu0 %v4370
    %4372 = vmatprep.subr.mxu0 0.0
    %v4373 = vand.u32 %v3436, 4294901760
    %4374 = vmatpush1.msra.mxu0 %v4373
    %4375 = vmatprep.subr.mxu0 0.0
    %v4376 = vand.u32 %v3437, 4294901760
    %4377 = vmatpush1.msra.mxu0 %v4376
    %4378 = vmatprep.subr.mxu0 0.0
    %v4379 = vand.u32 %v3438, 4294901760
    %4380 = vmatpush1.msra.mxu0 %v4379
    %4381 = vmatprep.subr.mxu0 0.0
    %v4382 = vand.u32 %v3439, 4294901760
    %4383 = vmatpush1.msra.mxu0 %v4382
    %4384 = vmatprep.subr.mxu0 0.0
    %v4385 = vand.u32 %v3440, 4294901760
    %4386 = vmatpush1.msra.mxu0 %v4385
    %4387 = vmatprep.subr.mxu0 0.0
    %v4388 = vand.u32 %v3441, 4294901760
    %4389 = vmatpush1.msra.mxu0 %v4388
    %4390 = vmatprep.subr.mxu0 0.0
    %v4391 = vand.u32 %v3442, 4294901760
    %4392 = vmatpush1.msra.mxu0 %v4391
    %4393 = vmatprep.subr.mxu0 0.0
    %v4394 = vand.u32 %v3443, 4294901760
    %4395 = vmatpush1.msra.mxu0 %v4394
    %4396 = vmatprep.subr.mxu0 0.0
    %v4397 = vand.u32 %v3444, 4294901760
    %4398 = vmatpush1.msra.mxu0 %v4397
    %4399 = vmatprep.subr.mxu0 0.0
    %v4400 = vand.u32 %v3445, 4294901760
    %4401 = vmatpush1.msra.mxu0 %v4400
    %4402 = vmatprep.subr.mxu0 0.0
    %v4403 = vand.u32 %v3446, 4294901760
    %4404 = vmatpush1.msra.mxu0 %v4403
    %4405 = vmatprep.subr.mxu0 0.0
    %v4406 = vand.u32 %v3447, 4294901760
    %4407 = vmatpush1.msra.mxu0 %v4406
    %4408 = vmatprep.subr.mxu0 0.0
    %v4409 = vand.u32 %v3448, 4294901760
    %4410 = vmatpush1.msra.mxu0 %v4409
    %4411 = vmatprep.subr.mxu0 0.0
    %v4412 = vand.u32 %v3449, 4294901760
    %4413 = vmatpush1.msra.mxu0 %v4412
    %4414 = vmatprep.subr.mxu0 0.0
    %v4415 = vand.u32 %v3450, 4294901760
    %4416 = vmatpush1.msra.mxu0 %v4415
    %4417 = vmatprep.subr.mxu0 0.0
    %4418 = vmatpush1.msra.mxu0 0.0
    %4419 = vmatprep.subr.mxu0 0.0
    %4420 = vmatpush1.msra.mxu0 0.0
    %4421 = vmatprep.subr.mxu0 0.0
    %4422 = vmatpush1.msra.mxu0 0.0
    %4423 = vmatprep.subr.mxu0 0.0
    %4424 = vmatpush1.msra.mxu0 0.0
    %4425 = vmatprep.subr.mxu0 0.0
    %4426 = vmatpush1.msra.mxu0 0.0
    %4427 = vmatprep.subr.mxu0 0.0
    %4428 = vmatpush1.msra.mxu0 0.0
    %4429 = vmatprep.subr.mxu0 0.0
    %4430 = vmatpush1.msra.mxu0 0.0
    %4431 = vmatprep.subr.mxu0 0.0
    %4432 = vmatpush1.msra.mxu0 0.0
    %4433 = vmatprep.subr.mxu0 0.0
    %4434 = vmatpush1.msra.mxu0 0.0
    %4435 = vmatprep.subr.mxu0 0.0
    %4436 = vmatpush1.msra.mxu0 0.0
    %4437 = vmatprep.subr.mxu0 0.0
    %4438 = vmatpush1.msra.mxu0 0.0
    %4439 = vmatprep.subr.mxu0 0.0
    %4440 = vmatpush1.msra.mxu0 0.0
    %4441 = vmatprep.subr.mxu0 0.0
    %4442 = vmatpush1.msra.mxu0 0.0
    %4443 = vmatprep.subr.mxu0 0.0
    %4444 = vmatpush1.msra.mxu0 0.0
    %4445 = vmatprep.subr.mxu0 0.0
    %4446 = vmatpush1.msra.mxu0 0.0
    %4447 = vmatprep.subr.mxu0 0.0
    %4448 = vmatpush1.msra.mxu0 0.0
    %4449 = vmatprep.mubr.f32.mxu0 0.0
    %v4450 = vand.u32 %v3397, 4294901760
    %v4451 = vsub.f32 %v3397, %v4450
    %v4452 = vand.u32 %v4451, 4294901760
    %v4453 = vsub.f32 %v4451, %v4452
    %v4454 = vand.u32 %v4453, 4294901760
    %4455 = vmatmul.mubr.f32.gmra.mrb[0].mxu0 %v4454
    %v4456 = vpop.f32.mrb[0].mxu0
    %v4457 = vadd.f32 %v4359, %v4456
    %v4458 = vpop.f32.mrb[0].mxu0
    %4459 = vmatprep.mubr.f32.mxu0 0.0
    %v4460 = vand.u32 %v3400, 4294901760
    %v4461 = vsub.f32 %v3400, %v4460
    %v4462 = vand.u32 %v4461, 4294901760
    %v4463 = vsub.f32 %v4461, %v4462
    %v4464 = vand.u32 %v4463, 4294901760
    %4465 = vmatmul.mubr.f32.gmra.mrb[0].mxu0 %v4464
    %v4466 = vpop.f32.mrb[0].mxu0
    %v4467 = vadd.f32 %v4366, %v4466
    %v4468 = vpop.f32.mrb[0].mxu0
    %4469 = vdwg.mxu0
    %4470 = vmatprep.subr.mxu0 0.0
    %v4471 = vand.u32 %v3435, 4294901760
    %v4472 = vsub.f32 %v3435, %v4471
    %v4473 = vand.u32 %v4472, 4294901760
    %v4474 = vsub.f32 %v4472, %v4473
    %v4475 = vand.u32 %v4474, 4294901760
    %4476 = vmatpush1.msra.mxu0 %v4475
    %4477 = vmatprep.subr.mxu0 0.0
    %v4478 = vand.u32 %v3436, 4294901760
    %v4479 = vsub.f32 %v3436, %v4478
    %v4480 = vand.u32 %v4479, 4294901760
    %v4481 = vsub.f32 %v4479, %v4480
    %v4482 = vand.u32 %v4481, 4294901760
    %4483 = vmatpush1.msra.mxu0 %v4482
    %4484 = vmatprep.subr.mxu0 0.0
    %v4485 = vand.u32 %v3437, 4294901760
    %v4486 = vsub.f32 %v3437, %v4485
    %v4487 = vand.u32 %v4486, 4294901760
    %v4488 = vsub.f32 %v4486, %v4487
    %v4489 = vand.u32 %v4488, 4294901760
    %4490 = vmatpush1.msra.mxu0 %v4489
    %4491 = vmatprep.subr.mxu0 0.0
    %v4492 = vand.u32 %v3438, 4294901760
    %v4493 = vsub.f32 %v3438, %v4492
    %v4494 = vand.u32 %v4493, 4294901760
    %v4495 = vsub.f32 %v4493, %v4494
    %v4496 = vand.u32 %v4495, 4294901760
    %4497 = vmatpush1.msra.mxu0 %v4496
    %4498 = vmatprep.subr.mxu0 0.0
    %v4499 = vand.u32 %v3439, 4294901760
    %v4500 = vsub.f32 %v3439, %v4499
    %v4501 = vand.u32 %v4500, 4294901760
    %v4502 = vsub.f32 %v4500, %v4501
    %v4503 = vand.u32 %v4502, 4294901760
    %4504 = vmatpush1.msra.mxu0 %v4503
    %4505 = vmatprep.subr.mxu0 0.0
    %v4506 = vand.u32 %v3440, 4294901760
    %v4507 = vsub.f32 %v3440, %v4506
    %v4508 = vand.u32 %v4507, 4294901760
    %v4509 = vsub.f32 %v4507, %v4508
    %v4510 = vand.u32 %v4509, 4294901760
    %4511 = vmatpush1.msra.mxu0 %v4510
    %4512 = vmatprep.subr.mxu0 0.0
    %v4513 = vand.u32 %v3441, 4294901760
    %v4514 = vsub.f32 %v3441, %v4513
    %v4515 = vand.u32 %v4514, 4294901760
    %v4516 = vsub.f32 %v4514, %v4515
    %v4517 = vand.u32 %v4516, 4294901760
    %4518 = vmatpush1.msra.mxu0 %v4517
    %4519 = vmatprep.subr.mxu0 0.0
    %v4520 = vand.u32 %v3442, 4294901760
    %v4521 = vsub.f32 %v3442, %v4520
    %v4522 = vand.u32 %v4521, 4294901760
    %v4523 = vsub.f32 %v4521, %v4522
    %v4524 = vand.u32 %v4523, 4294901760
    %4525 = vmatpush1.msra.mxu0 %v4524
    %4526 = vmatprep.subr.mxu0 0.0
    %v4527 = vand.u32 %v3443, 4294901760
    %v4528 = vsub.f32 %v3443, %v4527
    %v4529 = vand.u32 %v4528, 4294901760
    %v4530 = vsub.f32 %v4528, %v4529
    %v4531 = vand.u32 %v4530, 4294901760
    %4532 = vmatpush1.msra.mxu0 %v4531
    %4533 = vmatprep.subr.mxu0 0.0
    %v4534 = vand.u32 %v3444, 4294901760
    %v4535 = vsub.f32 %v3444, %v4534
    %v4536 = vand.u32 %v4535, 4294901760
    %v4537 = vsub.f32 %v4535, %v4536
    %v4538 = vand.u32 %v4537, 4294901760
    %4539 = vmatpush1.msra.mxu0 %v4538
    %4540 = vmatprep.subr.mxu0 0.0
    %v4541 = vand.u32 %v3445, 4294901760
    %v4542 = vsub.f32 %v3445, %v4541
    %v4543 = vand.u32 %v4542, 4294901760
    %v4544 = vsub.f32 %v4542, %v4543
    %v4545 = vand.u32 %v4544, 4294901760
    %4546 = vmatpush1.msra.mxu0 %v4545
    %4547 = vmatprep.subr.mxu0 0.0
    %v4548 = vand.u32 %v3446, 4294901760
    %v4549 = vsub.f32 %v3446, %v4548
    %v4550 = vand.u32 %v4549, 4294901760
    %v4551 = vsub.f32 %v4549, %v4550
    %v4552 = vand.u32 %v4551, 4294901760
    %4553 = vmatpush1.msra.mxu0 %v4552
    %4554 = vmatprep.subr.mxu0 0.0
    %v4555 = vand.u32 %v3447, 4294901760
    %v4556 = vsub.f32 %v3447, %v4555
    %v4557 = vand.u32 %v4556, 4294901760
    %v4558 = vsub.f32 %v4556, %v4557
    %v4559 = vand.u32 %v4558, 4294901760
    %4560 = vmatpush1.msra.mxu0 %v4559
    %4561 = vmatprep.subr.mxu0 0.0
    %v4562 = vand.u32 %v3448, 4294901760
    %v4563 = vsub.f32 %v3448, %v4562
    %v4564 = vand.u32 %v4563, 4294901760
    %v4565 = vsub.f32 %v4563, %v4564
    %v4566 = vand.u32 %v4565, 4294901760
    %4567 = vmatpush1.msra.mxu0 %v4566
    %4568 = vmatprep.subr.mxu0 0.0
    %v4569 = vand.u32 %v3449, 4294901760
    %v4570 = vsub.f32 %v3449, %v4569
    %v4571 = vand.u32 %v4570, 4294901760
    %v4572 = vsub.f32 %v4570, %v4571
    %v4573 = vand.u32 %v4572, 4294901760
    %4574 = vmatpush1.msra.mxu0 %v4573
    %4575 = vmatprep.subr.mxu0 0.0
    %v4576 = vand.u32 %v3450, 4294901760
    %v4577 = vsub.f32 %v3450, %v4576
    %v4578 = vand.u32 %v4577, 4294901760
    %v4579 = vsub.f32 %v4577, %v4578
    %v4580 = vand.u32 %v4579, 4294901760
    %4581 = vmatpush1.msra.mxu0 %v4580
    %4582 = vmatprep.subr.mxu0 0.0
    %4583 = vmatpush1.msra.mxu0 0.0
    %4584 = vmatprep.subr.mxu0 0.0
    %4585 = vmatpush1.msra.mxu0 0.0
    %4586 = vmatprep.subr.mxu0 0.0
    %4587 = vmatpush1.msra.mxu0 0.0
    %4588 = vmatprep.subr.mxu0 0.0
    %4589 = vmatpush1.msra.mxu0 0.0
    %4590 = vmatprep.subr.mxu0 0.0
    %4591 = vmatpush1.msra.mxu0 0.0
    %4592 = vmatprep.subr.mxu0 0.0
    %4593 = vmatpush1.msra.mxu0 0.0
    %4594 = vmatprep.subr.mxu0 0.0
    %4595 = vmatpush1.msra.mxu0 0.0
    %4596 = vmatprep.subr.mxu0 0.0
    %4597 = vmatpush1.msra.mxu0 0.0
    %4598 = vmatprep.subr.mxu0 0.0
    %4599 = vmatpush1.msra.mxu0 0.0
    %4600 = vmatprep.subr.mxu0 0.0
    %4601 = vmatpush1.msra.mxu0 0.0
    %4602 = vmatprep.subr.mxu0 0.0
    %4603 = vmatpush1.msra.mxu0 0.0
    %4604 = vmatprep.subr.mxu0 0.0
    %4605 = vmatpush1.msra.mxu0 0.0
    %4606 = vmatprep.subr.mxu0 0.0
    %4607 = vmatpush1.msra.mxu0 0.0
    %4608 = vmatprep.subr.mxu0 0.0
    %4609 = vmatpush1.msra.mxu0 0.0
    %4610 = vmatprep.subr.mxu0 0.0
    %4611 = vmatpush1.msra.mxu0 0.0
    %4612 = vmatprep.subr.mxu0 0.0
    %4613 = vmatpush1.msra.mxu0 0.0
    %4614 = vmatprep.mubr.f32.mxu0 0.0
    %v4615 = vand.u32 %v3397, 4294901760
    %4616 = vmatmul.mubr.f32.gmra.mrb[0].mxu0 %v4615
    %v4617 = vpop.f32.mrb[0].mxu0
    %v4618 = vadd.f32 %v4457, %v4617
    %v4619 = vpop.f32.mrb[0].mxu0
    %4620 = vmatprep.mubr.f32.mxu0 0.0
    %v4621 = vand.u32 %v3400, 4294901760
    %4622 = vmatmul.mubr.f32.gmra.mrb[0].mxu0 %v4621
    %v4623 = vpop.f32.mrb[0].mxu0
    %v4624 = vadd.f32 %v4467, %v4623
    %v4625 = vpop.f32.mrb[0].mxu0
    %4626 = vdwg.mxu0
    %4627 = vmatprep.subr.mxu0 0.0
    %v4628 = vand.u32 %v3435, 4294901760
    %v4629 = vsub.f32 %v3435, %v4628
    %4630 = vmatpush1.msra.mxu0 %v4629
    %4631 = vmatprep.subr.mxu0 0.0
    %v4632 = vand.u32 %v3436, 4294901760
    %v4633 = vsub.f32 %v3436, %v4632
    %4634 = vmatpush1.msra.mxu0 %v4633
    %4635 = vmatprep.subr.mxu0 0.0
    %v4636 = vand.u32 %v3437, 4294901760
    %v4637 = vsub.f32 %v3437, %v4636
    %4638 = vmatpush1.msra.mxu0 %v4637
    %4639 = vmatprep.subr.mxu0 0.0
    %v4640 = vand.u32 %v3438, 4294901760
    %v4641 = vsub.f32 %v3438, %v4640
    %4642 = vmatpush1.msra.mxu0 %v4641
    %4643 = vmatprep.subr.mxu0 0.0
    %v4644 = vand.u32 %v3439, 4294901760
    %v4645 = vsub.f32 %v3439, %v4644
    %4646 = vmatpush1.msra.mxu0 %v4645
    %4647 = vmatprep.subr.mxu0 0.0
    %v4648 = vand.u32 %v3440, 4294901760
    %v4649 = vsub.f32 %v3440, %v4648
    %4650 = vmatpush1.msra.mxu0 %v4649
    %4651 = vmatprep.subr.mxu0 0.0
    %v4652 = vand.u32 %v3441, 4294901760
    %v4653 = vsub.f32 %v3441, %v4652
    %4654 = vmatpush1.msra.mxu0 %v4653
    %4655 = vmatprep.subr.mxu0 0.0
    %v4656 = vand.u32 %v3442, 4294901760
    %v4657 = vsub.f32 %v3442, %v4656
    %4658 = vmatpush1.msra.mxu0 %v4657
    %4659 = vmatprep.subr.mxu0 0.0
    %v4660 = vand.u32 %v3443, 4294901760
    %v4661 = vsub.f32 %v3443, %v4660
    %4662 = vmatpush1.msra.mxu0 %v4661
    %4663 = vmatprep.subr.mxu0 0.0
    %v4664 = vand.u32 %v3444, 4294901760
    %v4665 = vsub.f32 %v3444, %v4664
    %4666 = vmatpush1.msra.mxu0 %v4665
    %4667 = vmatprep.subr.mxu0 0.0
    %v4668 = vand.u32 %v3445, 4294901760
    %v4669 = vsub.f32 %v3445, %v4668
    %4670 = vmatpush1.msra.mxu0 %v4669
    %4671 = vmatprep.subr.mxu0 0.0
    %v4672 = vand.u32 %v3446, 4294901760
    %v4673 = vsub.f32 %v3446, %v4672
    %4674 = vmatpush1.msra.mxu0 %v4673
    %4675 = vmatprep.subr.mxu0 0.0
    %v4676 = vand.u32 %v3447, 4294901760
    %v4677 = vsub.f32 %v3447, %v4676
    %4678 = vmatpush1.msra.mxu0 %v4677
    %4679 = vmatprep.subr.mxu0 0.0
    %v4680 = vand.u32 %v3448, 4294901760
    %v4681 = vsub.f32 %v3448, %v4680
    %4682 = vmatpush1.msra.mxu0 %v4681
    %4683 = vmatprep.subr.mxu0 0.0
    %v4684 = vand.u32 %v3449, 4294901760
    %v4685 = vsub.f32 %v3449, %v4684
    %4686 = vmatpush1.msra.mxu0 %v4685
    %4687 = vmatprep.subr.mxu0 0.0
    %v4688 = vand.u32 %v3450, 4294901760
    %v4689 = vsub.f32 %v3450, %v4688
    %4690 = vmatpush1.msra.mxu0 %v4689
    %4691 = vmatprep.subr.mxu0 0.0
    %4692 = vmatpush1.msra.mxu0 0.0
    %4693 = vmatprep.subr.mxu0 0.0
    %4694 = vmatpush1.msra.mxu0 0.0
    %4695 = vmatprep.subr.mxu0 0.0
    %4696 = vmatpush1.msra.mxu0 0.0
    %4697 = vmatprep.subr.mxu0 0.0
    %4698 = vmatpush1.msra.mxu0 0.0
    %4699 = vmatprep.subr.mxu0 0.0
    %4700 = vmatpush1.msra.mxu0 0.0
    %4701 = vmatprep.subr.mxu0 0.0
    %4702 = vmatpush1.msra.mxu0 0.0
    %4703 = vmatprep.subr.mxu0 0.0
    %4704 = vmatpush1.msra.mxu0 0.0
    %4705 = vmatprep.subr.mxu0 0.0
    %4706 = vmatpush1.msra.mxu0 0.0
    %4707 = vmatprep.subr.mxu0 0.0
    %4708 = vmatpush1.msra.mxu0 0.0
    %4709 = vmatprep.subr.mxu0 0.0
    %4710 = vmatpush1.msra.mxu0 0.0
    %4711 = vmatprep.subr.mxu0 0.0
    %4712 = vmatpush1.msra.mxu0 0.0
    %4713 = vmatprep.subr.mxu0 0.0
    %4714 = vmatpush1.msra.mxu0 0.0
    %4715 = vmatprep.subr.mxu0 0.0
    %4716 = vmatpush1.msra.mxu0 0.0
    %4717 = vmatprep.subr.mxu0 0.0
    %4718 = vmatpush1.msra.mxu0 0.0
    %4719 = vmatprep.subr.mxu0 0.0
    %4720 = vmatpush1.msra.mxu0 0.0
    %4721 = vmatprep.subr.mxu0 0.0
    %4722 = vmatpush1.msra.mxu0 0.0
    %4723 = vmatprep.mubr.f32.mxu0 0.0
    %v4724 = vand.u32 %v3397, 4294901760
    %v4725 = vsub.f32 %v3397, %v4724
    %4726 = vmatmul.mubr.f32.gmra.mrb[0].mxu0 %v4725
    %v4727 = vpop.f32.mrb[0].mxu0
    %v4728 = vadd.f32 %v4618, %v4727
    %v4729 = vpop.f32.mrb[0].mxu0
    %4730 = vmatprep.mubr.f32.mxu0 0.0
    %v4731 = vand.u32 %v3400, 4294901760
    %v4732 = vsub.f32 %v3400, %v4731
    %4733 = vmatmul.mubr.f32.gmra.mrb[0].mxu0 %v4732
    %v4734 = vpop.f32.mrb[0].mxu0
    %v4735 = vadd.f32 %v4624, %v4734
    %v4736 = vpop.f32.mrb[0].mxu0
    %4737 = vdwg.mxu0
    %4738 = vmatprep.subr.mxu0 0.0
    %v4739 = vand.u32 %v3435, 4294901760
    %4740 = vmatpush1.msra.mxu0 %v4739
    %4741 = vmatprep.subr.mxu0 0.0
    %v4742 = vand.u32 %v3436, 4294901760
    %4743 = vmatpush1.msra.mxu0 %v4742
    %4744 = vmatprep.subr.mxu0 0.0
    %v4745 = vand.u32 %v3437, 4294901760
    %4746 = vmatpush1.msra.mxu0 %v4745
    %4747 = vmatprep.subr.mxu0 0.0
    %v4748 = vand.u32 %v3438, 4294901760
    %4749 = vmatpush1.msra.mxu0 %v4748
    %4750 = vmatprep.subr.mxu0 0.0
    %v4751 = vand.u32 %v3439, 4294901760
    %4752 = vmatpush1.msra.mxu0 %v4751
    %4753 = vmatprep.subr.mxu0 0.0
    %v4754 = vand.u32 %v3440, 4294901760
    %4755 = vmatpush1.msra.mxu0 %v4754
    %4756 = vmatprep.subr.mxu0 0.0
    %v4757 = vand.u32 %v3441, 4294901760
    %4758 = vmatpush1.msra.mxu0 %v4757
    %4759 = vmatprep.subr.mxu0 0.0
    %v4760 = vand.u32 %v3442, 4294901760
    %4761 = vmatpush1.msra.mxu0 %v4760
    %4762 = vmatprep.subr.mxu0 0.0
    %v4763 = vand.u32 %v3443, 4294901760
    %4764 = vmatpush1.msra.mxu0 %v4763
    %4765 = vmatprep.subr.mxu0 0.0
    %v4766 = vand.u32 %v3444, 4294901760
    %4767 = vmatpush1.msra.mxu0 %v4766
    %4768 = vmatprep.subr.mxu0 0.0
    %v4769 = vand.u32 %v3445, 4294901760
    %4770 = vmatpush1.msra.mxu0 %v4769
    %4771 = vmatprep.subr.mxu0 0.0
    %v4772 = vand.u32 %v3446, 4294901760
    %4773 = vmatpush1.msra.mxu0 %v4772
    %4774 = vmatprep.subr.mxu0 0.0
    %v4775 = vand.u32 %v3447, 4294901760
    %4776 = vmatpush1.msra.mxu0 %v4775
    %4777 = vmatprep.subr.mxu0 0.0
    %v4778 = vand.u32 %v3448, 4294901760
    %4779 = vmatpush1.msra.mxu0 %v4778
    %4780 = vmatprep.subr.mxu0 0.0
    %v4781 = vand.u32 %v3449, 4294901760
    %4782 = vmatpush1.msra.mxu0 %v4781
    %4783 = vmatprep.subr.mxu0 0.0
    %v4784 = vand.u32 %v3450, 4294901760
    %4785 = vmatpush1.msra.mxu0 %v4784
    %4786 = vmatprep.subr.mxu0 0.0
    %4787 = vmatpush1.msra.mxu0 0.0
    %4788 = vmatprep.subr.mxu0 0.0
    %4789 = vmatpush1.msra.mxu0 0.0
    %4790 = vmatprep.subr.mxu0 0.0
    %4791 = vmatpush1.msra.mxu0 0.0
    %4792 = vmatprep.subr.mxu0 0.0
    %4793 = vmatpush1.msra.mxu0 0.0
    %4794 = vmatprep.subr.mxu0 0.0
    %4795 = vmatpush1.msra.mxu0 0.0
    %4796 = vmatprep.subr.mxu0 0.0
    %4797 = vmatpush1.msra.mxu0 0.0
    %4798 = vmatprep.subr.mxu0 0.0
    %4799 = vmatpush1.msra.mxu0 0.0
    %4800 = vmatprep.subr.mxu0 0.0
    %4801 = vmatpush1.msra.mxu0 0.0
    %4802 = vmatprep.subr.mxu0 0.0
    %4803 = vmatpush1.msra.mxu0 0.0
    %4804 = vmatprep.subr.mxu0 0.0
    %4805 = vmatpush1.msra.mxu0 0.0
    %4806 = vmatprep.subr.mxu0 0.0
    %4807 = vmatpush1.msra.mxu0 0.0
    %4808 = vmatprep.subr.mxu0 0.0
    %4809 = vmatpush1.msra.mxu0 0.0
    %4810 = vmatprep.subr.mxu0 0.0
    %4811 = vmatpush1.msra.mxu0 0.0
    %4812 = vmatprep.subr.mxu0 0.0
    %4813 = vmatpush1.msra.mxu0 0.0
    %4814 = vmatprep.subr.mxu0 0.0
    %4815 = vmatpush1.msra.mxu0 0.0
    %4816 = vmatprep.subr.mxu0 0.0
    %4817 = vmatpush1.msra.mxu0 0.0
    %4818 = vmatprep.mubr.f32.mxu0 0.0
    %v4819 = vand.u32 %v3397, 4294901760
    %v4820 = vsub.f32 %v3397, %v4819
    %v4821 = vand.u32 %v4820, 4294901760
    %4822 = vmatmul.mubr.f32.gmra.mrb[0].mxu0 %v4821
    %v4823 = vpop.f32.mrb[0].mxu0
    %v4824 = vadd.f32 %v4728, %v4823
    %v4825 = vpop.f32.mrb[0].mxu0
    %4826 = vmatprep.mubr.f32.mxu0 0.0
    %v4827 = vand.u32 %v3400, 4294901760
    %v4828 = vsub.f32 %v3400, %v4827
    %v4829 = vand.u32 %v4828, 4294901760
    %4830 = vmatmul.mubr.f32.gmra.mrb[0].mxu0 %v4829
    %v4831 = vpop.f32.mrb[0].mxu0
    %v4832 = vadd.f32 %v4735, %v4831
    %v4833 = vpop.f32.mrb[0].mxu0
    %4834 = vdwg.mxu0
    %4835 = vmatprep.subr.mxu0 0.0
    %v4836 = vand.u32 %v3435, 4294901760
    %v4837 = vsub.f32 %v3435, %v4836
    %v4838 = vand.u32 %v4837, 4294901760
    %4839 = vmatpush1.msra.mxu0 %v4838
    %4840 = vmatprep.subr.mxu0 0.0
    %v4841 = vand.u32 %v3436, 4294901760
    %v4842 = vsub.f32 %v3436, %v4841
    %v4843 = vand.u32 %v4842, 4294901760
    %4844 = vmatpush1.msra.mxu0 %v4843
    %4845 = vmatprep.subr.mxu0 0.0
    %v4846 = vand.u32 %v3437, 4294901760
    %v4847 = vsub.f32 %v3437, %v4846
    %v4848 = vand.u32 %v4847, 4294901760
    %4849 = vmatpush1.msra.mxu0 %v4848
    %4850 = vmatprep.subr.mxu0 0.0
    %v4851 = vand.u32 %v3438, 4294901760
    %v4852 = vsub.f32 %v3438, %v4851
    %v4853 = vand.u32 %v4852, 4294901760
    %4854 = vmatpush1.msra.mxu0 %v4853
    %4855 = vmatprep.subr.mxu0 0.0
    %v4856 = vand.u32 %v3439, 4294901760
    %v4857 = vsub.f32 %v3439, %v4856
    %v4858 = vand.u32 %v4857, 4294901760
    %4859 = vmatpush1.msra.mxu0 %v4858
    %4860 = vmatprep.subr.mxu0 0.0
    %v4861 = vand.u32 %v3440, 4294901760
    %v4862 = vsub.f32 %v3440, %v4861
    %v4863 = vand.u32 %v4862, 4294901760
    %4864 = vmatpush1.msra.mxu0 %v4863
    %4865 = vmatprep.subr.mxu0 0.0
    %v4866 = vand.u32 %v3441, 4294901760
    %v4867 = vsub.f32 %v3441, %v4866
    %v4868 = vand.u32 %v4867, 4294901760
    %4869 = vmatpush1.msra.mxu0 %v4868
    %4870 = vmatprep.subr.mxu0 0.0
    %v4871 = vand.u32 %v3442, 4294901760
    %v4872 = vsub.f32 %v3442, %v4871
    %v4873 = vand.u32 %v4872, 4294901760
    %4874 = vmatpush1.msra.mxu0 %v4873
    %4875 = vmatprep.subr.mxu0 0.0
    %v4876 = vand.u32 %v3443, 4294901760
    %v4877 = vsub.f32 %v3443, %v4876
    %v4878 = vand.u32 %v4877, 4294901760
    %4879 = vmatpush1.msra.mxu0 %v4878
    %4880 = vmatprep.subr.mxu0 0.0
    %v4881 = vand.u32 %v3444, 4294901760
    %v4882 = vsub.f32 %v3444, %v4881
    %v4883 = vand.u32 %v4882, 4294901760
    %4884 = vmatpush1.msra.mxu0 %v4883
    %4885 = vmatprep.subr.mxu0 0.0
    %v4886 = vand.u32 %v3445, 4294901760
    %v4887 = vsub.f32 %v3445, %v4886
    %v4888 = vand.u32 %v4887, 4294901760
    %4889 = vmatpush1.msra.mxu0 %v4888
    %4890 = vmatprep.subr.mxu0 0.0
    %v4891 = vand.u32 %v3446, 4294901760
    %v4892 = vsub.f32 %v3446, %v4891
    %v4893 = vand.u32 %v4892, 4294901760
    %4894 = vmatpush1.msra.mxu0 %v4893
    %4895 = vmatprep.subr.mxu0 0.0
    %v4896 = vand.u32 %v3447, 4294901760
    %v4897 = vsub.f32 %v3447, %v4896
    %v4898 = vand.u32 %v4897, 4294901760
    %4899 = vmatpush1.msra.mxu0 %v4898
    %4900 = vmatprep.subr.mxu0 0.0
    %v4901 = vand.u32 %v3448, 4294901760
    %v4902 = vsub.f32 %v3448, %v4901
    %v4903 = vand.u32 %v4902, 4294901760
    %4904 = vmatpush1.msra.mxu0 %v4903
    %4905 = vmatprep.subr.mxu0 0.0
    %v4906 = vand.u32 %v3449, 4294901760
    %v4907 = vsub.f32 %v3449, %v4906
    %v4908 = vand.u32 %v4907, 4294901760
    %4909 = vmatpush1.msra.mxu0 %v4908
    %4910 = vmatprep.subr.mxu0 0.0
    %v4911 = vand.u32 %v3450, 4294901760
    %v4912 = vsub.f32 %v3450, %v4911
    %v4913 = vand.u32 %v4912, 4294901760
    %4914 = vmatpush1.msra.mxu0 %v4913
    %4915 = vmatprep.subr.mxu0 0.0
    %4916 = vmatpush1.msra.mxu0 0.0
    %4917 = vmatprep.subr.mxu0 0.0
    %4918 = vmatpush1.msra.mxu0 0.0
    %4919 = vmatprep.subr.mxu0 0.0
    %4920 = vmatpush1.msra.mxu0 0.0
    %4921 = vmatprep.subr.mxu0 0.0
    %4922 = vmatpush1.msra.mxu0 0.0
    %4923 = vmatprep.subr.mxu0 0.0
    %4924 = vmatpush1.msra.mxu0 0.0
    %4925 = vmatprep.subr.mxu0 0.0
    %4926 = vmatpush1.msra.mxu0 0.0
    %4927 = vmatprep.subr.mxu0 0.0
    %4928 = vmatpush1.msra.mxu0 0.0
    %4929 = vmatprep.subr.mxu0 0.0
    %4930 = vmatpush1.msra.mxu0 0.0
    %4931 = vmatprep.subr.mxu0 0.0
    %4932 = vmatpush1.msra.mxu0 0.0
    %4933 = vmatprep.subr.mxu0 0.0
    %4934 = vmatpush1.msra.mxu0 0.0
    %4935 = vmatprep.subr.mxu0 0.0
    %4936 = vmatpush1.msra.mxu0 0.0
    %4937 = vmatprep.subr.mxu0 0.0
    %4938 = vmatpush1.msra.mxu0 0.0
    %4939 = vmatprep.subr.mxu0 0.0
    %4940 = vmatpush1.msra.mxu0 0.0
    %4941 = vmatprep.subr.mxu0 0.0
    %4942 = vmatpush1.msra.mxu0 0.0
    %4943 = vmatprep.subr.mxu0 0.0
    %4944 = vmatpush1.msra.mxu0 0.0
    %4945 = vmatprep.subr.mxu0 0.0
    %4946 = vmatpush1.msra.mxu0 0.0
    %4947 = vmatprep.mubr.f32.mxu0 0.0
    %v4948 = vand.u32 %v3397, 4294901760
    %4949 = vmatmul.mubr.f32.gmra.mrb[0].mxu0 %v4948
    %v4950 = vpop.f32.mrb[0].mxu0
    %v4951 = vadd.f32 %v4824, %v4950
    %v4952 = vpop.f32.mrb[0].mxu0
    %4953 = vmatprep.mubr.f32.mxu0 0.0
    %v4954 = vand.u32 %v3400, 4294901760
    %4955 = vmatmul.mubr.f32.gmra.mrb[0].mxu0 %v4954
    %v4956 = vpop.f32.mrb[0].mxu0
    %v4957 = vadd.f32 %v4832, %v4956
    %v4958 = vpop.f32.mrb[0].mxu0
    %4959 = vdwg.mxu0
    %4960 = vmatprep.subr.mxu0 0.0
    %v4961 = vand.u32 %v3435, 4294901760
    %4962 = vmatpush1.msra.mxu0 %v4961
    %4963 = vmatprep.subr.mxu0 0.0
    %v4964 = vand.u32 %v3436, 4294901760
    %4965 = vmatpush1.msra.mxu0 %v4964
    %4966 = vmatprep.subr.mxu0 0.0
    %v4967 = vand.u32 %v3437, 4294901760
    %4968 = vmatpush1.msra.mxu0 %v4967
    %4969 = vmatprep.subr.mxu0 0.0
    %v4970 = vand.u32 %v3438, 4294901760
    %4971 = vmatpush1.msra.mxu0 %v4970
    %4972 = vmatprep.subr.mxu0 0.0
    %v4973 = vand.u32 %v3439, 4294901760
    %4974 = vmatpush1.msra.mxu0 %v4973
    %4975 = vmatprep.subr.mxu0 0.0
    %v4976 = vand.u32 %v3440, 4294901760
    %4977 = vmatpush1.msra.mxu0 %v4976
    %4978 = vmatprep.subr.mxu0 0.0
    %v4979 = vand.u32 %v3441, 4294901760
    %4980 = vmatpush1.msra.mxu0 %v4979
    %4981 = vmatprep.subr.mxu0 0.0
    %v4982 = vand.u32 %v3442, 4294901760
    %4983 = vmatpush1.msra.mxu0 %v4982
    %4984 = vmatprep.subr.mxu0 0.0
    %v4985 = vand.u32 %v3443, 4294901760
    %4986 = vmatpush1.msra.mxu0 %v4985
    %4987 = vmatprep.subr.mxu0 0.0
    %v4988 = vand.u32 %v3444, 4294901760
    %4989 = vmatpush1.msra.mxu0 %v4988
    %4990 = vmatprep.subr.mxu0 0.0
    %v4991 = vand.u32 %v3445, 4294901760
    %4992 = vmatpush1.msra.mxu0 %v4991
    %4993 = vmatprep.subr.mxu0 0.0
    %v4994 = vand.u32 %v3446, 4294901760
    %4995 = vmatpush1.msra.mxu0 %v4994
    %4996 = vmatprep.subr.mxu0 0.0
    %v4997 = vand.u32 %v3447, 4294901760
    %4998 = vmatpush1.msra.mxu0 %v4997
    %4999 = vmatprep.subr.mxu0 0.0
    %v5000 = vand.u32 %v3448, 4294901760
    %5001 = vmatpush1.msra.mxu0 %v5000
    %5002 = vmatprep.subr.mxu0 0.0
    %v5003 = vand.u32 %v3449, 4294901760
    %5004 = vmatpush1.msra.mxu0 %v5003
    %5005 = vmatprep.subr.mxu0 0.0
    %v5006 = vand.u32 %v3450, 4294901760
    %5007 = vmatpush1.msra.mxu0 %v5006
    %5008 = vmatprep.subr.mxu0 0.0
    %5009 = vmatpush1.msra.mxu0 0.0
    %5010 = vmatprep.subr.mxu0 0.0
    %5011 = vmatpush1.msra.mxu0 0.0
    %5012 = vmatprep.subr.mxu0 0.0
    %5013 = vmatpush1.msra.mxu0 0.0
    %5014 = vmatprep.subr.mxu0 0.0
    %5015 = vmatpush1.msra.mxu0 0.0
    %5016 = vmatprep.subr.mxu0 0.0
    %5017 = vmatpush1.msra.mxu0 0.0
    %5018 = vmatprep.subr.mxu0 0.0
    %5019 = vmatpush1.msra.mxu0 0.0
    %5020 = vmatprep.subr.mxu0 0.0
    %5021 = vmatpush1.msra.mxu0 0.0
    %5022 = vmatprep.subr.mxu0 0.0
    %5023 = vmatpush1.msra.mxu0 0.0
    %5024 = vmatprep.subr.mxu0 0.0
    %5025 = vmatpush1.msra.mxu0 0.0
    %5026 = vmatprep.subr.mxu0 0.0
    %5027 = vmatpush1.msra.mxu0 0.0
    %5028 = vmatprep.subr.mxu0 0.0
    %5029 = vmatpush1.msra.mxu0 0.0
    %5030 = vmatprep.subr.mxu0 0.0
    %5031 = vmatpush1.msra.mxu0 0.0
    %5032 = vmatprep.subr.mxu0 0.0
    %5033 = vmatpush1.msra.mxu0 0.0
    %5034 = vmatprep.subr.mxu0 0.0
    %5035 = vmatpush1.msra.mxu0 0.0
    %5036 = vmatprep.subr.mxu0 0.0
    %5037 = vmatpush1.msra.mxu0 0.0
    %5038 = vmatprep.subr.mxu0 0.0
    %5039 = vmatpush1.msra.mxu0 0.0
    %5040 = vmatprep.mubr.f32.mxu0 0.0
    %v5041 = vand.u32 %v3397, 4294901760
    %5042 = vmatmul.mubr.f32.gmra.mrb[0].mxu0 %v5041
    %v5043 = vpop.f32.mrb[0].mxu0
    %v5044 = vadd.f32 %v4951, %v5043
    %v5045 = vpop.f32.mrb[0].mxu0
    %5046 = vmatprep.mubr.f32.mxu0 0.0
    %v5047 = vand.u32 %v3400, 4294901760
    %5048 = vmatmul.mubr.f32.gmra.mrb[0].mxu0 %v5047
    %v5049 = vpop.f32.mrb[0].mxu0
    %v5050 = vadd.f32 %v4957, %v5049
    %v5051 = vpop.f32.mrb[0].mxu0
    %5052 = vdwg.mxu0
    %v5053 = vadd.f32 %v3401, %v5044
    %v5054 = vadd.f32 %v3402, %v5050
    %5055 = vst [vmem:[#allocation2] sm:$0xff] %v5053
    %5056 = vst [vmem:[#allocation2 + $0x8] sm:$0xff] %v5054
    // Predicated region
    $region38: #{tpu_custom_call.1} parent=1 // pred_check
      %p5057 = pneg %p73
    $region39: #{tpu_custom_call.1} parent=1 // pred_check_branch
      %5059 = sbr.rel (%p5057) target = $region41
    $region40: #{tpu_custom_call.1} parent=1 // pred_region
      %v5060 = vld [vmem:[#allocation2] sm:$0xff]
      %v5061 = vld [vmem:[#allocation2 + $0x8] sm:$0xff]
      %5062 = vst [vmem:[#allocation11] sm:$0xff] %v5060
      %5063 = vst [vmem:[#allocation11 + $0x8] sm:$0xff] %v5061
    $region41: #{tpu_custom_call.1} parent=1 // pred_fallthru
      _
    // Predicated region
    $region42: #{tpu_custom_call.1} parent=1 // pred_check
      _
    $region43: #{tpu_custom_call.1} parent=1 // pred_check_branch
      %5065 = sbr.rel (0) target = $region45
    $region44: #{tpu_custom_call.1} parent=1 // pred_region
      %s5067 = ssub.s32 256, 256
      %5068 = vsyncadd [#allocation5], %s5067
      %s5069 = sshll.u32 [#allocation11], 4
      %s5070 = int_to_ptr.vmem [resolvable:$true] %s5069
      %5075 = dma.vmem_to_hbm [thread:$0]  %s5070, 256, %s4, [#allocation5], 128, 128, 8
    $region45: #{tpu_custom_call.1} parent=1 // pred_fallthru
      _
    // Predicated region
    $region46: #{tpu_custom_call.1} parent=1 // pred_check
      _
    $region47: #{tpu_custom_call.1} parent=1 // pred_check_branch
      %5077 = sbr.rel (0) target = $region49
    $region48: #{tpu_custom_call.1} parent=1 // pred_region
      %5078 = dma.done [#allocation5], 256
    $region49: #{tpu_custom_call.1} parent=1 // pred_fallthru
      _
    %5079 = vsyncpa [#allocation4], 1
    %5080 = vsyncpa [#allocation7], 1
    %5081 = vsyncpa [#allocation10], 1
    %5082 = vsyncpa [#allocation5], 1

</llo_original>
